<compile_context>
chip_gen: v5e
topology: v5e:2x2
jax: 0.10.0
libtpu: 0.0.40
codegen_flags: <defaults>
</compile_context>

<pallas_src>
import math
import functools

import jax
import jax.numpy as jnp
from jax import lax
from jax.experimental import pallas as pl
from jax.experimental.pallas import tpu as pltpu

LN_EPS = 1e-5            # PyTorch LayerNorm default
_MIB = 1024 * 1024


def _layernorm(v, g, b):
    mu = jnp.mean(v, axis=-1, keepdims=True)
    var = jnp.mean((v - mu) * (v - mu), axis=-1, keepdims=True)
    return (v - mu) * lax.rsqrt(var + LN_EPS) * g + b


# ----------------------------------------------------------------------------
# VMEM budgeting (generation-aware) and weight-block specs.
# ----------------------------------------------------------------------------
def _vmem_capacity_bytes():
    try:
        return int(pltpu.get_tpu_info().vmem_capacity_bytes)
    except Exception:
        return 64 * _MIB          # conservative (v7x-sized) fallback


@functools.lru_cache(maxsize=None)
def _use_single_buffered_weights():
    """Probe whether constant-index weight blocks accept pl.Buffered(1)."""
    if not hasattr(pl, "Buffered"):
        return False
    try:
        w_spec = pl.BlockSpec((8, 128), lambda i: (0, 0),
                              pipeline_mode=pl.Buffered(1))

        def _probe(x_ref, w_ref, o_ref):
            o_ref[...] = x_ref[...] + w_ref[...]

        x = jnp.zeros((8, 128), jnp.float32)
        out = pl.pallas_call(
            _probe,
            out_shape=jax.ShapeDtypeStruct((8, 128), jnp.float32),
            grid=(1,),
            in_specs=[pl.BlockSpec((8, 128), lambda i: (0, 0)), w_spec],
            out_specs=pl.BlockSpec((8, 128), lambda i: (0, 0)),
        )(x, x)
        jax.block_until_ready(out)
        return True
    except Exception:
        return False


def _weight_spec(arr):
    """Fully-resident (constant index) weight block; single-buffered if possible."""
    zeros = (0,) * arr.ndim
    idx = lambda *_: zeros
    if _use_single_buffered_weights():
        return pl.BlockSpec(arr.shape, idx, pipeline_mode=pl.Buffered(1))
    return pl.BlockSpec(arr.shape, idx)


def _param_bytes(arrs):
    return sum(math.prod(a.shape) * jnp.dtype(a.dtype).itemsize for a in arrs)


def _vmem_budget(weight_bytes, act_bytes):
    cap = _vmem_capacity_bytes()
    bufs = 1 if _use_single_buffered_weights() else 2
    budget = bufs * weight_bytes + act_bytes + 8 * _MIB   # compiler-scratch headroom
    # Fill the generation's VMEM (128 MiB on v5e/v6e, 64 MiB/TC on v7x) but never
    # budget at the physical maximum.
    return int(min(max(budget, 32 * _MIB), (cap * 85) // 100))


# ----------------------------------------------------------------------------
# Kernel 1: LayerNorm1 + fused QKV projection (scale pre-folded into Wq).
# ----------------------------------------------------------------------------
def ln_qkv_kernel(x_ref, g_ref, b_ref, wqkv_ref, bqkv_ref, qkv_ref):
    x = x_ref[0]                                            # (tS, D) f32
    xn = _layernorm(x, g_ref[...], b_ref[...])              # f32
    qkv = jnp.dot(xn.astype(jnp.bfloat16), wqkv_ref[...],
                  preferred_element_type=jnp.float32) + bqkv_ref[...]
    qkv_ref[0] = qkv.astype(qkv_ref.dtype)                  # one lane-dense store


def ln_qkv(x, p, *, seq_tile):
    B, S, D = x.shape
    nS = S // seq_tile
    weights = (p["ln1_g"], p["ln1_b"], p["wqkv_t"], p["bqkv"])
    act_bytes = (2 * seq_tile * D * 4                # x tile (double-buffered)
                 + 2 * seq_tile * 3 * D * 2          # qkv out tile (double-buffered)
                 + seq_tile * D * (4 + 2)            # xn f32 + bf16 cast
                 + seq_tile * 3 * D * 4)             # qkv f32 intermediate
    return pl.pallas_call(
        ln_qkv_kernel,
        out_shape=jax.ShapeDtypeStruct((B, S, 3 * D), jnp.bfloat16),
        grid_spec=pltpu.PrefetchScalarGridSpec(
            num_scalar_prefetch=0,
            grid=(nS, B),                            # sequence axis leads (megacore)
            in_specs=[pl.BlockSpec((1, seq_tile, D), lambda s, b: (b, s, 0))]
                     + [_weight_spec(w) for w in weights],
            out_specs=pl.BlockSpec((1, seq_tile, 3 * D), lambda s, b: (b, s, 0)),
        ),
        compiler_params=pltpu.CompilerParams(
            dimension_semantics=("parallel", "parallel"),
            vmem_limit_bytes=_vmem_budget(_param_bytes(weights), act_bytes)),
    )(x, *weights)


# ----------------------------------------------------------------------------
# Kernel 2: flash attention (online softmax, head axis in the grid) fused with
#           the output projection and residual-1.  Output is lane-dense (B,S,D).
# ----------------------------------------------------------------------------
def flash_attn_outproj_kernel(x_ref, q_ref, k_ref, v_ref, wout_ref, bout_ref,
                              o_ref, m_sc, l_sc, acc_sc, out_sc):
    h = pl.program_id(2)
    ki = pl.program_id(3)
    nh = pl.num_programs(2)
    nk = pl.num_programs(3)

    @pl.when(jnp.logical_and(h == 0, ki == 0))
    def _():
        out_sc[...] = jnp.zeros(out_sc.shape, out_sc.dtype)

    @pl.when(ki == 0)
    def _():
        m_sc[...] = jnp.full(m_sc.shape, -jnp.inf, m_sc.dtype)
        l_sc[...] = jnp.zeros(l_sc.shape, l_sc.dtype)
        acc_sc[...] = jnp.zeros(acc_sc.shape, acc_sc.dtype)

    q = q_ref[0]                 # (tQ, hd) bf16, 1/sqrt(hd) folded into Wq
    k = k_ref[0]                 # (tK, hd) bf16
    v = v_ref[0]                 # (tK, hd) bf16

    # full-width 2D MXU matmul per (q-tile, kv-tile), f32 accumulation.
    s = jnp.einsum("qd,kd->qk", q, k,
                   preferred_element_type=jnp.float32)        # (tQ, tK) f32

    m_prev = m_sc[...]
    m_new = jnp.maximum(m_prev, jnp.max(s, axis=-1, keepdims=True))
    alpha = jnp.exp(m_prev - m_new)
    p = jnp.exp(s - m_new)                                    # f32 softmax math
    l_sc[...] = alpha * l_sc[...] + jnp.sum(p, axis=-1, keepdims=True)
    acc_sc[...] = alpha * acc_sc[...] + jnp.dot(
        p.astype(jnp.bfloat16), v, preferred_element_type=jnp.float32)
    m_sc[...] = m_new

    @pl.when(ki == nk - 1)
    def _():
        # Finalize this head's context and fold it straight into the output
        # projection (per-head row block of W_out): no ctx HBM round trip,
        # no head concat, no cross-head transpose.
        ctx = acc_sc[...] * pl.reciprocal(l_sc[...], approx=True)   # (tQ, hd) f32
        out_sc[...] += jnp.dot(ctx.astype(jnp.bfloat16), wout_ref[0],
                               preferred_element_type=jnp.float32)  # (tQ, D)

    @pl.when(jnp.logical_and(h == nh - 1, ki == nk - 1))
    def _():
        # residual 1 + out-proj bias, lane-dense (tQ, D) store.
        o_ref[0] = (x_ref[0] + out_sc[...] + bout_ref[...]).astype(o_ref.dtype)


def flash_attention_outproj(x, qkv, p, *, num_heads, q_tile, kv_tile):
    B, S, D = x.shape
    H = num_heads
    hd = D // H
    # TODO(synk): hd < 128 would need a head-major qkv layout; lane-dense blocks
    # require the head slice width to be a multiple of 128.
    assert hd % 128 == 0, "head_dim must be a multiple of 128 for this layout"
    nQ, nK = S // q_tile, S // kv_tile

    def x_map(qi, b, h, ki):
        return (b, qi, 0)

    def q_map(qi, b, h, ki):
        return (b, qi, h)                 # q columns  [h*hd : (h+1)*hd]

    def k_map(qi, b, h, ki):
        return (b, ki, H + h)             # k columns  [D + h*hd : ...]

    def v_map(qi, b, h, ki):
        return (b, ki, 2 * H + h)         # v columns  [2D + h*hd : ...]

    act_bytes = (2 * q_tile * hd * 2 + 2 * 2 * kv_tile * hd * 2   # q,k,v tiles
                 + 2 * q_tile * D * 4                             # x tile
                 + 2 * q_tile * D * 4                             # out tile
                 + 2 * hd * D * 2                                 # wout head block
                 + q_tile * (2 + hd + D) * 4                      # scratch
                 + q_tile * kv_tile * (4 + 4 + 2)                 # s, p (f32 + bf16)
                 + q_tile * hd * 4)                               # ctx
    weights = (p["bout"],)
    return pl.pallas_call(
        flash_attn_outproj_kernel,
        out_shape=jax.ShapeDtypeStruct((B, S, D), x.dtype),
        grid_spec=pltpu.PrefetchScalarGridSpec(
            num_scalar_prefetch=0,
            grid=(nQ, B, H, nK),
            in_specs=[pl.BlockSpec((1, q_tile, D), x_map),
                      pl.BlockSpec((1, q_tile, hd), q_map),
                      pl.BlockSpec((1, kv_tile, hd), k_map),
                      pl.BlockSpec((1, kv_tile, hd), v_map),
                      pl.BlockSpec((1, hd, D), lambda qi, b, h, ki: (h, 0, 0)),
                      _weight_spec(p["bout"])],
            out_specs=pl.BlockSpec((1, q_tile, D), lambda qi, b, h, ki: (b, qi, 0)),
            scratch_shapes=[pltpu.VMEM((q_tile, 1), jnp.float32),    # running max
                            pltpu.VMEM((q_tile, 1), jnp.float32),    # running sum
                            pltpu.VMEM((q_tile, hd), jnp.float32),   # ctx accumulator
                            pltpu.VMEM((q_tile, D), jnp.float32)]),  # out-proj acc
        compiler_params=pltpu.CompilerParams(
            dimension_semantics=("parallel", "parallel", "arbitrary", "arbitrary"),
            vmem_limit_bytes=_vmem_budget(_param_bytes(weights), act_bytes)),
    )(x, qkv, qkv, qkv, p["wout_hd"], p["bout"])


# ----------------------------------------------------------------------------
# Kernel 3: LayerNorm2 + FFN (exact-erf GELU) + residual-2.
# ----------------------------------------------------------------------------
def ffn_kernel(x_ref, g_ref, b_ref, w1_ref, b1_ref, w2_ref, b2_ref, o_ref):
    src = x_ref[0]                                           # (tS, D) f32
    xn = _layernorm(src, g_ref[...], b_ref[...])
    h1 = jnp.dot(xn.astype(jnp.bfloat16), w1_ref[...],
                 preferred_element_type=jnp.float32) + b1_ref[...]
    # exact-erf GELU matches PyTorch nn.GELU(); swap to the tanh approximation
    # (EUP slot) only if profiling shows this kernel is VALU-bound.
    h1 = 0.5 * h1 * (1.0 + lax.erf(h1 * jnp.float32(1.0 / math.sqrt(2.0))))
    ffn = jnp.dot(h1.astype(jnp.bfloat16), w2_ref[...],
                  preferred_element_type=jnp.float32) + b2_ref[...]
    # TODO(synk): attention / residual / FFN dropout omitted (inference semantics).
    o_ref[0] = (src + ffn).astype(o_ref.dtype)               # residual 2


def ffn_block(x, p, *, seq_tile):
    B, S, D = x.shape
    F = p["w1_t"].shape[1]
    nS = S // seq_tile
    weights = (p["ln2_g"], p["ln2_b"], p["w1_t"], p["b1"], p["w2_t"], p["b2"])
    act_bytes = (2 * seq_tile * D * 4 * 2                 # in + out tiles, dbuf
                 + seq_tile * D * (4 + 2)                 # xn f32 + bf16
                 + seq_tile * F * (4 + 4 + 2)             # h1, gelu(h1), bf16 cast
                 + seq_tile * D * 4)                      # ffn out f32
    return pl.pallas_call(
        ffn_kernel,
        out_shape=jax.ShapeDtypeStruct((B, S, D), x.dtype),
        grid_spec=pltpu.PrefetchScalarGridSpec(
            num_scalar_prefetch=0,
            grid=(nS, B),
            in_specs=[pl.BlockSpec((1, seq_tile, D), lambda s, b: (b, s, 0))]
                     + [_weight_spec(w) for w in weights],
            out_specs=pl.BlockSpec((1, seq_tile, D), lambda s, b: (b, s, 0)),
        ),
        compiler_params=pltpu.CompilerParams(
            dimension_semantics=("parallel", "parallel"),
            vmem_limit_bytes=_vmem_budget(_param_bytes(weights), act_bytes)),
    )(x, *weights)


# ----------------------------------------------------------------------------
# Layer / stack composition.
# ----------------------------------------------------------------------------
def encoder_layer(x, p, *, num_heads, seq_tile, q_tile, kv_tile):
    qkv = ln_qkv(x, p, seq_tile=seq_tile)
    src = flash_attention_outproj(x, qkv, p, num_heads=num_heads,
                                  q_tile=q_tile, kv_tile=kv_tile)
    return ffn_block(src, p, seq_tile=seq_tile)


def flash_transformer_encoder(x, layer_params, num_heads, *, seq_tile=256,
                              q_tile=256, kv_tile=None):
    S = x.shape[1]
    seq_tile = min(seq_tile, S)
    q_tile = min(q_tile, S)
    kv_tile = S if kv_tile is None else min(kv_tile, S)   # full-S KV when it fits
    # inter-layer activations kept f32 (residual-precision safe); bf16 is a
    # further HBM-BW option on v5e.
    for p in layer_params:
        x = encoder_layer(x, p, num_heads=num_heads, seq_tile=seq_tile,
                          q_tile=q_tile, kv_tile=kv_tile)
    return x


# ----------------------------------------------------------------------------
# Deterministic parameter init (shapes follow the PyTorch module __init__).
# Matmul weights stored transposed in bf16; biases / LN params stay f32.
# ----------------------------------------------------------------------------
def init_layer_params(key, d_model, num_heads, dim_feedforward):
    ks = jax.random.split(key, 4)
    std = 0.02
    hd = d_model // num_heads
    scale = 1.0 / math.sqrt(hd)
    wqkv = jax.random.normal(ks[0], (3 * d_model, d_model), jnp.float32) * std
    wout = jax.random.normal(ks[1], (d_model, d_model), jnp.float32) * std
    w1 = jax.random.normal(ks[2], (dim_feedforward, d_model), jnp.float32) * std
    w2 = jax.random.normal(ks[3], (d_model, dim_feedforward), jnp.float32) * std

    wqkv_t = wqkv.T                                   # (D, 3D), columns [q | k | v]
    # fold the 1/sqrt(hd) attention scale into the Q projection (weights + bias);
    # when loading pretrained weights the fold must also hit the loaded q-bias.
    wqkv_t = wqkv_t.at[:, :d_model].multiply(scale)
    bqkv = jnp.zeros((1, 3 * d_model), jnp.float32)
    bqkv = bqkv.at[:, :d_model].multiply(scale)

    wout_t = wout.T                                   # (D, D)
    wout_hd = wout_t.reshape(num_heads, hd, d_model)  # per-head row blocks of Wout

    return {
        "ln1_g": jnp.ones((1, d_model), jnp.float32),
        "ln1_b": jnp.zeros((1, d_model), jnp.float32),
        "wqkv_t": wqkv_t.astype(jnp.bfloat16),        # (D, 3D) bf16
        "bqkv": bqkv,
        "wout_hd": wout_hd.astype(jnp.bfloat16),      # (H, hd, D) bf16
        "bout": jnp.zeros((1, d_model), jnp.float32),
        "ln2_g": jnp.ones((1, d_model), jnp.float32),
        "ln2_b": jnp.zeros((1, d_model), jnp.float32),
        "w1_t": w1.T.astype(jnp.bfloat16),            # (D, F)  bf16
        "b1": jnp.zeros((1, dim_feedforward), jnp.float32),
        "w2_t": w2.T.astype(jnp.bfloat16),            # (F, D)  bf16
        "b2": jnp.zeros((1, d_model), jnp.float32),
        # note: norm_3 exists in the PyTorch module but is unused in forward().
    }


# ----------------------------------------------------------------------------
# Pure-JAX reference (same bf16-rounded weights) for a tolerance check.
# ----------------------------------------------------------------------------
def _encoder_layer_ref(x, p, num_heads):
    B, S, D = x.shape
    hd = D // num_heads
    xn = _layernorm(x, p["ln1_g"], p["ln1_b"])
    qkv = xn @ p["wqkv_t"].astype(jnp.float32) + p["bqkv"]
    q, k, v = jnp.split(qkv, 3, axis=-1)
    q = q.reshape(B, S, num_heads, hd).transpose(0, 2, 1, 3)
    k = k.reshape(B, S, num_heads, hd).transpose(0, 2, 1, 3)
    v = v.reshape(B, S, num_heads, hd).transpose(0, 2, 1, 3)
    s = jnp.einsum("bhqd,bhkd->bhqk", q, k)           # 1/sqrt(hd) folded into Wq
    a = jax.nn.softmax(s, axis=-1)
    ctx = jnp.einsum("bhqk,bhkd->bhqd", a, v)
    ctx = ctx.transpose(0, 2, 1, 3).reshape(B, S, D)
    wout_t = p["wout_hd"].astype(jnp.float32).reshape(D, D)
    src = x + ctx @ wout_t + p["bout"]
    xn2 = _layernorm(src, p["ln2_g"], p["ln2_b"])
    h1 = xn2 @ p["w1_t"].astype(jnp.float32) + p["b1"]
    h1 = 0.5 * h1 * (1.0 + lax.erf(h1 * jnp.float32(1.0 / math.sqrt(2.0))))
    return src + h1 @ p["w2_t"].astype(jnp.float32) + p["b2"]


def flash_transformer_encoder_ref(x, layer_params, num_heads):
    for p in layer_params:
        x = _encoder_layer_ref(x, p, num_heads)
    return x


if __name__ == "__main__":
    num_layers = 2
    d_model = 256
    num_heads = 2        # head_dim = 128 (lane-aligned)
    dim_feedforward = 512
    B, S = 2, 512
    seq_tile = 256       # MXU-filling sequence tile for the LN/QKV and FFN kernels
    q_tile = 256         # Q tile of the attention kernel
    kv_tile = 256        # KV tile (2 steps -> exercises the online-softmax path)

    hd = d_model // num_heads
    assert d_model % num_heads == 0 and hd % 128 == 0
    assert S % seq_tile == 0 and S % q_tile == 0 and S % kv_tile == 0

    key = jax.random.PRNGKey(0)
    kx, *kl = jax.random.split(key, num_layers + 1)
    x = jax.random.normal(kx, (B, S, d_model), jnp.float32)
    layer_params = [init_layer_params(k, d_model, num_heads, dim_feedforward)
                    for k in kl]

    out = flash_transformer_encoder(x, layer_params, num_heads,
                                    seq_tile=seq_tile, q_tile=q_tile,
                                    kv_tile=kv_tile)
    out = jax.block_until_ready(out)
    assert out.shape == (B, S, d_model)
    assert bool(jnp.all(jnp.isfinite(out)))

    # tolerance check vs a pure-JAX reference using the same bf16-rounded weights
    # (bf16 activations + approx reciprocal => ~1e-2-level agreement expected).
    ref = flash_transformer_encoder_ref(x, layer_params, num_heads)
    err = float(jnp.max(jnp.abs(out - ref)))
    assert err < 1e-1, f"max abs error vs reference too large: {err}"

    print("KERNEL_OK")
</pallas_src>

<mosaic_0001>
module attributes {stable_mosaic.version = 11 : i64} {
  func.func @_probe(%arg0: i32, %arg1: memref<8x128xf32, #tpu.memory_space<vmem>>, %arg2: memref<8x128xf32, #tpu.memory_space<vmem>>, %arg3: memref<8x128xf32, #tpu.memory_space<vmem>>) attributes {dimension_semantics = [#tpu.dimension_semantics<arbitrary>], iteration_bounds = array<i64: 1>, scalar_prefetch = 0 : i64, scratch_operands = 0 : i64, tpu.core_type = #tpu.core_type<tc>, window_params = [{pipeline_mode = #tpu.pipeline_mode<synchronous>, transform_indices = @transform_0, window_bounds = array<i64: 8, 128>}, {pipeline_mode = #tpu.pipeline_mode<synchronous>, transform_indices = @transform_1, window_bounds = array<i64: 8, 128>}, {pipeline_mode = #tpu.pipeline_mode<synchronous>, transform_indices = @transform_2, window_bounds = array<i64: 8, 128>}]} {
    %c0 = arith.constant 0 : index
    %c0_0 = arith.constant 0 : index
    %0 = vector.load %arg1[%c0, %c0_0] : memref<8x128xf32, #tpu.memory_space<vmem>>, vector<8x128xf32>
    %c0_1 = arith.constant 0 : index
    %c0_2 = arith.constant 0 : index
    %1 = vector.load %arg2[%c0_1, %c0_2] : memref<8x128xf32, #tpu.memory_space<vmem>>, vector<8x128xf32>
    %2 = arith.addf %0, %1 : vector<8x128xf32>
    %c0_3 = arith.constant 0 : index
    %c0_4 = arith.constant 0 : index
    %3 = vector.load %arg3[%c0_3, %c0_4] : memref<8x128xf32, #tpu.memory_space<vmem>>, vector<8x128xf32>
    tpu.vector_store %arg3[%c0_3, %c0_4], %2 {strides = array<i32>} : memref<8x128xf32, #tpu.memory_space<vmem>>, vector<8x128xf32>,
    return
  }
  func.func @transform_0(%arg0: i32) -> (i32, i32) {
    %c0_i32 = arith.constant 0 : i32
    %c0_i32_0 = arith.constant 0 : i32
    %c0_i32_1 = arith.constant 0 : i32
    return %c0_i32, %c0_i32_0 : i32, i32
  }
  func.func @transform_1(%arg0: i32) -> (i32, i32) {
    %c0_i32 = arith.constant 0 : i32
    %c0_i32_0 = arith.constant 0 : i32
    %c0_i32_1 = arith.constant 0 : i32
    return %c0_i32, %c0_i32_0 : i32, i32
  }
  func.func @transform_2(%arg0: i32) -> (i32, i32) {
    %c0_i32 = arith.constant 0 : i32
    %c0_i32_0 = arith.constant 0 : i32
    %c0_i32_1 = arith.constant 0 : i32
    return %c0_i32, %c0_i32_0 : i32, i32
  }
}

module attributes {stable_mosaic.version = 11 : i64} {
  func.func @ln_qkv_kernel(%arg0: i32, %arg1: i32, %arg2: memref<1x256x256xf32, #tpu.memory_space<vmem>>, %arg3: memref<1x256xf32, #tpu.memory_space<vmem>>, %arg4: memref<1x256xf32, #tpu.memory_space<vmem>>, %arg5: memref<256x768xbf16, #tpu.memory_space<vmem>>, %arg6: memref<1x768xf32, #tpu.memory_space<vmem>>, %arg7: memref<1x256x768xbf16, #tpu.memory_space<vmem>>) attributes {dimension_semantics = [#tpu.dimension_semantics<parallel>, #tpu.dimension_semantics<parallel>], iteration_bounds = array<i64: 2, 2>, scalar_prefetch = 0 : i64, scratch_operands = 0 : i64, tpu.core_type = #tpu.core_type<tc>, window_params = [{transform_indices = @transform_0, window_bounds = array<i64: 1, 256, 256>}, {pipeline_mode = #tpu.pipeline_mode<synchronous>, transform_indices = @transform_1, window_bounds = array<i64: 1, 256>}, {pipeline_mode = #tpu.pipeline_mode<synchronous>, transform_indices = @transform_2, window_bounds = array<i64: 1, 256>}, {pipeline_mode = #tpu.pipeline_mode<synchronous>, transform_indices = @transform_3, window_bounds = array<i64: 256, 768>}, {pipeline_mode = #tpu.pipeline_mode<synchronous>, transform_indices = @transform_4, window_bounds = array<i64: 1, 768>}, {transform_indices = @transform_5, window_bounds = array<i64: 1, 256, 768>}]} {
    %c0 = arith.constant 0 : index
    %c0_0 = arith.constant 0 : index
    %c0_1 = arith.constant 0 : index
    %0 = vector.load %arg2[%c0, %c0_0, %c0_1] : memref<1x256x256xf32, #tpu.memory_space<vmem>>, vector<1x256x256xf32>
    %1 = vector.shape_cast %0 : vector<1x256x256xf32> to vector<256x256xf32>
    %c0_2 = arith.constant 0 : index
    %c0_3 = arith.constant 0 : index
    %2 = vector.load %arg3[%c0_2, %c0_3] : memref<1x256xf32, #tpu.memory_space<vmem>>, vector<1x256xf32>
    %c0_4 = arith.constant 0 : index
    %c0_5 = arith.constant 0 : index
    %3 = vector.load %arg4[%c0_4, %c0_5] : memref<1x256xf32, #tpu.memory_space<vmem>>, vector<1x256xf32>
    %cst = arith.constant dense<0.000000e+00> : vector<256xf32>
    %4 = vector.multi_reduction <add>, %1, %cst [1] : vector<256x256xf32> to vector<256xf32>
    %5 = vector.shape_cast %4 : vector<256xf32> to vector<256x1xf32>
    %cst_6 = arith.constant 2.560000e+02 : f32
    %6 = vector.broadcast %cst_6 : f32 to vector<256x1xf32>
    %7 = arith.divf %5, %6 : vector<256x1xf32>
    %8 = vector.broadcast %7 : vector<256x1xf32> to vector<256x256xf32>
    %9 = arith.subf %1, %8 : vector<256x256xf32>
    %10 = vector.broadcast %7 : vector<256x1xf32> to vector<256x256xf32>
    %11 = arith.subf %1, %10 : vector<256x256xf32>
    %12 = arith.mulf %9, %11 : vector<256x256xf32>
    %cst_7 = arith.constant dense<0.000000e+00> : vector<256xf32>
    %13 = vector.multi_reduction <add>, %12, %cst_7 [1] : vector<256x256xf32> to vector<256xf32>
    %14 = vector.shape_cast %13 : vector<256xf32> to vector<256x1xf32>
    %cst_8 = arith.constant 2.560000e+02 : f32
    %15 = vector.broadcast %cst_8 : f32 to vector<256x1xf32>
    %16 = arith.divf %14, %15 : vector<256x1xf32>
    %17 = vector.broadcast %7 : vector<256x1xf32> to vector<256x256xf32>
    %18 = arith.subf %1, %17 : vector<256x256xf32>
    %cst_9 = arith.constant 9.99999974E-6 : f32
    %19 = vector.broadcast %cst_9 : f32 to vector<256x1xf32>
    %20 = arith.addf %16, %19 : vector<256x1xf32>
    %21 = math.rsqrt %20 : vector<256x1xf32>
    %22 = vector.broadcast %21 : vector<256x1xf32> to vector<256x256xf32>
    %23 = arith.mulf %18, %22 : vector<256x256xf32>
    %24 = vector.broadcast %2 : vector<1x256xf32> to vector<256x256xf32>
    %25 = arith.mulf %23, %24 : vector<256x256xf32>
    %26 = vector.broadcast %3 : vector<1x256xf32> to vector<256x256xf32>
    %27 = arith.addf %25, %26 : vector<256x256xf32>
    %28 = arith.truncf %27 : vector<256x256xf32> to vector<256x256xbf16>
    %c0_10 = arith.constant 0 : index
    %c0_11 = arith.constant 0 : index
    %29 = vector.load %arg5[%c0_10, %c0_11] : memref<256x768xbf16, #tpu.memory_space<vmem>>, vector<256x768xbf16>
    %cst_12 = arith.constant dense<0.000000e+00> : vector<256x768xf32>
    %30 = tpu.matmul %28, %29, %cst_12 {dimension_numbers = #tpu.dot_dimension_numbers<[1], [0], [0], [1], [0, 0, 1, 1], [], []>} : vector<256x256xbf16>, vector<256x768xbf16>, vector<256x768xf32> -> vector<256x768xf32>
    %c0_13 = arith.constant 0 : index
    %c0_14 = arith.constant 0 : index
    %31 = vector.load %arg6[%c0_13, %c0_14] : memref<1x768xf32, #tpu.memory_space<vmem>>, vector<1x768xf32>
    %32 = vector.broadcast %31 : vector<1x768xf32> to vector<256x768xf32>
    %33 = arith.addf %30, %32 : vector<256x768xf32>
    %34 = arith.truncf %33 : vector<256x768xf32> to vector<256x768xbf16>
    %c0_15 = arith.constant 0 : index
    %c0_16 = arith.constant 0 : index
    %c0_17 = arith.constant 0 : index
    %35 = vector.load %arg7[%c0_15, %c0_16, %c0_17] : memref<1x256x768xbf16, #tpu.memory_space<vmem>>, vector<1x256x768xbf16>
    %36 = vector.shape_cast %35 : vector<1x256x768xbf16> to vector<256x768xbf16>
    %37 = vector.shape_cast %34 : vector<256x768xbf16> to vector<1x256x768xbf16>
    tpu.vector_store %arg7[%c0_15, %c0_16, %c0_17], %37 {strides = array<i32>} : memref<1x256x768xbf16, #tpu.memory_space<vmem>>, vector<1x256x768xbf16>,
    return
  }
  func.func @transform_0(%arg0: i32, %arg1: i32) -> (i32, i32, i32) {
    %c0_i32 = arith.constant 0 : i32
    %c0_i32_0 = arith.constant 0 : i32
    return %arg1, %arg0, %c0_i32 : i32, i32, i32
  }
  func.func @transform_1(%arg0: i32, %arg1: i32) -> (i32, i32) {
    %c0_i32 = arith.constant 0 : i32
    %c0_i32_0 = arith.constant 0 : i32
    %c0_i32_1 = arith.constant 0 : i32
    return %c0_i32, %c0_i32_0 : i32, i32
  }
  func.func @transform_2(%arg0: i32, %arg1: i32) -> (i32, i32) {
    %c0_i32 = arith.constant 0 : i32
    %c0_i32_0 = arith.constant 0 : i32
    %c0_i32_1 = arith.constant 0 : i32
    return %c0_i32, %c0_i32_0 : i32, i32
  }
  func.func @transform_3(%arg0: i32, %arg1: i32) -> (i32, i32) {
    %c0_i32 = arith.constant 0 : i32
    %c0_i32_0 = arith.constant 0 : i32
    %c0_i32_1 = arith.constant 0 : i32
    return %c0_i32, %c0_i32_0 : i32, i32
  }
  func.func @transform_4(%arg0: i32, %arg1: i32) -> (i32, i32) {
    %c0_i32 = arith.constant 0 : i32
    %c0_i32_0 = arith.constant 0 : i32
    %c0_i32_1 = arith.constant 0 : i32
    return %c0_i32, %c0_i32_0 : i32, i32
  }
  func.func @transform_5(%arg0: i32, %arg1: i32) -> (i32, i32, i32) {
    %c0_i32 = arith.constant 0 : i32
    %c0_i32_0 = arith.constant 0 : i32
    return %arg1, %arg0, %c0_i32 : i32, i32, i32
  }
}

</mosaic_0001>

<llo_original>
// kernel: tpu_custom_call.1
$region0: #{tpu_custom_call.1}
  #allocation0 [shape = 'u32[]', space=smem, size = 0x4, offset = 0x4, fixed_abs, tag = 'smem constant byte address 0x4 - core index']
  #allocation1 [shape = 'u32[72,128]{1,0:T(1,128)}', space=vmem, size = 0x9000, scoped, tag = 'internal scratch']
  %s0 = inlined_call_operand.hbm [shape: f32[8,128], index: 0, kind: input, shape index: {}]
  %s1 = inlined_call_operand.hbm [shape: f32[8,128], index: 1, kind: input, shape index: {}]
  %s2 = inlined_call_operand.hbm [shape: f32[8,128], index: 2, kind: output, shape index: {}]
  %s3 = sld [smem:[#allocation0]]
  $region26: #{tpu_custom_call.1} parent=0
    _
  %s5 = ssub.s32 1, %s3
  %s6 = scalar_select 0, %s5, %s3
  $region1: #{tpu_custom_call.1} parent=0
    #allocation2 [shape = 'u8[4096]{0}', space=vmem, size = 0x1000, scoped, tag = 'input window, operand 0, single buffered']
    #allocation3 [shape = 's32[1]{0}', space=sflag, size = 0x4, scoped, tag = 'scoped memory for tpu_custom_call.1']
    #allocation4 [shape = 's32[1]{0}', space=sflag, size = 0x4, scoped, tag = 'scoped memory for tpu_custom_call.1']
    #allocation5 [shape = 'u8[4096]{0}', space=vmem, size = 0x1000, scoped, tag = 'input window, operand 1, single buffered']
    #allocation6 [shape = 's32[1]{0}', space=sflag, size = 0x4, scoped, tag = 'scoped memory for tpu_custom_call.1']
    #allocation7 [shape = 'u8[4096]{0}', space=vmem, size = 0x1000, scoped, tag = 'output window, operand 0, single buffered']
    %7 = vsyncpa [#allocation3], 0
    %8 = vsyncpa [#allocation6], 0
    %9 = vsyncpa [#allocation4], 0
    // Predicated region
    $region2: #{tpu_custom_call.1} parent=1 // pred_check
      _
    $region3: #{tpu_custom_call.1} parent=1 // pred_check_branch
      %11 = sbr.rel (0) target = $region5
    $region4: #{tpu_custom_call.1} parent=1 // pred_region
      %13 = vsyncadd [#allocation3], 0
      %s15 = sshll.u32 %s0, 4
      %s16 = int_to_ptr.hbm [resolvable:$true] %s15
      %s17 = sshll.u32 [#allocation2], 4
      %s18 = int_to_ptr.vmem [resolvable:$true] %s17
      %20 = dma.hbm_to_vmem [thread:$0]  %s16, 128, %s18, [#allocation3]
    $region5: #{tpu_custom_call.1} parent=1 // pred_fallthru
      _
    // Predicated region
    $region6: #{tpu_custom_call.1} parent=1 // pred_check
      _
    $region7: #{tpu_custom_call.1} parent=1 // pred_check_branch
      %22 = sbr.rel (0) target = $region9
    $region8: #{tpu_custom_call.1} parent=1 // pred_region
      %24 = vsyncadd [#allocation6], 0
      %s26 = sshll.u32 %s1, 4
      %s27 = int_to_ptr.hbm [resolvable:$true] %s26
      %s28 = sshll.u32 [#allocation5], 4
      %s29 = int_to_ptr.vmem [resolvable:$true] %s28
      %31 = dma.hbm_to_vmem [thread:$0]  %s27, 128, %s29, [#allocation6]
    $region9: #{tpu_custom_call.1} parent=1 // pred_fallthru
      _
    // Predicated region
    $region10: #{tpu_custom_call.1} parent=1 // pred_check
      _
    $region11: #{tpu_custom_call.1} parent=1 // pred_check_branch
      %33 = sbr.rel (0) target = $region13
    $region12: #{tpu_custom_call.1} parent=1 // pred_region
      %35 = dma.done [#allocation3], 128
    $region13: #{tpu_custom_call.1} parent=1 // pred_fallthru
      _
    // Predicated region
    $region14: #{tpu_custom_call.1} parent=1 // pred_check
      _
    $region15: #{tpu_custom_call.1} parent=1 // pred_check_branch
      %37 = sbr.rel (0) target = $region17
    $region16: #{tpu_custom_call.1} parent=1 // pred_region
      %39 = dma.done [#allocation6], 128
    $region17: #{tpu_custom_call.1} parent=1 // pred_fallthru
      _
    %v40 = vld [vmem:[#allocation2] sm:$0xff]
    %v41 = vld [vmem:[#allocation5] sm:$0xff]
    %v42 = vadd.f32 %v40, %v41
    %43 = vst [vmem:[#allocation7] sm:$0xff] %v42
    // Predicated region
    $region18: #{tpu_custom_call.1} parent=1 // pred_check
      _
    $region19: #{tpu_custom_call.1} parent=1 // pred_check_branch
      %45 = sbr.rel (0) target = $region21
    $region20: #{tpu_custom_call.1} parent=1 // pred_region
      %47 = vsyncadd [#allocation4], 0
      %s49 = sshll.u32 [#allocation7], 4
      %s50 = int_to_ptr.vmem [resolvable:$true] %s49
      %s51 = sshll.u32 %s2, 4
      %s52 = int_to_ptr.hbm [resolvable:$true] %s51
      %54 = dma.vmem_to_hbm [thread:$0]  %s50, 128, %s52, [#allocation4]
    $region21: #{tpu_custom_call.1} parent=1 // pred_fallthru
      _
    // Predicated region
    $region22: #{tpu_custom_call.1} parent=1 // pred_check
      _
    $region23: #{tpu_custom_call.1} parent=1 // pred_check_branch
      %56 = sbr.rel (0) target = $region25
    $region24: #{tpu_custom_call.1} parent=1 // pred_region
      %58 = dma.done [#allocation4], 128
    $region25: #{tpu_custom_call.1} parent=1 // pred_fallthru
      _
    %59 = vsyncpa [#allocation3], 1
    %60 = vsyncpa [#allocation6], 1
    %61 = vsyncpa [#allocation4], 1

// kernel: tpu_custom_call.1
$region0: #{tpu_custom_call.1}
  #allocation0 [shape = 'u32[]', space=smem, size = 0x4, offset = 0x4, fixed_abs, tag = 'smem constant byte address 0x4 - core index']
  #allocation1 [shape = 'u32[72,128]{1,0:T(1,128)}', space=vmem, size = 0x9000, scoped, tag = 'internal scratch']
  %s0 = inlined_call_operand.hbm [shape: f32[2,512,256], index: 0, kind: input, shape index: {}]
  %s1 = inlined_call_operand.hbm [shape: f32[1,256], index: 1, kind: input, shape index: {}]
  %s2 = inlined_call_operand.hbm [shape: f32[1,256], index: 2, kind: input, shape index: {}]
  %s3 = inlined_call_operand.hbm [shape: bf16[256,768], index: 3, kind: input, shape index: {}]
  %s4 = inlined_call_operand.hbm [shape: f32[1,768], index: 4, kind: input, shape index: {}]
  %s5 = inlined_call_operand.hbm [shape: bf16[2,512,768], index: 5, kind: output, shape index: {}]
  %s6 = sld [smem:[#allocation0]]
  $region73: #{tpu_custom_call.1} parent=0
    _
  %s8 = ssub.s32 1, %s6
  %s9 = scalar_select 0, %s8, %s6
  $region1: #{tpu_custom_call.1} parent=0
    #allocation2 [shape = 'u8[524288]{0}', space=vmem, size = 0x80000, scoped, tag = 'input window, operand 0']
    #allocation3 [shape = 's32[2]{0}', space=sflag, size = 0x8, scoped, tag = 'scoped memory for tpu_custom_call.1']
    #allocation4 [shape = 's32[2]{0}', space=sflag, size = 0x8, scoped, tag = 'scoped memory for tpu_custom_call.1']
    #allocation5 [shape = 'u8[1024]{0}', space=vmem, size = 0x400, scoped, tag = 'input window, operand 1, single buffered']
    #allocation6 [shape = 's32[1]{0}', space=sflag, size = 0x4, scoped, tag = 'scoped memory for tpu_custom_call.1']
    #allocation7 [shape = 'u8[1024]{0}', space=vmem, size = 0x400, scoped, tag = 'input window, operand 2, single buffered']
    #allocation8 [shape = 'u8[393216]{0}', space=vmem, size = 0x60000, scoped, tag = 'input window, operand 3, single buffered']
    #allocation9 [shape = 's32[1]{0}', space=sflag, size = 0x4, scoped, tag = 'scoped memory for tpu_custom_call.1']
    #allocation10 [shape = 'u8[3072]{0}', space=vmem, size = 0xc00, scoped, tag = 'input window, operand 4, single buffered']
    #allocation11 [shape = 'u8[786432]{0}', space=vmem, size = 0xc0000, scoped, tag = 'output window, operand 0']
    %10 = vsyncpa [#allocation3], 0
    %s11 = scalar_lea.sflag [#allocation3], 1
    %12 = vsyncpa %s11, 0
    %13 = vsyncpa [#allocation6], 0
    %14 = vsyncpa [#allocation9], 0
    %15 = vsyncpa [#allocation4], 0
    %s16 = scalar_lea.sflag [#allocation4], 1
    %17 = vsyncpa %s16, 0
    loop: start=0, step=1, limit=6
    $region2: #{tpu_custom_call.1} parent=1 // loop_pre_header
      _
    $region3: #{tpu_custom_call.1} parent=1 // loop_header
      %s19 = sphi 0, %s23
      %p20 = scmp.ge.s32.totalorder %s19, 6
      %s26 = sphi 0, %s38
      %s27 = sphi 0, %s34
      %s28 = sphi 0, %s26
      %s29 = sphi 0, %s27
      %s30 = sphi 0, %s28
      %s31 = sphi 0, %s29
      %s43 = sphi 0, %s45
      %s46 = sphi 0, %s43
      %s47 = sphi 0, %s46
      %s63 = sphi 0, %s47
      %s67 = sphi 0, %s67
      %s69 = sphi 0, %s67
      %s70 = sphi 0, %s69
      %s84 = sphi 0, %s70
      %s88 = sphi 0, %s88
      %s90 = sphi 0, %s88
      %s91 = sphi 0, %s90
      %s105 = sphi 0, %s91
      %s109 = sphi 0, %s109
      %s111 = sphi 0, %s109
      %s112 = sphi 0, %s111
      %s126 = sphi 0, %s112
      %s130 = sphi 0, %s130
      %s132 = sphi 0, %s130
      %s133 = sphi 0, %s132
      %s147 = sphi 0, %s133
      %s155 = sphi 0, %s157
      %s158 = sphi 0, %s155
      %s159 = sphi 0, %s158
      %s175 = sphi 0, %s159
    $region4: #{tpu_custom_call.1} parent=1 // loop_header_branch
      %22 = sbr.rel (%p20) target = $region8
    $region5: #{tpu_custom_call.1} parent=1 // loop_body
      %s24 = ssub.s32 %s19, 1
      %s25 = ssub.s32 %s19, 2
      %s32 = sadd.s32 1, %s27
      %p33 = scmp.ge.s32.totalorder %s32, 2
      %s34 = scalar_select %p33, 0, %s32
      %s35 = sadd.s32 1, %s26
      %s36 = scalar_select %p33, %s35, %s26
      %p37 = scmp.ge.s32.totalorder %s36, 2
      %s38 = scalar_select %p37, 0, %s36
      %s39 = ssub.s32 %s27, %s34
      %s40 = ssub.s32 %s26, %s38
      %s41 = sor.u32 %s39, %s40
      %p42 = scmp.eq.s32.totalorder %s41, 0
      %s44 = sadd.s32 %s43, 1
      %s45 = scalar_select %p42, %s43, %s44
      %p48 = pneg %p42
      %p49 = scmp.eq.s32.totalorder %s19, 3
      %p50 = por %p48, %p49
      %p51 = scmp.ne.s32.totalorder %s43, %s46
      %p52 = scmp.eq.s32.totalorder %s19, 0
      %p53 = por %p51, %p52
      %p54 = scmp.ne.s32.totalorder %s43, %s46
      %p55 = scmp.eq.s32.totalorder %s24, 3
      %p56 = por %p54, %p55
      %p57 = scmp.ne.s32.totalorder %s46, %s47
      %p58 = scmp.eq.s32.totalorder %s24, 0
      %p59 = por %p57, %p58
      %p60 = scmp.ne.s32.totalorder %s46, %s47
      %p61 = scmp.eq.s32.totalorder %s25, 3
      %p62 = por %p60, %p61
      %p64 = scmp.ne.s32.totalorder %s47, %s63
      %p65 = scmp.eq.s32.totalorder %s25, 0
      %p66 = por %p64, %p65
      %s68 = sadd.s32 %s67, 1
      %p71 = scmp.eq.s32.totalorder %s19, 3
      %p72 = scmp.ne.s32.totalorder %s67, %s69
      %p73 = scmp.eq.s32.totalorder %s19, 0
      %p74 = por %p72, %p73
      %p75 = scmp.ne.s32.totalorder %s67, %s69
      %p76 = scmp.eq.s32.totalorder %s24, 3
      %p77 = por %p75, %p76
      %p78 = scmp.ne.s32.totalorder %s69, %s70
      %p79 = scmp.eq.s32.totalorder %s24, 0
      %p80 = por %p78, %p79
      %p81 = scmp.ne.s32.totalorder %s69, %s70
      %p82 = scmp.eq.s32.totalorder %s25, 3
      %p83 = por %p81, %p82
      %p85 = scmp.ne.s32.totalorder %s70, %s84
      %p86 = scmp.eq.s32.totalorder %s25, 0
      %p87 = por %p85, %p86
      %s89 = sadd.s32 %s88, 1
      %p92 = scmp.eq.s32.totalorder %s19, 3
      %p93 = scmp.ne.s32.totalorder %s88, %s90
      %p94 = scmp.eq.s32.totalorder %s19, 0
      %p95 = por %p93, %p94
      %p96 = scmp.ne.s32.totalorder %s88, %s90
      %p97 = scmp.eq.s32.totalorder %s24, 3
      %p98 = por %p96, %p97
      %p99 = scmp.ne.s32.totalorder %s90, %s91
      %p100 = scmp.eq.s32.totalorder %s24, 0
      %p101 = por %p99, %p100
      %p102 = scmp.ne.s32.totalorder %s90, %s91
      %p103 = scmp.eq.s32.totalorder %s25, 3
      %p104 = por %p102, %p103
      %p106 = scmp.ne.s32.totalorder %s91, %s105
      %p107 = scmp.eq.s32.totalorder %s25, 0
      %p108 = por %p106, %p107
      %s110 = sadd.s32 %s109, 1
      %p113 = scmp.eq.s32.totalorder %s19, 3
      %p114 = scmp.ne.s32.totalorder %s109, %s111
      %p115 = scmp.eq.s32.totalorder %s19, 0
      %p116 = por %p114, %p115
      %p117 = scmp.ne.s32.totalorder %s109, %s111
      %p118 = scmp.eq.s32.totalorder %s24, 3
      %p119 = por %p117, %p118
      %p120 = scmp.ne.s32.totalorder %s111, %s112
      %p121 = scmp.eq.s32.totalorder %s24, 0
      %p122 = por %p120, %p121
      %p123 = scmp.ne.s32.totalorder %s111, %s112
      %p124 = scmp.eq.s32.totalorder %s25, 3
      %p125 = por %p123, %p124
      %p127 = scmp.ne.s32.totalorder %s112, %s126
      %p128 = scmp.eq.s32.totalorder %s25, 0
      %p129 = por %p127, %p128
      %s131 = sadd.s32 %s130, 1
      %p134 = scmp.eq.s32.totalorder %s19, 3
      %p135 = scmp.ne.s32.totalorder %s130, %s132
      %p136 = scmp.eq.s32.totalorder %s19, 0
      %p137 = por %p135, %p136
      %p138 = scmp.ne.s32.totalorder %s130, %s132
      %p139 = scmp.eq.s32.totalorder %s24, 3
      %p140 = por %p138, %p139
      %p141 = scmp.ne.s32.totalorder %s132, %s133
      %p142 = scmp.eq.s32.totalorder %s24, 0
      %p143 = por %p141, %p142
      %p144 = scmp.ne.s32.totalorder %s132, %s133
      %p145 = scmp.eq.s32.totalorder %s25, 3
      %p146 = por %p144, %p145
      %p148 = scmp.ne.s32.totalorder %s133, %s147
      %p149 = scmp.eq.s32.totalorder %s25, 0
      %p150 = por %p148, %p149
      %s151 = ssub.s32 %s27, %s34
      %s152 = ssub.s32 %s26, %s38
      %s153 = sor.u32 %s151, %s152
      %p154 = scmp.eq.s32.totalorder %s153, 0
      %s156 = sadd.s32 %s155, 1
      %s157 = scalar_select %p154, %s155, %s156
      %p160 = pneg %p154
      %p161 = scmp.eq.s32.totalorder %s19, 3
      %p162 = por %p160, %p161
      %p163 = scmp.ne.s32.totalorder %s155, %s158
      %p164 = scmp.eq.s32.totalorder %s19, 0
      %p165 = por %p163, %p164
      %p166 = scmp.ne.s32.totalorder %s155, %s158
      %p167 = scmp.eq.s32.totalorder %s24, 3
      %p168 = por %p166, %p167
      %p169 = scmp.ne.s32.totalorder %s158, %s159
      %p170 = scmp.eq.s32.totalorder %s24, 0
      %p171 = por %p169, %p170
      %p172 = scmp.ne.s32.totalorder %s158, %s159
      %p173 = scmp.eq.s32.totalorder %s25, 3
      %p174 = por %p172, %p173
      %p176 = scmp.ne.s32.totalorder %s159, %s175
      %p177 = scmp.eq.s32.totalorder %s25, 0
      %p178 = por %p176, %p177
      %p179 = scmp.le.s32.totalorder 1, %s19
      %p180 = scmp.lt.s32.totalorder %s19, 5
      %p181 = pnand %p179, %p180
      %p182 = pneg %p181
      // Predicated region
      $region9: #{tpu_custom_call.1} parent=5 // pred_check
        _
      $region10: #{tpu_custom_call.1} parent=5 // pred_check_branch
        %184 = sbr.rel (%p181) target = $region12
      $region11: #{tpu_custom_call.1} parent=5 // pred_region
        %s185 = ssub.s32 %s19, 1
        // Predicated region
        $region13: #{tpu_custom_call.1} parent=11 // pred_check
          %p186 = pneg %p80
        $region14: #{tpu_custom_call.1} parent=11 // pred_check_branch
          %188 = sbr.rel (%p186) target = $region16
        $region15: #{tpu_custom_call.1} parent=11 // pred_region
          %190 = vsyncadd [#allocation6], 0
          %s192 = sshll.u32 %s1, 4
          %s193 = int_to_ptr.hbm [resolvable:$true] %s192
          %s194 = sshll.u32 [#allocation5], 4
          %s195 = int_to_ptr.vmem [resolvable:$true] %s194
          %197 = dma.hbm_to_vmem [thread:$0]  %s193, 32, %s195, [#allocation6]
        $region16: #{tpu_custom_call.1} parent=11 // pred_fallthru
          _
        // Predicated region
        $region17: #{tpu_custom_call.1} parent=11 // pred_check
          %p198 = pneg %p101
        $region18: #{tpu_custom_call.1} parent=11 // pred_check_branch
          %200 = sbr.rel (%p198) target = $region20
        $region19: #{tpu_custom_call.1} parent=11 // pred_region
          %202 = vsyncadd [#allocation6], 0
          %s204 = sshll.u32 %s2, 4
          %s205 = int_to_ptr.hbm [resolvable:$true] %s204
          %s206 = sshll.u32 [#allocation7], 4
          %s207 = int_to_ptr.vmem [resolvable:$true] %s206
          %209 = dma.hbm_to_vmem [thread:$0]  %s205, 32, %s207, [#allocation6]
        $region20: #{tpu_custom_call.1} parent=11 // pred_fallthru
          _
        // Predicated region
        $region21: #{tpu_custom_call.1} parent=11 // pred_check
          %p210 = pneg %p122
        $region22: #{tpu_custom_call.1} parent=11 // pred_check_branch
          %212 = sbr.rel (%p210) target = $region24
        $region23: #{tpu_custom_call.1} parent=11 // pred_region
          %214 = vsyncadd [#allocation9], 0
          %s215 = sshll.u32 %s3, 4
          %s216 = int_to_ptr.hbm [resolvable:$true] %s215
          %s217 = sshll.u32 [#allocation8], 4
          %s218 = int_to_ptr.vmem [resolvable:$true] %s217
          %223 = dma.hbm_to_vmem [thread:$0]  %s216, 12288, %s218, [#allocation9], 384, 384, 24
        $region24: #{tpu_custom_call.1} parent=11 // pred_fallthru
          _
        // Predicated region
        $region25: #{tpu_custom_call.1} parent=11 // pred_check
          %p224 = pneg %p143
        $region26: #{tpu_custom_call.1} parent=11 // pred_check_branch
          %226 = sbr.rel (%p224) target = $region28
        $region27: #{tpu_custom_call.1} parent=11 // pred_region
          %228 = vsyncadd [#allocation9], 0
          %s230 = sshll.u32 %s4, 4
          %s231 = int_to_ptr.hbm [resolvable:$true] %s230
          %s232 = sshll.u32 [#allocation10], 4
          %s233 = int_to_ptr.vmem [resolvable:$true] %s232
          %235 = dma.hbm_to_vmem [thread:$0]  %s231, 96, %s233, [#allocation9]
        $region28: #{tpu_custom_call.1} parent=11 // pred_fallthru
          _
      $region12: #{tpu_custom_call.1} parent=5 // pred_fallthru
        _
      %p236 = scmp.lt.s32.totalorder %s19, 4
      // Predicated region
      $region29: #{tpu_custom_call.1} parent=5 // pred_check
        %p237 = pneg %p236
      $region30: #{tpu_custom_call.1} parent=5 // pred_check_branch
        %239 = sbr.rel (%p237) target = $region32
      $region31: #{tpu_custom_call.1} parent=5 // pred_region
        // Predicated region
        $region33: #{tpu_custom_call.1} parent=31 // pred_check
          %p240 = pneg %p53
        $region34: #{tpu_custom_call.1} parent=31 // pred_check_branch
          %242 = sbr.rel (%p240) target = $region36
        $region35: #{tpu_custom_call.1} parent=31 // pred_region
          %s243 = sand.u32 %s43, 1
          %s244 = scalar_lea.sflag [#allocation3], %s243
          %s245 = sand.u32 %s43, 1
          %s246 = smul.addr %s245, 512
          %s247 = scalar_lea.vmem [#allocation2], %s246
          %s248 = smul.u32 32, %s26
          %250 = vsyncadd %s244, 0
          %s251 = smul.addr %s248, 2
          %s252 = smul.addr %s27, 128
          %s253 = sadd.s32 %s251, %s252
          %s254 = smul.addr %s253, 8
          %s255 = scalar_lea.hbm %s0, %s254
          %s256 = sshll.u32 %s255, 4
          %s257 = int_to_ptr.hbm [resolvable:$true] %s256
          %s258 = sshll.u32 %s247, 4
          %s259 = int_to_ptr.vmem [resolvable:$true] %s258
          %264 = dma.hbm_to_vmem [thread:$0]  %s257, 8192, %s259, %s244, 256, 256, 16
        $region36: #{tpu_custom_call.1} parent=31 // pred_fallthru
          _
      $region32: #{tpu_custom_call.1} parent=5 // pred_fallthru
        _
      %p265 = scmp.le.s32.totalorder 1, %s19
      %p266 = scmp.lt.s32.totalorder %s19, 5
      %p267 = pnand %p265, %p266
      %p268 = pneg %p267
      // Predicated region
      $region37: #{tpu_custom_call.1} parent=5 // pred_check
        _
      $region38: #{tpu_custom_call.1} parent=5 // pred_check_branch
        %270 = sbr.rel (%p267) target = $region40
      $region39: #{tpu_custom_call.1} parent=5 // pred_region
        %s271 = ssub.s32 %s19, 1
        %s272 = sand.u32 %s46, 1
        %s273 = scalar_lea.sflag [#allocation3], %s272
        %s274 = sand.u32 %s46, 1
        %s275 = smul.addr %s274, 512
        %s276 = scalar_lea.vmem [#allocation2], %s275
        // Predicated region
        $region41: #{tpu_custom_call.1} parent=39 // pred_check
          %p277 = pneg %p59
        $region42: #{tpu_custom_call.1} parent=39 // pred_check_branch
          %279 = sbr.rel (%p277) target = $region44
        $region43: #{tpu_custom_call.1} parent=39 // pred_region
          %281 = dma.done %s273, 8192
        $region44: #{tpu_custom_call.1} parent=39 // pred_fallthru
          _
        // Predicated region
        $region45: #{tpu_custom_call.1} parent=39 // pred_check
          %p282 = pneg %p80
        $region46: #{tpu_custom_call.1} parent=39 // pred_check_branch
          %284 = sbr.rel (%p282) target = $region48
        $region47: #{tpu_custom_call.1} parent=39 // pred_region
          %286 = dma.done [#allocation6], 32
        $region48: #{tpu_custom_call.1} parent=39 // pred_fallthru
          _
        // Predicated region
        $region49: #{tpu_custom_call.1} parent=39 // pred_check
          %p287 = pneg %p101
        $region50: #{tpu_custom_call.1} parent=39 // pred_check_branch
          %289 = sbr.rel (%p287) target = $region52
        $region51: #{tpu_custom_call.1} parent=39 // pred_region
          %291 = dma.done [#allocation6], 32
        $region52: #{tpu_custom_call.1} parent=39 // pred_fallthru
          _
        // Predicated region
        $region53: #{tpu_custom_call.1} parent=39 // pred_check
          %p292 = pneg %p122
        $region54: #{tpu_custom_call.1} parent=39 // pred_check_branch
          %294 = sbr.rel (%p292) target = $region56
        $region55: #{tpu_custom_call.1} parent=39 // pred_region
          %296 = dma.done [#allocation9], 12288
        $region56: #{tpu_custom_call.1} parent=39 // pred_fallthru
          _
        // Predicated region
        $region57: #{tpu_custom_call.1} parent=39 // pred_check
          %p297 = pneg %p143
        $region58: #{tpu_custom_call.1} parent=39 // pred_check_branch
          %299 = sbr.rel (%p297) target = $region60
        $region59: #{tpu_custom_call.1} parent=39 // pred_region
          %301 = dma.done [#allocation9], 96
        $region60: #{tpu_custom_call.1} parent=39 // pred_fallthru
          _
        %s302 = sand.u32 %s46, 1
        %s303 = scalar_lea.sflag [#allocation3], %s302
        %s304 = sand.u32 %s46, 1
        %s305 = smul.addr %s304, 512
        %s306 = scalar_lea.vmem [#allocation2], %s305
        %p307 = pneg %p59
        %p308 = pneg %p56
        %p309 = pneg %p80
        %p310 = pneg %p77
        %p311 = pneg %p101
        %p312 = pneg %p98
        %p313 = pneg %p122
        %p314 = pneg %p119
        %p315 = pneg %p143
        %p316 = pneg %p140
        %p317 = pneg %p171
        %p318 = pneg %p168
        %s319 = sand.u32 %s158, 1
        %s320 = scalar_lea.sflag [#allocation4], %s319
        %s321 = sand.u32 %s158, 1
        %s322 = smul.addr %s321, 768
        %s323 = scalar_lea.vmem [#allocation11], %s322
        %s324 = smul.u32 32, %s28
        %s325 = smul.u32 32, %s28
        %v326 = vld [vmem:[%s276] sm:$0xff]
        %v327 = vld [vmem:[%s276 + $0x8] sm:$0xff]
        %v328 = vld [vmem:[%s276 + $0x10] sm:$0xff]
        %v329 = vld [vmem:[%s276 + $0x18] sm:$0xff]
        %v330 = vld [vmem:[%s276 + $0x20] sm:$0xff]
        %v331 = vld [vmem:[%s276 + $0x28] sm:$0xff]
        %v332 = vld [vmem:[%s276 + $0x30] sm:$0xff]
        %v333 = vld [vmem:[%s276 + $0x38] sm:$0xff]
        %v334 = vld [vmem:[%s276 + $0x40] sm:$0xff]
        %v335 = vld [vmem:[%s276 + $0x48] sm:$0xff]
        %v336 = vld [vmem:[%s276 + $0x50] sm:$0xff]
        %v337 = vld [vmem:[%s276 + $0x58] sm:$0xff]
        %v338 = vld [vmem:[%s276 + $0x60] sm:$0xff]
        %v339 = vld [vmem:[%s276 + $0x68] sm:$0xff]
        %v340 = vld [vmem:[%s276 + $0x70] sm:$0xff]
        %v341 = vld [vmem:[%s276 + $0x78] sm:$0xff]
        %v342 = vld [vmem:[%s276 + $0x80] sm:$0xff]
        %v343 = vld [vmem:[%s276 + $0x88] sm:$0xff]
        %v344 = vld [vmem:[%s276 + $0x90] sm:$0xff]
        %v345 = vld [vmem:[%s276 + $0x98] sm:$0xff]
        %v346 = vld [vmem:[%s276 + $0xa0] sm:$0xff]
        %v347 = vld [vmem:[%s276 + $0xa8] sm:$0xff]
        %v348 = vld [vmem:[%s276 + $0xb0] sm:$0xff]
        %v349 = vld [vmem:[%s276 + $0xb8] sm:$0xff]
        %v350 = vld [vmem:[%s276 + $0xc0] sm:$0xff]
        %v351 = vld [vmem:[%s276 + $0xc8] sm:$0xff]
        %v352 = vld [vmem:[%s276 + $0xd0] sm:$0xff]
        %v353 = vld [vmem:[%s276 + $0xd8] sm:$0xff]
        %v354 = vld [vmem:[%s276 + $0xe0] sm:$0xff]
        %v355 = vld [vmem:[%s276 + $0xe8] sm:$0xff]
        %v356 = vld [vmem:[%s276 + $0xf0] sm:$0xff]
        %v357 = vld [vmem:[%s276 + $0xf8] sm:$0xff]
        %v358 = vld [vmem:[%s276 + $0x100] sm:$0xff]
        %v359 = vld [vmem:[%s276 + $0x108] sm:$0xff]
        %v360 = vld [vmem:[%s276 + $0x110] sm:$0xff]
        %v361 = vld [vmem:[%s276 + $0x118] sm:$0xff]
        %v362 = vld [vmem:[%s276 + $0x120] sm:$0xff]
        %v363 = vld [vmem:[%s276 + $0x128] sm:$0xff]
        %v364 = vld [vmem:[%s276 + $0x130] sm:$0xff]
        %v365 = vld [vmem:[%s276 + $0x138] sm:$0xff]
        %v366 = vld [vmem:[%s276 + $0x140] sm:$0xff]
        %v367 = vld [vmem:[%s276 + $0x148] sm:$0xff]
        %v368 = vld [vmem:[%s276 + $0x150] sm:$0xff]
        %v369 = vld [vmem:[%s276 + $0x158] sm:$0xff]
        %v370 = vld [vmem:[%s276 + $0x160] sm:$0xff]
        %v371 = vld [vmem:[%s276 + $0x168] sm:$0xff]
        %v372 = vld [vmem:[%s276 + $0x170] sm:$0xff]
        %v373 = vld [vmem:[%s276 + $0x178] sm:$0xff]
        %v374 = vld [vmem:[%s276 + $0x180] sm:$0xff]
        %v375 = vld [vmem:[%s276 + $0x188] sm:$0xff]
        %v376 = vld [vmem:[%s276 + $0x190] sm:$0xff]
        %v377 = vld [vmem:[%s276 + $0x198] sm:$0xff]
        %v378 = vld [vmem:[%s276 + $0x1a0] sm:$0xff]
        %v379 = vld [vmem:[%s276 + $0x1a8] sm:$0xff]
        %v380 = vld [vmem:[%s276 + $0x1b0] sm:$0xff]
        %v381 = vld [vmem:[%s276 + $0x1b8] sm:$0xff]
        %v382 = vld [vmem:[%s276 + $0x1c0] sm:$0xff]
        %v383 = vld [vmem:[%s276 + $0x1c8] sm:$0xff]
        %v384 = vld [vmem:[%s276 + $0x1d0] sm:$0xff]
        %v385 = vld [vmem:[%s276 + $0x1d8] sm:$0xff]
        %v386 = vld [vmem:[%s276 + $0x1e0] sm:$0xff]
        %v387 = vld [vmem:[%s276 + $0x1e8] sm:$0xff]
        %v388 = vld [vmem:[%s276 + $0x1f0] sm:$0xff]
        %v389 = vld [vmem:[%s276 + $0x1f8] sm:$0xff]
        %v390 = vld [vmem:[#allocation5] sm:$0x3]
        %v391 = vld [vmem:[#allocation7] sm:$0x3]
        %v392 = vadd.f32 %v326, %v327
        %393 = vadd.xlane.f32.xlu0 %v392
        %v394 = vpop.xlane.xlu0 %393
        %v395 = vadd.f32 %v328, %v329
        %396 = vadd.xlane.f32.xlu0 %v395
        %v397 = vpop.xlane.xlu0 %396
        %v398 = vadd.f32 %v330, %v331
        %399 = vadd.xlane.f32.xlu0 %v398
        %v400 = vpop.xlane.xlu0 %399
        %v401 = vadd.f32 %v332, %v333
        %402 = vadd.xlane.f32.xlu0 %v401
        %v403 = vpop.xlane.xlu0 %402
        %v404 = vadd.f32 %v334, %v335
        %405 = vadd.xlane.f32.xlu0 %v404
        %v406 = vpop.xlane.xlu0 %405
        %v407 = vadd.f32 %v336, %v337
        %408 = vadd.xlane.f32.xlu0 %v407
        %v409 = vpop.xlane.xlu0 %408
        %v410 = vadd.f32 %v338, %v339
        %411 = vadd.xlane.f32.xlu0 %v410
        %v412 = vpop.xlane.xlu0 %411
        %v413 = vadd.f32 %v340, %v341
        %414 = vadd.xlane.f32.xlu0 %v413
        %v415 = vpop.xlane.xlu0 %414
        %v416 = vadd.f32 %v342, %v343
        %417 = vadd.xlane.f32.xlu0 %v416
        %v418 = vpop.xlane.xlu0 %417
        %v419 = vadd.f32 %v344, %v345
        %420 = vadd.xlane.f32.xlu0 %v419
        %v421 = vpop.xlane.xlu0 %420
        %v422 = vadd.f32 %v346, %v347
        %423 = vadd.xlane.f32.xlu0 %v422
        %v424 = vpop.xlane.xlu0 %423
        %v425 = vadd.f32 %v348, %v349
        %426 = vadd.xlane.f32.xlu0 %v425
        %v427 = vpop.xlane.xlu0 %426
        %v428 = vadd.f32 %v350, %v351
        %429 = vadd.xlane.f32.xlu0 %v428
        %v430 = vpop.xlane.xlu0 %429
        %v431 = vadd.f32 %v352, %v353
        %432 = vadd.xlane.f32.xlu0 %v431
        %v433 = vpop.xlane.xlu0 %432
        %v434 = vadd.f32 %v354, %v355
        %435 = vadd.xlane.f32.xlu0 %v434
        %v436 = vpop.xlane.xlu0 %435
        %v437 = vadd.f32 %v356, %v357
        %438 = vadd.xlane.f32.xlu0 %v437
        %v439 = vpop.xlane.xlu0 %438
        %v440 = vadd.f32 %v358, %v359
        %441 = vadd.xlane.f32.xlu0 %v440
        %v442 = vpop.xlane.xlu0 %441
        %v443 = vadd.f32 %v360, %v361
        %444 = vadd.xlane.f32.xlu0 %v443
        %v445 = vpop.xlane.xlu0 %444
        %v446 = vadd.f32 %v362, %v363
        %447 = vadd.xlane.f32.xlu0 %v446
        %v448 = vpop.xlane.xlu0 %447
        %v449 = vadd.f32 %v364, %v365
        %450 = vadd.xlane.f32.xlu0 %v449
        %v451 = vpop.xlane.xlu0 %450
        %v452 = vadd.f32 %v366, %v367
        %453 = vadd.xlane.f32.xlu0 %v452
        %v454 = vpop.xlane.xlu0 %453
        %v455 = vadd.f32 %v368, %v369
        %456 = vadd.xlane.f32.xlu0 %v455
        %v457 = vpop.xlane.xlu0 %456
        %v458 = vadd.f32 %v370, %v371
        %459 = vadd.xlane.f32.xlu0 %v458
        %v460 = vpop.xlane.xlu0 %459
        %v461 = vadd.f32 %v372, %v373
        %462 = vadd.xlane.f32.xlu0 %v461
        %v463 = vpop.xlane.xlu0 %462
        %v464 = vadd.f32 %v374, %v375
        %465 = vadd.xlane.f32.xlu0 %v464
        %v466 = vpop.xlane.xlu0 %465
        %v467 = vadd.f32 %v376, %v377
        %468 = vadd.xlane.f32.xlu0 %v467
        %v469 = vpop.xlane.xlu0 %468
        %v470 = vadd.f32 %v378, %v379
        %471 = vadd.xlane.f32.xlu0 %v470
        %v472 = vpop.xlane.xlu0 %471
        %v473 = vadd.f32 %v380, %v381
        %474 = vadd.xlane.f32.xlu0 %v473
        %v475 = vpop.xlane.xlu0 %474
        %v476 = vadd.f32 %v382, %v383
        %477 = vadd.xlane.f32.xlu0 %v476
        %v478 = vpop.xlane.xlu0 %477
        %v479 = vadd.f32 %v384, %v385
        %480 = vadd.xlane.f32.xlu0 %v479
        %v481 = vpop.xlane.xlu0 %480
        %v482 = vadd.f32 %v386, %v387
        %483 = vadd.xlane.f32.xlu0 %v482
        %v484 = vpop.xlane.xlu0 %483
        %v485 = vadd.f32 %v388, %v389
        %486 = vadd.xlane.f32.xlu0 %v485
        %v487 = vpop.xlane.xlu0 %486
        %v488 = vrcp.pop 256.0
        %v489 = vmul.f32 256.0, %v488
        %v490 = vsub.f32 1.0, %v489
        %v491 = vmul.f32 %v488, %v490
        %v492 = vadd.f32 %v488, %v491
        %vm493 = vweird.f32 %v488
        %v494 = vsel %vm493, %v488, %v492
        %v495 = vmul.f32 %v394, %v494
        %v496 = vmul.f32 %v397, %v494
        %v497 = vmul.f32 %v400, %v494
        %v498 = vmul.f32 %v403, %v494
        %v499 = vmul.f32 %v406, %v494
        %v500 = vmul.f32 %v409, %v494
        %v501 = vmul.f32 %v412, %v494
        %v502 = vmul.f32 %v415, %v494
        %v503 = vmul.f32 %v418, %v494
        %v504 = vmul.f32 %v421, %v494
        %v505 = vmul.f32 %v424, %v494
        %v506 = vmul.f32 %v427, %v494
        %v507 = vmul.f32 %v430, %v494
        %v508 = vmul.f32 %v433, %v494
        %v509 = vmul.f32 %v436, %v494
        %v510 = vmul.f32 %v439, %v494
        %v511 = vmul.f32 %v442, %v494
        %v512 = vmul.f32 %v445, %v494
        %v513 = vmul.f32 %v448, %v494
        %v514 = vmul.f32 %v451, %v494
        %v515 = vmul.f32 %v454, %v494
        %v516 = vmul.f32 %v457, %v494
        %v517 = vmul.f32 %v460, %v494
        %v518 = vmul.f32 %v463, %v494
        %v519 = vmul.f32 %v466, %v494
        %v520 = vmul.f32 %v469, %v494
        %v521 = vmul.f32 %v472, %v494
        %v522 = vmul.f32 %v475, %v494
        %v523 = vmul.f32 %v478, %v494
        %v524 = vmul.f32 %v481, %v494
        %v525 = vmul.f32 %v484, %v494
        %v526 = vmul.f32 %v487, %v494
        %v527 = vsub.f32 %v326, %v495
        %v528 = vsub.f32 %v327, %v495
        %v529 = vsub.f32 %v328, %v496
        %v530 = vsub.f32 %v329, %v496
        %v531 = vsub.f32 %v330, %v497
        %v532 = vsub.f32 %v331, %v497
        %v533 = vsub.f32 %v332, %v498
        %v534 = vsub.f32 %v333, %v498
        %v535 = vsub.f32 %v334, %v499
        %v536 = vsub.f32 %v335, %v499
        %v537 = vsub.f32 %v336, %v500
        %v538 = vsub.f32 %v337, %v500
        %v539 = vsub.f32 %v338, %v501
        %v540 = vsub.f32 %v339, %v501
        %v541 = vsub.f32 %v340, %v502
        %v542 = vsub.f32 %v341, %v502
        %v543 = vsub.f32 %v342, %v503
        %v544 = vsub.f32 %v343, %v503
        %v545 = vsub.f32 %v344, %v504
        %v546 = vsub.f32 %v345, %v504
        %v547 = vsub.f32 %v346, %v505
        %v548 = vsub.f32 %v347, %v505
        %v549 = vsub.f32 %v348, %v506
        %v550 = vsub.f32 %v349, %v506
        %v551 = vsub.f32 %v350, %v507
        %v552 = vsub.f32 %v351, %v507
        %v553 = vsub.f32 %v352, %v508
        %v554 = vsub.f32 %v353, %v508
        %v555 = vsub.f32 %v354, %v509
        %v556 = vsub.f32 %v355, %v509
        %v557 = vsub.f32 %v356, %v510
        %v558 = vsub.f32 %v357, %v510
        %v559 = vsub.f32 %v358, %v511
        %v560 = vsub.f32 %v359, %v511
        %v561 = vsub.f32 %v360, %v512
        %v562 = vsub.f32 %v361, %v512
        %v563 = vsub.f32 %v362, %v513
        %v564 = vsub.f32 %v363, %v513
        %v565 = vsub.f32 %v364, %v514
        %v566 = vsub.f32 %v365, %v514
        %v567 = vsub.f32 %v366, %v515
        %v568 = vsub.f32 %v367, %v515
        %v569 = vsub.f32 %v368, %v516
        %v570 = vsub.f32 %v369, %v516
        %v571 = vsub.f32 %v370, %v517
        %v572 = vsub.f32 %v371, %v517
        %v573 = vsub.f32 %v372, %v518
        %v574 = vsub.f32 %v373, %v518
        %v575 = vsub.f32 %v374, %v519
        %v576 = vsub.f32 %v375, %v519
        %v577 = vsub.f32 %v376, %v520
        %v578 = vsub.f32 %v377, %v520
        %v579 = vsub.f32 %v378, %v521
        %v580 = vsub.f32 %v379, %v521
        %v581 = vsub.f32 %v380, %v522
        %v582 = vsub.f32 %v381, %v522
        %v583 = vsub.f32 %v382, %v523
        %v584 = vsub.f32 %v383, %v523
        %v585 = vsub.f32 %v384, %v524
        %v586 = vsub.f32 %v385, %v524
        %v587 = vsub.f32 %v386, %v525
        %v588 = vsub.f32 %v387, %v525
        %v589 = vsub.f32 %v388, %v526
        %v590 = vsub.f32 %v389, %v526
        %v591 = vmul.f32 %v527, %v527
        %v592 = vmul.f32 %v528, %v528
        %v593 = vmul.f32 %v529, %v529
        %v594 = vmul.f32 %v530, %v530
        %v595 = vmul.f32 %v531, %v531
        %v596 = vmul.f32 %v532, %v532
        %v597 = vmul.f32 %v533, %v533
        %v598 = vmul.f32 %v534, %v534
        %v599 = vmul.f32 %v535, %v535
        %v600 = vmul.f32 %v536, %v536
        %v601 = vmul.f32 %v537, %v537
        %v602 = vmul.f32 %v538, %v538
        %v603 = vmul.f32 %v539, %v539
        %v604 = vmul.f32 %v540, %v540
        %v605 = vmul.f32 %v541, %v541
        %v606 = vmul.f32 %v542, %v542
        %v607 = vmul.f32 %v543, %v543
        %v608 = vmul.f32 %v544, %v544
        %v609 = vmul.f32 %v545, %v545
        %v610 = vmul.f32 %v546, %v546
        %v611 = vmul.f32 %v547, %v547
        %v612 = vmul.f32 %v548, %v548
        %v613 = vmul.f32 %v549, %v549
        %v614 = vmul.f32 %v550, %v550
        %v615 = vmul.f32 %v551, %v551
        %v616 = vmul.f32 %v552, %v552
        %v617 = vmul.f32 %v553, %v553
        %v618 = vmul.f32 %v554, %v554
        %v619 = vmul.f32 %v555, %v555
        %v620 = vmul.f32 %v556, %v556
        %v621 = vmul.f32 %v557, %v557
        %v622 = vmul.f32 %v558, %v558
        %v623 = vmul.f32 %v559, %v559
        %v624 = vmul.f32 %v560, %v560
        %v625 = vmul.f32 %v561, %v561
        %v626 = vmul.f32 %v562, %v562
        %v627 = vmul.f32 %v563, %v563
        %v628 = vmul.f32 %v564, %v564
        %v629 = vmul.f32 %v565, %v565
        %v630 = vmul.f32 %v566, %v566
        %v631 = vmul.f32 %v567, %v567
        %v632 = vmul.f32 %v568, %v568
        %v633 = vmul.f32 %v569, %v569
        %v634 = vmul.f32 %v570, %v570
        %v635 = vmul.f32 %v571, %v571
        %v636 = vmul.f32 %v572, %v572
        %v637 = vmul.f32 %v573, %v573
        %v638 = vmul.f32 %v574, %v574
        %v639 = vmul.f32 %v575, %v575
        %v640 = vmul.f32 %v576, %v576
        %v641 = vmul.f32 %v577, %v577
        %v642 = vmul.f32 %v578, %v578
        %v643 = vmul.f32 %v579, %v579
        %v644 = vmul.f32 %v580, %v580
        %v645 = vmul.f32 %v581, %v581
        %v646 = vmul.f32 %v582, %v582
        %v647 = vmul.f32 %v583, %v583
        %v648 = vmul.f32 %v584, %v584
        %v649 = vmul.f32 %v585, %v585
        %v650 = vmul.f32 %v586, %v586
        %v651 = vmul.f32 %v587, %v587
        %v652 = vmul.f32 %v588, %v588
        %v653 = vmul.f32 %v589, %v589
        %v654 = vmul.f32 %v590, %v590
        %v655 = vadd.f32 %v591, %v592
        %656 = vadd.xlane.f32.xlu0 %v655
        %v657 = vpop.xlane.xlu0 %656
        %v658 = vadd.f32 %v593, %v594
        %659 = vadd.xlane.f32.xlu0 %v658
        %v660 = vpop.xlane.xlu0 %659
        %v661 = vadd.f32 %v595, %v596
        %662 = vadd.xlane.f32.xlu0 %v661
        %v663 = vpop.xlane.xlu0 %662
        %v664 = vadd.f32 %v597, %v598
        %665 = vadd.xlane.f32.xlu0 %v664
        %v666 = vpop.xlane.xlu0 %665
        %v667 = vadd.f32 %v599, %v600
        %668 = vadd.xlane.f32.xlu0 %v667
        %v669 = vpop.xlane.xlu0 %668
        %v670 = vadd.f32 %v601, %v602
        %671 = vadd.xlane.f32.xlu0 %v670
        %v672 = vpop.xlane.xlu0 %671
        %v673 = vadd.f32 %v603, %v604
        %674 = vadd.xlane.f32.xlu0 %v673
        %v675 = vpop.xlane.xlu0 %674
        %v676 = vadd.f32 %v605, %v606
        %677 = vadd.xlane.f32.xlu0 %v676
        %v678 = vpop.xlane.xlu0 %677
        %v679 = vadd.f32 %v607, %v608
        %680 = vadd.xlane.f32.xlu0 %v679
        %v681 = vpop.xlane.xlu0 %680
        %v682 = vadd.f32 %v609, %v610
        %683 = vadd.xlane.f32.xlu0 %v682
        %v684 = vpop.xlane.xlu0 %683
        %v685 = vadd.f32 %v611, %v612
        %686 = vadd.xlane.f32.xlu0 %v685
        %v687 = vpop.xlane.xlu0 %686
        %v688 = vadd.f32 %v613, %v614
        %689 = vadd.xlane.f32.xlu0 %v688
        %v690 = vpop.xlane.xlu0 %689
        %v691 = vadd.f32 %v615, %v616
        %692 = vadd.xlane.f32.xlu0 %v691
        %v693 = vpop.xlane.xlu0 %692
        %v694 = vadd.f32 %v617, %v618
        %695 = vadd.xlane.f32.xlu0 %v694
        %v696 = vpop.xlane.xlu0 %695
        %v697 = vadd.f32 %v619, %v620
        %698 = vadd.xlane.f32.xlu0 %v697
        %v699 = vpop.xlane.xlu0 %698
        %v700 = vadd.f32 %v621, %v622
        %701 = vadd.xlane.f32.xlu0 %v700
        %v702 = vpop.xlane.xlu0 %701
        %v703 = vadd.f32 %v623, %v624
        %704 = vadd.xlane.f32.xlu0 %v703
        %v705 = vpop.xlane.xlu0 %704
        %v706 = vadd.f32 %v625, %v626
        %707 = vadd.xlane.f32.xlu0 %v706
        %v708 = vpop.xlane.xlu0 %707
        %v709 = vadd.f32 %v627, %v628
        %710 = vadd.xlane.f32.xlu0 %v709
        %v711 = vpop.xlane.xlu0 %710
        %v712 = vadd.f32 %v629, %v630
        %713 = vadd.xlane.f32.xlu0 %v712
        %v714 = vpop.xlane.xlu0 %713
        %v715 = vadd.f32 %v631, %v632
        %716 = vadd.xlane.f32.xlu0 %v715
        %v717 = vpop.xlane.xlu0 %716
        %v718 = vadd.f32 %v633, %v634
        %719 = vadd.xlane.f32.xlu0 %v718
        %v720 = vpop.xlane.xlu0 %719
        %v721 = vadd.f32 %v635, %v636
        %722 = vadd.xlane.f32.xlu0 %v721
        %v723 = vpop.xlane.xlu0 %722
        %v724 = vadd.f32 %v637, %v638
        %725 = vadd.xlane.f32.xlu0 %v724
        %v726 = vpop.xlane.xlu0 %725
        %v727 = vadd.f32 %v639, %v640
        %728 = vadd.xlane.f32.xlu0 %v727
        %v729 = vpop.xlane.xlu0 %728
        %v730 = vadd.f32 %v641, %v642
        %731 = vadd.xlane.f32.xlu0 %v730
        %v732 = vpop.xlane.xlu0 %731
        %v733 = vadd.f32 %v643, %v644
        %734 = vadd.xlane.f32.xlu0 %v733
        %v735 = vpop.xlane.xlu0 %734
        %v736 = vadd.f32 %v645, %v646
        %737 = vadd.xlane.f32.xlu0 %v736
        %v738 = vpop.xlane.xlu0 %737
        %v739 = vadd.f32 %v647, %v648
        %740 = vadd.xlane.f32.xlu0 %v739
        %v741 = vpop.xlane.xlu0 %740
        %v742 = vadd.f32 %v649, %v650
        %743 = vadd.xlane.f32.xlu0 %v742
        %v744 = vpop.xlane.xlu0 %743
        %v745 = vadd.f32 %v651, %v652
        %746 = vadd.xlane.f32.xlu0 %v745
        %v747 = vpop.xlane.xlu0 %746
        %v748 = vadd.f32 %v653, %v654
        %749 = vadd.xlane.f32.xlu0 %v748
        %v750 = vpop.xlane.xlu0 %749
        %v751 = vmul.f32 %v657, %v494
        %v752 = vmul.f32 %v660, %v494
        %v753 = vmul.f32 %v663, %v494
        %v754 = vmul.f32 %v666, %v494
        %v755 = vmul.f32 %v669, %v494
        %v756 = vmul.f32 %v672, %v494
        %v757 = vmul.f32 %v675, %v494
        %v758 = vmul.f32 %v678, %v494
        %v759 = vmul.f32 %v681, %v494
        %v760 = vmul.f32 %v684, %v494
        %v761 = vmul.f32 %v687, %v494
        %v762 = vmul.f32 %v690, %v494
        %v763 = vmul.f32 %v693, %v494
        %v764 = vmul.f32 %v696, %v494
        %v765 = vmul.f32 %v699, %v494
        %v766 = vmul.f32 %v702, %v494
        %v767 = vmul.f32 %v705, %v494
        %v768 = vmul.f32 %v708, %v494
        %v769 = vmul.f32 %v711, %v494
        %v770 = vmul.f32 %v714, %v494
        %v771 = vmul.f32 %v717, %v494
        %v772 = vmul.f32 %v720, %v494
        %v773 = vmul.f32 %v723, %v494
        %v774 = vmul.f32 %v726, %v494
        %v775 = vmul.f32 %v729, %v494
        %v776 = vmul.f32 %v732, %v494
        %v777 = vmul.f32 %v735, %v494
        %v778 = vmul.f32 %v738, %v494
        %v779 = vmul.f32 %v741, %v494
        %v780 = vmul.f32 %v744, %v494
        %v781 = vmul.f32 %v747, %v494
        %v782 = vmul.f32 %v750, %v494
        %v783 = vadd.f32 %v751, 1e-05
        %v784 = vadd.f32 %v752, 1e-05
        %v785 = vadd.f32 %v753, 1e-05
        %v786 = vadd.f32 %v754, 1e-05
        %v787 = vadd.f32 %v755, 1e-05
        %v788 = vadd.f32 %v756, 1e-05
        %v789 = vadd.f32 %v757, 1e-05
        %v790 = vadd.f32 %v758, 1e-05
        %v791 = vadd.f32 %v759, 1e-05
        %v792 = vadd.f32 %v760, 1e-05
        %v793 = vadd.f32 %v761, 1e-05
        %v794 = vadd.f32 %v762, 1e-05
        %v795 = vadd.f32 %v763, 1e-05
        %v796 = vadd.f32 %v764, 1e-05
        %v797 = vadd.f32 %v765, 1e-05
        %v798 = vadd.f32 %v766, 1e-05
        %v799 = vadd.f32 %v767, 1e-05
        %v800 = vadd.f32 %v768, 1e-05
        %v801 = vadd.f32 %v769, 1e-05
        %v802 = vadd.f32 %v770, 1e-05
        %v803 = vadd.f32 %v771, 1e-05
        %v804 = vadd.f32 %v772, 1e-05
        %v805 = vadd.f32 %v773, 1e-05
        %v806 = vadd.f32 %v774, 1e-05
        %v807 = vadd.f32 %v775, 1e-05
        %v808 = vadd.f32 %v776, 1e-05
        %v809 = vadd.f32 %v777, 1e-05
        %v810 = vadd.f32 %v778, 1e-05
        %v811 = vadd.f32 %v779, 1e-05
        %v812 = vadd.f32 %v780, 1e-05
        %v813 = vadd.f32 %v781, 1e-05
        %v814 = vadd.f32 %v782, 1e-05
        %v815 = vrsqrt.pop %v783
        %v816 = vmul.f32 %v815, %v783
        %v817 = vmul.f32 %v816, %v815
        %v818 = vmul.f32 0.5, %v817
        %v819 = vsub.f32 1.5, %v818
        %v820 = vmul.f32 %v815, %v819
        %vm821 = vweird.f32 %v783
        %vm822 = vweird.f32 %v815
        %vm823 = vmor %vm821, %vm822
        %v824 = vsel %vm823, %v815, %v820
        %v825 = vrsqrt.pop %v784
        %v826 = vmul.f32 %v825, %v784
        %v827 = vmul.f32 %v826, %v825
        %v828 = vmul.f32 0.5, %v827
        %v829 = vsub.f32 1.5, %v828
        %v830 = vmul.f32 %v825, %v829
        %vm831 = vweird.f32 %v784
        %vm832 = vweird.f32 %v825
        %vm833 = vmor %vm831, %vm832
        %v834 = vsel %vm833, %v825, %v830
        %v835 = vrsqrt.pop %v785
        %v836 = vmul.f32 %v835, %v785
        %v837 = vmul.f32 %v836, %v835
        %v838 = vmul.f32 0.5, %v837
        %v839 = vsub.f32 1.5, %v838
        %v840 = vmul.f32 %v835, %v839
        %vm841 = vweird.f32 %v785
        %vm842 = vweird.f32 %v835
        %vm843 = vmor %vm841, %vm842
        %v844 = vsel %vm843, %v835, %v840
        %v845 = vrsqrt.pop %v786
        %v846 = vmul.f32 %v845, %v786
        %v847 = vmul.f32 %v846, %v845
        %v848 = vmul.f32 0.5, %v847
        %v849 = vsub.f32 1.5, %v848
        %v850 = vmul.f32 %v845, %v849
        %vm851 = vweird.f32 %v786
        %vm852 = vweird.f32 %v845
        %vm853 = vmor %vm851, %vm852
        %v854 = vsel %vm853, %v845, %v850
        %v855 = vrsqrt.pop %v787
        %v856 = vmul.f32 %v855, %v787
        %v857 = vmul.f32 %v856, %v855
        %v858 = vmul.f32 0.5, %v857
        %v859 = vsub.f32 1.5, %v858
        %v860 = vmul.f32 %v855, %v859
        %vm861 = vweird.f32 %v787
        %vm862 = vweird.f32 %v855
        %vm863 = vmor %vm861, %vm862
        %v864 = vsel %vm863, %v855, %v860
        %v865 = vrsqrt.pop %v788
        %v866 = vmul.f32 %v865, %v788
        %v867 = vmul.f32 %v866, %v865
        %v868 = vmul.f32 0.5, %v867
        %v869 = vsub.f32 1.5, %v868
        %v870 = vmul.f32 %v865, %v869
        %vm871 = vweird.f32 %v788
        %vm872 = vweird.f32 %v865
        %vm873 = vmor %vm871, %vm872
        %v874 = vsel %vm873, %v865, %v870
        %v875 = vrsqrt.pop %v789
        %v876 = vmul.f32 %v875, %v789
        %v877 = vmul.f32 %v876, %v875
        %v878 = vmul.f32 0.5, %v877
        %v879 = vsub.f32 1.5, %v878
        %v880 = vmul.f32 %v875, %v879
        %vm881 = vweird.f32 %v789
        %vm882 = vweird.f32 %v875
        %vm883 = vmor %vm881, %vm882
        %v884 = vsel %vm883, %v875, %v880
        %v885 = vrsqrt.pop %v790
        %v886 = vmul.f32 %v885, %v790
        %v887 = vmul.f32 %v886, %v885
        %v888 = vmul.f32 0.5, %v887
        %v889 = vsub.f32 1.5, %v888
        %v890 = vmul.f32 %v885, %v889
        %vm891 = vweird.f32 %v790
        %vm892 = vweird.f32 %v885
        %vm893 = vmor %vm891, %vm892
        %v894 = vsel %vm893, %v885, %v890
        %v895 = vrsqrt.pop %v791
        %v896 = vmul.f32 %v895, %v791
        %v897 = vmul.f32 %v896, %v895
        %v898 = vmul.f32 0.5, %v897
        %v899 = vsub.f32 1.5, %v898
        %v900 = vmul.f32 %v895, %v899
        %vm901 = vweird.f32 %v791
        %vm902 = vweird.f32 %v895
        %vm903 = vmor %vm901, %vm902
        %v904 = vsel %vm903, %v895, %v900
        %v905 = vrsqrt.pop %v792
        %v906 = vmul.f32 %v905, %v792
        %v907 = vmul.f32 %v906, %v905
        %v908 = vmul.f32 0.5, %v907
        %v909 = vsub.f32 1.5, %v908
        %v910 = vmul.f32 %v905, %v909
        %vm911 = vweird.f32 %v792
        %vm912 = vweird.f32 %v905
        %vm913 = vmor %vm911, %vm912
        %v914 = vsel %vm913, %v905, %v910
        %v915 = vrsqrt.pop %v793
        %v916 = vmul.f32 %v915, %v793
        %v917 = vmul.f32 %v916, %v915
        %v918 = vmul.f32 0.5, %v917
        %v919 = vsub.f32 1.5, %v918
        %v920 = vmul.f32 %v915, %v919
        %vm921 = vweird.f32 %v793
        %vm922 = vweird.f32 %v915
        %vm923 = vmor %vm921, %vm922
        %v924 = vsel %vm923, %v915, %v920
        %v925 = vrsqrt.pop %v794
        %v926 = vmul.f32 %v925, %v794
        %v927 = vmul.f32 %v926, %v925
        %v928 = vmul.f32 0.5, %v927
        %v929 = vsub.f32 1.5, %v928
        %v930 = vmul.f32 %v925, %v929
        %vm931 = vweird.f32 %v794
        %vm932 = vweird.f32 %v925
        %vm933 = vmor %vm931, %vm932
        %v934 = vsel %vm933, %v925, %v930
        %v935 = vrsqrt.pop %v795
        %v936 = vmul.f32 %v935, %v795
        %v937 = vmul.f32 %v936, %v935
        %v938 = vmul.f32 0.5, %v937
        %v939 = vsub.f32 1.5, %v938
        %v940 = vmul.f32 %v935, %v939
        %vm941 = vweird.f32 %v795
        %vm942 = vweird.f32 %v935
        %vm943 = vmor %vm941, %vm942
        %v944 = vsel %vm943, %v935, %v940
        %v945 = vrsqrt.pop %v796
        %v946 = vmul.f32 %v945, %v796
        %v947 = vmul.f32 %v946, %v945
        %v948 = vmul.f32 0.5, %v947
        %v949 = vsub.f32 1.5, %v948
        %v950 = vmul.f32 %v945, %v949
        %vm951 = vweird.f32 %v796
        %vm952 = vweird.f32 %v945
        %vm953 = vmor %vm951, %vm952
        %v954 = vsel %vm953, %v945, %v950
        %v955 = vrsqrt.pop %v797
        %v956 = vmul.f32 %v955, %v797
        %v957 = vmul.f32 %v956, %v955
        %v958 = vmul.f32 0.5, %v957
        %v959 = vsub.f32 1.5, %v958
        %v960 = vmul.f32 %v955, %v959
        %vm961 = vweird.f32 %v797
        %vm962 = vweird.f32 %v955
        %vm963 = vmor %vm961, %vm962
        %v964 = vsel %vm963, %v955, %v960
        %v965 = vrsqrt.pop %v798
        %v966 = vmul.f32 %v965, %v798
        %v967 = vmul.f32 %v966, %v965
        %v968 = vmul.f32 0.5, %v967
        %v969 = vsub.f32 1.5, %v968
        %v970 = vmul.f32 %v965, %v969
        %vm971 = vweird.f32 %v798
        %vm972 = vweird.f32 %v965
        %vm973 = vmor %vm971, %vm972
        %v974 = vsel %vm973, %v965, %v970
        %v975 = vrsqrt.pop %v799
        %v976 = vmul.f32 %v975, %v799
        %v977 = vmul.f32 %v976, %v975
        %v978 = vmul.f32 0.5, %v977
        %v979 = vsub.f32 1.5, %v978
        %v980 = vmul.f32 %v975, %v979
        %vm981 = vweird.f32 %v799
        %vm982 = vweird.f32 %v975
        %vm983 = vmor %vm981, %vm982
        %v984 = vsel %vm983, %v975, %v980
        %v985 = vrsqrt.pop %v800
        %v986 = vmul.f32 %v985, %v800
        %v987 = vmul.f32 %v986, %v985
        %v988 = vmul.f32 0.5, %v987
        %v989 = vsub.f32 1.5, %v988
        %v990 = vmul.f32 %v985, %v989
        %vm991 = vweird.f32 %v800
        %vm992 = vweird.f32 %v985
        %vm993 = vmor %vm991, %vm992
        %v994 = vsel %vm993, %v985, %v990
        %v995 = vrsqrt.pop %v801
        %v996 = vmul.f32 %v995, %v801
        %v997 = vmul.f32 %v996, %v995
        %v998 = vmul.f32 0.5, %v997
        %v999 = vsub.f32 1.5, %v998
        %v1000 = vmul.f32 %v995, %v999
        %vm1001 = vweird.f32 %v801
        %vm1002 = vweird.f32 %v995
        %vm1003 = vmor %vm1001, %vm1002
        %v1004 = vsel %vm1003, %v995, %v1000
        %v1005 = vrsqrt.pop %v802
        %v1006 = vmul.f32 %v1005, %v802
        %v1007 = vmul.f32 %v1006, %v1005
        %v1008 = vmul.f32 0.5, %v1007
        %v1009 = vsub.f32 1.5, %v1008
        %v1010 = vmul.f32 %v1005, %v1009
        %vm1011 = vweird.f32 %v802
        %vm1012 = vweird.f32 %v1005
        %vm1013 = vmor %vm1011, %vm1012
        %v1014 = vsel %vm1013, %v1005, %v1010
        %v1015 = vrsqrt.pop %v803
        %v1016 = vmul.f32 %v1015, %v803
        %v1017 = vmul.f32 %v1016, %v1015
        %v1018 = vmul.f32 0.5, %v1017
        %v1019 = vsub.f32 1.5, %v1018
        %v1020 = vmul.f32 %v1015, %v1019
        %vm1021 = vweird.f32 %v803
        %vm1022 = vweird.f32 %v1015
        %vm1023 = vmor %vm1021, %vm1022
        %v1024 = vsel %vm1023, %v1015, %v1020
        %v1025 = vrsqrt.pop %v804
        %v1026 = vmul.f32 %v1025, %v804
        %v1027 = vmul.f32 %v1026, %v1025
        %v1028 = vmul.f32 0.5, %v1027
        %v1029 = vsub.f32 1.5, %v1028
        %v1030 = vmul.f32 %v1025, %v1029
        %vm1031 = vweird.f32 %v804
        %vm1032 = vweird.f32 %v1025
        %vm1033 = vmor %vm1031, %vm1032
        %v1034 = vsel %vm1033, %v1025, %v1030
        %v1035 = vrsqrt.pop %v805
        %v1036 = vmul.f32 %v1035, %v805
        %v1037 = vmul.f32 %v1036, %v1035
        %v1038 = vmul.f32 0.5, %v1037
        %v1039 = vsub.f32 1.5, %v1038
        %v1040 = vmul.f32 %v1035, %v1039
        %vm1041 = vweird.f32 %v805
        %vm1042 = vweird.f32 %v1035
        %vm1043 = vmor %vm1041, %vm1042
        %v1044 = vsel %vm1043, %v1035, %v1040
        %v1045 = vrsqrt.pop %v806
        %v1046 = vmul.f32 %v1045, %v806
        %v1047 = vmul.f32 %v1046, %v1045
        %v1048 = vmul.f32 0.5, %v1047
        %v1049 = vsub.f32 1.5, %v1048
        %v1050 = vmul.f32 %v1045, %v1049
        %vm1051 = vweird.f32 %v806
        %vm1052 = vweird.f32 %v1045
        %vm1053 = vmor %vm1051, %vm1052
        %v1054 = vsel %vm1053, %v1045, %v1050
        %v1055 = vrsqrt.pop %v807
        %v1056 = vmul.f32 %v1055, %v807
        %v1057 = vmul.f32 %v1056, %v1055
        %v1058 = vmul.f32 0.5, %v1057
        %v1059 = vsub.f32 1.5, %v1058
        %v1060 = vmul.f32 %v1055, %v1059
        %vm1061 = vweird.f32 %v807
        %vm1062 = vweird.f32 %v1055
        %vm1063 = vmor %vm1061, %vm1062
        %v1064 = vsel %vm1063, %v1055, %v1060
        %v1065 = vrsqrt.pop %v808
        %v1066 = vmul.f32 %v1065, %v808
        %v1067 = vmul.f32 %v1066, %v1065
        %v1068 = vmul.f32 0.5, %v1067
        %v1069 = vsub.f32 1.5, %v1068
        %v1070 = vmul.f32 %v1065, %v1069
        %vm1071 = vweird.f32 %v808
        %vm1072 = vweird.f32 %v1065
        %vm1073 = vmor %vm1071, %vm1072
        %v1074 = vsel %vm1073, %v1065, %v1070
        %v1075 = vrsqrt.pop %v809
        %v1076 = vmul.f32 %v1075, %v809
        %v1077 = vmul.f32 %v1076, %v1075
        %v1078 = vmul.f32 0.5, %v1077
        %v1079 = vsub.f32 1.5, %v1078
        %v1080 = vmul.f32 %v1075, %v1079
        %vm1081 = vweird.f32 %v809
        %vm1082 = vweird.f32 %v1075
        %vm1083 = vmor %vm1081, %vm1082
        %v1084 = vsel %vm1083, %v1075, %v1080
        %v1085 = vrsqrt.pop %v810
        %v1086 = vmul.f32 %v1085, %v810
        %v1087 = vmul.f32 %v1086, %v1085
        %v1088 = vmul.f32 0.5, %v1087
        %v1089 = vsub.f32 1.5, %v1088
        %v1090 = vmul.f32 %v1085, %v1089
        %vm1091 = vweird.f32 %v810
        %vm1092 = vweird.f32 %v1085
        %vm1093 = vmor %vm1091, %vm1092
        %v1094 = vsel %vm1093, %v1085, %v1090
        %v1095 = vrsqrt.pop %v811
        %v1096 = vmul.f32 %v1095, %v811
        %v1097 = vmul.f32 %v1096, %v1095
        %v1098 = vmul.f32 0.5, %v1097
        %v1099 = vsub.f32 1.5, %v1098
        %v1100 = vmul.f32 %v1095, %v1099
        %vm1101 = vweird.f32 %v811
        %vm1102 = vweird.f32 %v1095
        %vm1103 = vmor %vm1101, %vm1102
        %v1104 = vsel %vm1103, %v1095, %v1100
        %v1105 = vrsqrt.pop %v812
        %v1106 = vmul.f32 %v1105, %v812
        %v1107 = vmul.f32 %v1106, %v1105
        %v1108 = vmul.f32 0.5, %v1107
        %v1109 = vsub.f32 1.5, %v1108
        %v1110 = vmul.f32 %v1105, %v1109
        %vm1111 = vweird.f32 %v812
        %vm1112 = vweird.f32 %v1105
        %vm1113 = vmor %vm1111, %vm1112
        %v1114 = vsel %vm1113, %v1105, %v1110
        %v1115 = vrsqrt.pop %v813
        %v1116 = vmul.f32 %v1115, %v813
        %v1117 = vmul.f32 %v1116, %v1115
        %v1118 = vmul.f32 0.5, %v1117
        %v1119 = vsub.f32 1.5, %v1118
        %v1120 = vmul.f32 %v1115, %v1119
        %vm1121 = vweird.f32 %v813
        %vm1122 = vweird.f32 %v1115
        %vm1123 = vmor %vm1121, %vm1122
        %v1124 = vsel %vm1123, %v1115, %v1120
        %v1125 = vrsqrt.pop %v814
        %v1126 = vmul.f32 %v1125, %v814
        %v1127 = vmul.f32 %v1126, %v1125
        %v1128 = vmul.f32 0.5, %v1127
        %v1129 = vsub.f32 1.5, %v1128
        %v1130 = vmul.f32 %v1125, %v1129
        %vm1131 = vweird.f32 %v814
        %vm1132 = vweird.f32 %v1125
        %vm1133 = vmor %vm1131, %vm1132
        %v1134 = vsel %vm1133, %v1125, %v1130
        %v1135 = vmul.f32 %v527, %v824
        %v1136 = vmul.f32 %v528, %v824
        %v1137 = vmul.f32 %v529, %v834
        %v1138 = vmul.f32 %v530, %v834
        %v1139 = vmul.f32 %v531, %v844
        %v1140 = vmul.f32 %v532, %v844
        %v1141 = vmul.f32 %v533, %v854
        %v1142 = vmul.f32 %v534, %v854
        %v1143 = vmul.f32 %v535, %v864
        %v1144 = vmul.f32 %v536, %v864
        %v1145 = vmul.f32 %v537, %v874
        %v1146 = vmul.f32 %v538, %v874
        %v1147 = vmul.f32 %v539, %v884
        %v1148 = vmul.f32 %v540, %v884
        %v1149 = vmul.f32 %v541, %v894
        %v1150 = vmul.f32 %v542, %v894
        %v1151 = vmul.f32 %v543, %v904
        %v1152 = vmul.f32 %v544, %v904
        %v1153 = vmul.f32 %v545, %v914
        %v1154 = vmul.f32 %v546, %v914
        %v1155 = vmul.f32 %v547, %v924
        %v1156 = vmul.f32 %v548, %v924
        %v1157 = vmul.f32 %v549, %v934
        %v1158 = vmul.f32 %v550, %v934
        %v1159 = vmul.f32 %v551, %v944
        %v1160 = vmul.f32 %v552, %v944
        %v1161 = vmul.f32 %v553, %v954
        %v1162 = vmul.f32 %v554, %v954
        %v1163 = vmul.f32 %v555, %v964
        %v1164 = vmul.f32 %v556, %v964
        %v1165 = vmul.f32 %v557, %v974
        %v1166 = vmul.f32 %v558, %v974
        %v1167 = vmul.f32 %v559, %v984
        %v1168 = vmul.f32 %v560, %v984
        %v1169 = vmul.f32 %v561, %v994
        %v1170 = vmul.f32 %v562, %v994
        %v1171 = vmul.f32 %v563, %v1004
        %v1172 = vmul.f32 %v564, %v1004
        %v1173 = vmul.f32 %v565, %v1014
        %v1174 = vmul.f32 %v566, %v1014
        %v1175 = vmul.f32 %v567, %v1024
        %v1176 = vmul.f32 %v568, %v1024
        %v1177 = vmul.f32 %v569, %v1034
        %v1178 = vmul.f32 %v570, %v1034
        %v1179 = vmul.f32 %v571, %v1044
        %v1180 = vmul.f32 %v572, %v1044
        %v1181 = vmul.f32 %v573, %v1054
        %v1182 = vmul.f32 %v574, %v1054
        %v1183 = vmul.f32 %v575, %v1064
        %v1184 = vmul.f32 %v576, %v1064
        %v1185 = vmul.f32 %v577, %v1074
        %v1186 = vmul.f32 %v578, %v1074
        %v1187 = vmul.f32 %v579, %v1084
        %v1188 = vmul.f32 %v580, %v1084
        %v1189 = vmul.f32 %v581, %v1094
        %v1190 = vmul.f32 %v582, %v1094
        %v1191 = vmul.f32 %v583, %v1104
        %v1192 = vmul.f32 %v584, %v1104
        %v1193 = vmul.f32 %v585, %v1114
        %v1194 = vmul.f32 %v586, %v1114
        %v1195 = vmul.f32 %v587, %v1124
        %v1196 = vmul.f32 %v588, %v1124
        %v1197 = vmul.f32 %v589, %v1134
        %v1198 = vmul.f32 %v590, %v1134
        %v1200 = vperm.slane %v390, 0
        %v1201 = vperm.slane %v390, 1
        %v1204 = vmul.f32 %v1135, %v1200
        %v1205 = vmul.f32 %v1136, %v1201
        %v1206 = vmul.f32 %v1137, %v1200
        %v1207 = vmul.f32 %v1138, %v1201
        %v1208 = vmul.f32 %v1139, %v1200
        %v1209 = vmul.f32 %v1140, %v1201
        %v1210 = vmul.f32 %v1141, %v1200
        %v1211 = vmul.f32 %v1142, %v1201
        %v1212 = vmul.f32 %v1143, %v1200
        %v1213 = vmul.f32 %v1144, %v1201
        %v1214 = vmul.f32 %v1145, %v1200
        %v1215 = vmul.f32 %v1146, %v1201
        %v1216 = vmul.f32 %v1147, %v1200
        %v1217 = vmul.f32 %v1148, %v1201
        %v1218 = vmul.f32 %v1149, %v1200
        %v1219 = vmul.f32 %v1150, %v1201
        %v1220 = vmul.f32 %v1151, %v1200
        %v1221 = vmul.f32 %v1152, %v1201
        %v1222 = vmul.f32 %v1153, %v1200
        %v1223 = vmul.f32 %v1154, %v1201
        %v1224 = vmul.f32 %v1155, %v1200
        %v1225 = vmul.f32 %v1156, %v1201
        %v1226 = vmul.f32 %v1157, %v1200
        %v1227 = vmul.f32 %v1158, %v1201
        %v1228 = vmul.f32 %v1159, %v1200
        %v1229 = vmul.f32 %v1160, %v1201
        %v1230 = vmul.f32 %v1161, %v1200
        %v1231 = vmul.f32 %v1162, %v1201
        %v1232 = vmul.f32 %v1163, %v1200
        %v1233 = vmul.f32 %v1164, %v1201
        %v1234 = vmul.f32 %v1165, %v1200
        %v1235 = vmul.f32 %v1166, %v1201
        %v1236 = vmul.f32 %v1167, %v1200
        %v1237 = vmul.f32 %v1168, %v1201
        %v1238 = vmul.f32 %v1169, %v1200
        %v1239 = vmul.f32 %v1170, %v1201
        %v1240 = vmul.f32 %v1171, %v1200
        %v1241 = vmul.f32 %v1172, %v1201
        %v1242 = vmul.f32 %v1173, %v1200
        %v1243 = vmul.f32 %v1174, %v1201
        %v1244 = vmul.f32 %v1175, %v1200
        %v1245 = vmul.f32 %v1176, %v1201
        %v1246 = vmul.f32 %v1177, %v1200
        %v1247 = vmul.f32 %v1178, %v1201
        %v1248 = vmul.f32 %v1179, %v1200
        %v1249 = vmul.f32 %v1180, %v1201
        %v1250 = vmul.f32 %v1181, %v1200
        %v1251 = vmul.f32 %v1182, %v1201
        %v1252 = vmul.f32 %v1183, %v1200
        %v1253 = vmul.f32 %v1184, %v1201
        %v1254 = vmul.f32 %v1185, %v1200
        %v1255 = vmul.f32 %v1186, %v1201
        %v1256 = vmul.f32 %v1187, %v1200
        %v1257 = vmul.f32 %v1188, %v1201
        %v1258 = vmul.f32 %v1189, %v1200
        %v1259 = vmul.f32 %v1190, %v1201
        %v1260 = vmul.f32 %v1191, %v1200
        %v1261 = vmul.f32 %v1192, %v1201
        %v1262 = vmul.f32 %v1193, %v1200
        %v1263 = vmul.f32 %v1194, %v1201
        %v1264 = vmul.f32 %v1195, %v1200
        %v1265 = vmul.f32 %v1196, %v1201
        %v1266 = vmul.f32 %v1197, %v1200
        %v1267 = vmul.f32 %v1198, %v1201
        %v1269 = vperm.slane %v391, 0
        %v1270 = vperm.slane %v391, 1
        %v1273 = vadd.f32 %v1204, %v1269
        %v1274 = vadd.f32 %v1205, %v1270
        %v1275 = vadd.f32 %v1206, %v1269
        %v1276 = vadd.f32 %v1207, %v1270
        %v1277 = vadd.f32 %v1208, %v1269
        %v1278 = vadd.f32 %v1209, %v1270
        %v1279 = vadd.f32 %v1210, %v1269
        %v1280 = vadd.f32 %v1211, %v1270
        %v1281 = vadd.f32 %v1212, %v1269
        %v1282 = vadd.f32 %v1213, %v1270
        %v1283 = vadd.f32 %v1214, %v1269
        %v1284 = vadd.f32 %v1215, %v1270
        %v1285 = vadd.f32 %v1216, %v1269
        %v1286 = vadd.f32 %v1217, %v1270
        %v1287 = vadd.f32 %v1218, %v1269
        %v1288 = vadd.f32 %v1219, %v1270
        %v1289 = vadd.f32 %v1220, %v1269
        %v1290 = vadd.f32 %v1221, %v1270
        %v1291 = vadd.f32 %v1222, %v1269
        %v1292 = vadd.f32 %v1223, %v1270
        %v1293 = vadd.f32 %v1224, %v1269
        %v1294 = vadd.f32 %v1225, %v1270
        %v1295 = vadd.f32 %v1226, %v1269
        %v1296 = vadd.f32 %v1227, %v1270
        %v1297 = vadd.f32 %v1228, %v1269
        %v1298 = vadd.f32 %v1229, %v1270
        %v1299 = vadd.f32 %v1230, %v1269
        %v1300 = vadd.f32 %v1231, %v1270
        %v1301 = vadd.f32 %v1232, %v1269
        %v1302 = vadd.f32 %v1233, %v1270
        %v1303 = vadd.f32 %v1234, %v1269
        %v1304 = vadd.f32 %v1235, %v1270
        %v1305 = vadd.f32 %v1236, %v1269
        %v1306 = vadd.f32 %v1237, %v1270
        %v1307 = vadd.f32 %v1238, %v1269
        %v1308 = vadd.f32 %v1239, %v1270
        %v1309 = vadd.f32 %v1240, %v1269
        %v1310 = vadd.f32 %v1241, %v1270
        %v1311 = vadd.f32 %v1242, %v1269
        %v1312 = vadd.f32 %v1243, %v1270
        %v1313 = vadd.f32 %v1244, %v1269
        %v1314 = vadd.f32 %v1245, %v1270
        %v1315 = vadd.f32 %v1246, %v1269
        %v1316 = vadd.f32 %v1247, %v1270
        %v1317 = vadd.f32 %v1248, %v1269
        %v1318 = vadd.f32 %v1249, %v1270
        %v1319 = vadd.f32 %v1250, %v1269
        %v1320 = vadd.f32 %v1251, %v1270
        %v1321 = vadd.f32 %v1252, %v1269
        %v1322 = vadd.f32 %v1253, %v1270
        %v1323 = vadd.f32 %v1254, %v1269
        %v1324 = vadd.f32 %v1255, %v1270
        %v1325 = vadd.f32 %v1256, %v1269
        %v1326 = vadd.f32 %v1257, %v1270
        %v1327 = vadd.f32 %v1258, %v1269
        %v1328 = vadd.f32 %v1259, %v1270
        %v1329 = vadd.f32 %v1260, %v1269
        %v1330 = vadd.f32 %v1261, %v1270
        %v1331 = vadd.f32 %v1262, %v1269
        %v1332 = vadd.f32 %v1263, %v1270
        %v1333 = vadd.f32 %v1264, %v1269
        %v1334 = vadd.f32 %v1265, %v1270
        %v1335 = vadd.f32 %v1266, %v1269
        %v1336 = vadd.f32 %v1267, %v1270
        %v1337 = vpack.c.bf16 %v1275, %v1273
        %v1338 = vpack.c.bf16 %v1276, %v1274
        %v1339 = vpack.c.bf16 %v1279, %v1277
        %v1340 = vpack.c.bf16 %v1280, %v1278
        %v1341 = vpack.c.bf16 %v1283, %v1281
        %v1342 = vpack.c.bf16 %v1284, %v1282
        %v1343 = vpack.c.bf16 %v1287, %v1285
        %v1344 = vpack.c.bf16 %v1288, %v1286
        %v1345 = vpack.c.bf16 %v1291, %v1289
        %v1346 = vpack.c.bf16 %v1292, %v1290
        %v1347 = vpack.c.bf16 %v1295, %v1293
        %v1348 = vpack.c.bf16 %v1296, %v1294
        %v1349 = vpack.c.bf16 %v1299, %v1297
        %v1350 = vpack.c.bf16 %v1300, %v1298
        %v1351 = vpack.c.bf16 %v1303, %v1301
        %v1352 = vpack.c.bf16 %v1304, %v1302
        %v1353 = vpack.c.bf16 %v1307, %v1305
        %v1354 = vpack.c.bf16 %v1308, %v1306
        %v1355 = vpack.c.bf16 %v1311, %v1309
        %v1356 = vpack.c.bf16 %v1312, %v1310
        %v1357 = vpack.c.bf16 %v1315, %v1313
        %v1358 = vpack.c.bf16 %v1316, %v1314
        %v1359 = vpack.c.bf16 %v1319, %v1317
        %v1360 = vpack.c.bf16 %v1320, %v1318
        %v1361 = vpack.c.bf16 %v1323, %v1321
        %v1362 = vpack.c.bf16 %v1324, %v1322
        %v1363 = vpack.c.bf16 %v1327, %v1325
        %v1364 = vpack.c.bf16 %v1328, %v1326
        %v1365 = vpack.c.bf16 %v1331, %v1329
        %v1366 = vpack.c.bf16 %v1332, %v1330
        %v1367 = vpack.c.bf16 %v1335, %v1333
        %v1368 = vpack.c.bf16 %v1336, %v1334
        %v1369 = vld [vmem:[#allocation8] sm:$0xff]
        %v1370 = vld [vmem:[#allocation8 + $0x8] sm:$0xff]
        %v1371 = vld [vmem:[#allocation8 + $0x10] sm:$0xff]
        %v1372 = vld [vmem:[#allocation8 + $0x18] sm:$0xff]
        %v1373 = vld [vmem:[#allocation8 + $0x20] sm:$0xff]
        %v1374 = vld [vmem:[#allocation8 + $0x28] sm:$0xff]
        %v1375 = vld [vmem:[#allocation8 + $0x30] sm:$0xff]
        %v1376 = vld [vmem:[#allocation8 + $0x38] sm:$0xff]
        %v1377 = vld [vmem:[#allocation8 + $0x40] sm:$0xff]
        %v1378 = vld [vmem:[#allocation8 + $0x48] sm:$0xff]
        %v1379 = vld [vmem:[#allocation8 + $0x50] sm:$0xff]
        %v1380 = vld [vmem:[#allocation8 + $0x58] sm:$0xff]
        %v1381 = vld [vmem:[#allocation8 + $0x60] sm:$0xff]
        %v1382 = vld [vmem:[#allocation8 + $0x68] sm:$0xff]
        %v1383 = vld [vmem:[#allocation8 + $0x70] sm:$0xff]
        %v1384 = vld [vmem:[#allocation8 + $0x78] sm:$0xff]
        %v1385 = vld [vmem:[#allocation8 + $0x80] sm:$0xff]
        %v1386 = vld [vmem:[#allocation8 + $0x88] sm:$0xff]
        %v1387 = vld [vmem:[#allocation8 + $0x90] sm:$0xff]
        %v1388 = vld [vmem:[#allocation8 + $0x98] sm:$0xff]
        %v1389 = vld [vmem:[#allocation8 + $0xa0] sm:$0xff]
        %v1390 = vld [vmem:[#allocation8 + $0xa8] sm:$0xff]
        %v1391 = vld [vmem:[#allocation8 + $0xb0] sm:$0xff]
        %v1392 = vld [vmem:[#allocation8 + $0xb8] sm:$0xff]
        %v1393 = vld [vmem:[#allocation8 + $0xc0] sm:$0xff]
        %v1394 = vld [vmem:[#allocation8 + $0xc8] sm:$0xff]
        %v1395 = vld [vmem:[#allocation8 + $0xd0] sm:$0xff]
        %v1396 = vld [vmem:[#allocation8 + $0xd8] sm:$0xff]
        %v1397 = vld [vmem:[#allocation8 + $0xe0] sm:$0xff]
        %v1398 = vld [vmem:[#allocation8 + $0xe8] sm:$0xff]
        %v1399 = vld [vmem:[#allocation8 + $0xf0] sm:$0xff]
        %v1400 = vld [vmem:[#allocation8 + $0xf8] sm:$0xff]
        %v1401 = vld [vmem:[#allocation8 + $0x100] sm:$0xff]
        %v1402 = vld [vmem:[#allocation8 + $0x108] sm:$0xff]
        %v1403 = vld [vmem:[#allocation8 + $0x110] sm:$0xff]
        %v1404 = vld [vmem:[#allocation8 + $0x118] sm:$0xff]
        %v1405 = vld [vmem:[#allocation8 + $0x120] sm:$0xff]
        %v1406 = vld [vmem:[#allocation8 + $0x128] sm:$0xff]
        %v1407 = vld [vmem:[#allocation8 + $0x130] sm:$0xff]
        %v1408 = vld [vmem:[#allocation8 + $0x138] sm:$0xff]
        %v1409 = vld [vmem:[#allocation8 + $0x140] sm:$0xff]
        %v1410 = vld [vmem:[#allocation8 + $0x148] sm:$0xff]
        %v1411 = vld [vmem:[#allocation8 + $0x150] sm:$0xff]
        %v1412 = vld [vmem:[#allocation8 + $0x158] sm:$0xff]
        %v1413 = vld [vmem:[#allocation8 + $0x160] sm:$0xff]
        %v1414 = vld [vmem:[#allocation8 + $0x168] sm:$0xff]
        %v1415 = vld [vmem:[#allocation8 + $0x170] sm:$0xff]
        %v1416 = vld [vmem:[#allocation8 + $0x178] sm:$0xff]
        %v1417 = vld [vmem:[#allocation8 + $0x180] sm:$0xff]
        %v1418 = vld [vmem:[#allocation8 + $0x188] sm:$0xff]
        %v1419 = vld [vmem:[#allocation8 + $0x190] sm:$0xff]
        %v1420 = vld [vmem:[#allocation8 + $0x198] sm:$0xff]
        %v1421 = vld [vmem:[#allocation8 + $0x1a0] sm:$0xff]
        %v1422 = vld [vmem:[#allocation8 + $0x1a8] sm:$0xff]
        %v1423 = vld [vmem:[#allocation8 + $0x1b0] sm:$0xff]
        %v1424 = vld [vmem:[#allocation8 + $0x1b8] sm:$0xff]
        %v1425 = vld [vmem:[#allocation8 + $0x1c0] sm:$0xff]
        %v1426 = vld [vmem:[#allocation8 + $0x1c8] sm:$0xff]
        %v1427 = vld [vmem:[#allocation8 + $0x1d0] sm:$0xff]
        %v1428 = vld [vmem:[#allocation8 + $0x1d8] sm:$0xff]
        %v1429 = vld [vmem:[#allocation8 + $0x1e0] sm:$0xff]
        %v1430 = vld [vmem:[#allocation8 + $0x1e8] sm:$0xff]
        %v1431 = vld [vmem:[#allocation8 + $0x1f0] sm:$0xff]
        %v1432 = vld [vmem:[#allocation8 + $0x1f8] sm:$0xff]
        %v1433 = vld [vmem:[#allocation8 + $0x200] sm:$0xff]
        %v1434 = vld [vmem:[#allocation8 + $0x208] sm:$0xff]
        %v1435 = vld [vmem:[#allocation8 + $0x210] sm:$0xff]
        %v1436 = vld [vmem:[#allocation8 + $0x218] sm:$0xff]
        %v1437 = vld [vmem:[#allocation8 + $0x220] sm:$0xff]
        %v1438 = vld [vmem:[#allocation8 + $0x228] sm:$0xff]
        %v1439 = vld [vmem:[#allocation8 + $0x230] sm:$0xff]
        %v1440 = vld [vmem:[#allocation8 + $0x238] sm:$0xff]
        %v1441 = vld [vmem:[#allocation8 + $0x240] sm:$0xff]
        %v1442 = vld [vmem:[#allocation8 + $0x248] sm:$0xff]
        %v1443 = vld [vmem:[#allocation8 + $0x250] sm:$0xff]
        %v1444 = vld [vmem:[#allocation8 + $0x258] sm:$0xff]
        %v1445 = vld [vmem:[#allocation8 + $0x260] sm:$0xff]
        %v1446 = vld [vmem:[#allocation8 + $0x268] sm:$0xff]
        %v1447 = vld [vmem:[#allocation8 + $0x270] sm:$0xff]
        %v1448 = vld [vmem:[#allocation8 + $0x278] sm:$0xff]
        %v1449 = vld [vmem:[#allocation8 + $0x280] sm:$0xff]
        %v1450 = vld [vmem:[#allocation8 + $0x288] sm:$0xff]
        %v1451 = vld [vmem:[#allocation8 + $0x290] sm:$0xff]
        %v1452 = vld [vmem:[#allocation8 + $0x298] sm:$0xff]
        %v1453 = vld [vmem:[#allocation8 + $0x2a0] sm:$0xff]
        %v1454 = vld [vmem:[#allocation8 + $0x2a8] sm:$0xff]
        %v1455 = vld [vmem:[#allocation8 + $0x2b0] sm:$0xff]
        %v1456 = vld [vmem:[#allocation8 + $0x2b8] sm:$0xff]
        %v1457 = vld [vmem:[#allocation8 + $0x2c0] sm:$0xff]
        %v1458 = vld [vmem:[#allocation8 + $0x2c8] sm:$0xff]
        %v1459 = vld [vmem:[#allocation8 + $0x2d0] sm:$0xff]
        %v1460 = vld [vmem:[#allocation8 + $0x2d8] sm:$0xff]
        %v1461 = vld [vmem:[#allocation8 + $0x2e0] sm:$0xff]
        %v1462 = vld [vmem:[#allocation8 + $0x2e8] sm:$0xff]
        %v1463 = vld [vmem:[#allocation8 + $0x2f0] sm:$0xff]
        %v1464 = vld [vmem:[#allocation8 + $0x2f8] sm:$0xff]
        %v1465 = vld [vmem:[#allocation10] sm:$0x3f]
        %v1467 = vperm.slane %v1465, 0
        %v1468 = vperm.slane %v1465, 1
        %v1469 = vperm.slane %v1465, 2
        %v1470 = vperm.slane %v1465, 3
        %v1471 = vperm.slane %v1465, 4
        %v1472 = vperm.slane %v1465, 5
        %v1575 = vunpack.c.l.b16 %v1369
        %v1576 = vunpack.c.h.b16 %v1369
        %v1577 = vunpack.c.l.b16 %v1370
        %v1578 = vunpack.c.h.b16 %v1370
        %v1579 = vunpack.c.l.b16 %v1371
        %v1580 = vunpack.c.h.b16 %v1371
        %v1581 = vunpack.c.l.b16 %v1372
        %v1582 = vunpack.c.h.b16 %v1372
        %v1583 = vunpack.c.l.b16 %v1373
        %v1584 = vunpack.c.h.b16 %v1373
        %v1585 = vunpack.c.l.b16 %v1374
        %v1586 = vunpack.c.h.b16 %v1374
        %v1587 = vunpack.c.l.b16 %v1375
        %v1588 = vunpack.c.h.b16 %v1375
        %v1589 = vunpack.c.l.b16 %v1376
        %v1590 = vunpack.c.h.b16 %v1376
        %v1591 = vunpack.c.l.b16 %v1377
        %v1592 = vunpack.c.h.b16 %v1377
        %v1593 = vunpack.c.l.b16 %v1378
        %v1594 = vunpack.c.h.b16 %v1378
        %v1595 = vunpack.c.l.b16 %v1379
        %v1596 = vunpack.c.h.b16 %v1379
        %v1597 = vunpack.c.l.b16 %v1380
        %v1598 = vunpack.c.h.b16 %v1380
        %v1599 = vunpack.c.l.b16 %v1381
        %v1600 = vunpack.c.h.b16 %v1381
        %v1601 = vunpack.c.l.b16 %v1382
        %v1602 = vunpack.c.h.b16 %v1382
        %v1603 = vunpack.c.l.b16 %v1383
        %v1604 = vunpack.c.h.b16 %v1383
        %v1605 = vunpack.c.l.b16 %v1384
        %v1606 = vunpack.c.h.b16 %v1384
        %v1607 = vunpack.c.l.b16 %v1385
        %v1608 = vunpack.c.h.b16 %v1385
        %v1609 = vunpack.c.l.b16 %v1386
        %v1610 = vunpack.c.h.b16 %v1386
        %v1611 = vunpack.c.l.b16 %v1387
        %v1612 = vunpack.c.h.b16 %v1387
        %v1613 = vunpack.c.l.b16 %v1388
        %v1614 = vunpack.c.h.b16 %v1388
        %v1615 = vunpack.c.l.b16 %v1389
        %v1616 = vunpack.c.h.b16 %v1389
        %v1617 = vunpack.c.l.b16 %v1390
        %v1618 = vunpack.c.h.b16 %v1390
        %v1619 = vunpack.c.l.b16 %v1391
        %v1620 = vunpack.c.h.b16 %v1391
        %v1621 = vunpack.c.l.b16 %v1392
        %v1622 = vunpack.c.h.b16 %v1392
        %v1623 = vunpack.c.l.b16 %v1393
        %v1624 = vunpack.c.h.b16 %v1393
        %v1625 = vunpack.c.l.b16 %v1394
        %v1626 = vunpack.c.h.b16 %v1394
        %v1627 = vunpack.c.l.b16 %v1395
        %v1628 = vunpack.c.h.b16 %v1395
        %v1629 = vunpack.c.l.b16 %v1396
        %v1630 = vunpack.c.h.b16 %v1396
        %v1631 = vunpack.c.l.b16 %v1397
        %v1632 = vunpack.c.h.b16 %v1397
        %v1633 = vunpack.c.l.b16 %v1398
        %v1634 = vunpack.c.h.b16 %v1398
        %v1635 = vunpack.c.l.b16 %v1399
        %v1636 = vunpack.c.h.b16 %v1399
        %v1637 = vunpack.c.l.b16 %v1400
        %v1638 = vunpack.c.h.b16 %v1400
        %v1639 = vunpack.c.l.b16 %v1401
        %v1640 = vunpack.c.h.b16 %v1401
        %v1641 = vunpack.c.l.b16 %v1402
        %v1642 = vunpack.c.h.b16 %v1402
        %v1643 = vunpack.c.l.b16 %v1403
        %v1644 = vunpack.c.h.b16 %v1403
        %v1645 = vunpack.c.l.b16 %v1404
        %v1646 = vunpack.c.h.b16 %v1404
        %v1647 = vunpack.c.l.b16 %v1405
        %v1648 = vunpack.c.h.b16 %v1405
        %v1649 = vunpack.c.l.b16 %v1406
        %v1650 = vunpack.c.h.b16 %v1406
        %v1651 = vunpack.c.l.b16 %v1407
        %v1652 = vunpack.c.h.b16 %v1407
        %v1653 = vunpack.c.l.b16 %v1408
        %v1654 = vunpack.c.h.b16 %v1408
        %v1655 = vunpack.c.l.b16 %v1409
        %v1656 = vunpack.c.h.b16 %v1409
        %v1657 = vunpack.c.l.b16 %v1410
        %v1658 = vunpack.c.h.b16 %v1410
        %v1659 = vunpack.c.l.b16 %v1411
        %v1660 = vunpack.c.h.b16 %v1411
        %v1661 = vunpack.c.l.b16 %v1412
        %v1662 = vunpack.c.h.b16 %v1412
        %v1663 = vunpack.c.l.b16 %v1413
        %v1664 = vunpack.c.h.b16 %v1413
        %v1665 = vunpack.c.l.b16 %v1414
        %v1666 = vunpack.c.h.b16 %v1414
        %v1667 = vunpack.c.l.b16 %v1415
        %v1668 = vunpack.c.h.b16 %v1415
        %v1669 = vunpack.c.l.b16 %v1416
        %v1670 = vunpack.c.h.b16 %v1416
        %v1671 = vunpack.c.l.b16 %v1417
        %v1672 = vunpack.c.h.b16 %v1417
        %v1673 = vunpack.c.l.b16 %v1418
        %v1674 = vunpack.c.h.b16 %v1418
        %v1675 = vunpack.c.l.b16 %v1419
        %v1676 = vunpack.c.h.b16 %v1419
        %v1677 = vunpack.c.l.b16 %v1420
        %v1678 = vunpack.c.h.b16 %v1420
        %v1679 = vunpack.c.l.b16 %v1421
        %v1680 = vunpack.c.h.b16 %v1421
        %v1681 = vunpack.c.l.b16 %v1422
        %v1682 = vunpack.c.h.b16 %v1422
        %v1683 = vunpack.c.l.b16 %v1423
        %v1684 = vunpack.c.h.b16 %v1423
        %v1685 = vunpack.c.l.b16 %v1424
        %v1686 = vunpack.c.h.b16 %v1424
        %v1687 = vunpack.c.l.b16 %v1425
        %v1688 = vunpack.c.h.b16 %v1425
        %v1689 = vunpack.c.l.b16 %v1426
        %v1690 = vunpack.c.h.b16 %v1426
        %v1691 = vunpack.c.l.b16 %v1427
        %v1692 = vunpack.c.h.b16 %v1427
        %v1693 = vunpack.c.l.b16 %v1428
        %v1694 = vunpack.c.h.b16 %v1428
        %v1695 = vunpack.c.l.b16 %v1429
        %v1696 = vunpack.c.h.b16 %v1429
        %v1697 = vunpack.c.l.b16 %v1430
        %v1698 = vunpack.c.h.b16 %v1430
        %v1699 = vunpack.c.l.b16 %v1431
        %v1700 = vunpack.c.h.b16 %v1431
        %v1701 = vunpack.c.l.b16 %v1432
        %v1702 = vunpack.c.h.b16 %v1432
        %v1703 = vunpack.c.l.b16 %v1433
        %v1704 = vunpack.c.h.b16 %v1433
        %v1705 = vunpack.c.l.b16 %v1434
        %v1706 = vunpack.c.h.b16 %v1434
        %v1707 = vunpack.c.l.b16 %v1435
        %v1708 = vunpack.c.h.b16 %v1435
        %v1709 = vunpack.c.l.b16 %v1436
        %v1710 = vunpack.c.h.b16 %v1436
        %v1711 = vunpack.c.l.b16 %v1437
        %v1712 = vunpack.c.h.b16 %v1437
        %v1713 = vunpack.c.l.b16 %v1438
        %v1714 = vunpack.c.h.b16 %v1438
        %v1715 = vunpack.c.l.b16 %v1439
        %v1716 = vunpack.c.h.b16 %v1439
        %v1717 = vunpack.c.l.b16 %v1440
        %v1718 = vunpack.c.h.b16 %v1440
        %v1719 = vunpack.c.l.b16 %v1441
        %v1720 = vunpack.c.h.b16 %v1441
        %v1721 = vunpack.c.l.b16 %v1442
        %v1722 = vunpack.c.h.b16 %v1442
        %v1723 = vunpack.c.l.b16 %v1443
        %v1724 = vunpack.c.h.b16 %v1443
        %v1725 = vunpack.c.l.b16 %v1444
        %v1726 = vunpack.c.h.b16 %v1444
        %v1727 = vunpack.c.l.b16 %v1445
        %v1728 = vunpack.c.h.b16 %v1445
        %v1729 = vunpack.c.l.b16 %v1446
        %v1730 = vunpack.c.h.b16 %v1446
        %v1731 = vunpack.c.l.b16 %v1447
        %v1732 = vunpack.c.h.b16 %v1447
        %v1733 = vunpack.c.l.b16 %v1448
        %v1734 = vunpack.c.h.b16 %v1448
        %v1735 = vunpack.c.l.b16 %v1449
        %v1736 = vunpack.c.h.b16 %v1449
        %v1737 = vunpack.c.l.b16 %v1450
        %v1738 = vunpack.c.h.b16 %v1450
        %v1739 = vunpack.c.l.b16 %v1451
        %v1740 = vunpack.c.h.b16 %v1451
        %v1741 = vunpack.c.l.b16 %v1452
        %v1742 = vunpack.c.h.b16 %v1452
        %v1743 = vunpack.c.l.b16 %v1453
        %v1744 = vunpack.c.h.b16 %v1453
        %v1745 = vunpack.c.l.b16 %v1454
        %v1746 = vunpack.c.h.b16 %v1454
        %v1747 = vunpack.c.l.b16 %v1455
        %v1748 = vunpack.c.h.b16 %v1455
        %v1749 = vunpack.c.l.b16 %v1456
        %v1750 = vunpack.c.h.b16 %v1456
        %v1751 = vunpack.c.l.b16 %v1457
        %v1752 = vunpack.c.h.b16 %v1457
        %v1753 = vunpack.c.l.b16 %v1458
        %v1754 = vunpack.c.h.b16 %v1458
        %v1755 = vunpack.c.l.b16 %v1459
        %v1756 = vunpack.c.h.b16 %v1459
        %v1757 = vunpack.c.l.b16 %v1460
        %v1758 = vunpack.c.h.b16 %v1460
        %v1759 = vunpack.c.l.b16 %v1461
        %v1760 = vunpack.c.h.b16 %v1461
        %v1761 = vunpack.c.l.b16 %v1462
        %v1762 = vunpack.c.h.b16 %v1462
        %v1763 = vunpack.c.l.b16 %v1463
        %v1764 = vunpack.c.h.b16 %v1463
        %v1765 = vunpack.c.l.b16 %v1464
        %v1766 = vunpack.c.h.b16 %v1464
        %v1767 = vpack.c.b16 %v1581, %v1575
        %v1768 = vpack.c.b16 %v1582, %v1576
        %v1769 = vpack.c.b16 %v1583, %v1577
        %v1770 = vpack.c.b16 %v1584, %v1578
        %v1771 = vpack.c.b16 %v1585, %v1579
        %v1772 = vpack.c.b16 %v1586, %v1580
        %v1773 = vpack.c.b16 %v1593, %v1587
        %v1774 = vpack.c.b16 %v1594, %v1588
        %v1775 = vpack.c.b16 %v1595, %v1589
        %v1776 = vpack.c.b16 %v1596, %v1590
        %v1777 = vpack.c.b16 %v1597, %v1591
        %v1778 = vpack.c.b16 %v1598, %v1592
        %v1779 = vpack.c.b16 %v1605, %v1599
        %v1780 = vpack.c.b16 %v1606, %v1600
        %v1781 = vpack.c.b16 %v1607, %v1601
        %v1782 = vpack.c.b16 %v1608, %v1602
        %v1783 = vpack.c.b16 %v1609, %v1603
        %v1784 = vpack.c.b16 %v1610, %v1604
        %v1785 = vpack.c.b16 %v1617, %v1611
        %v1786 = vpack.c.b16 %v1618, %v1612
        %v1787 = vpack.c.b16 %v1619, %v1613
        %v1788 = vpack.c.b16 %v1620, %v1614
        %v1789 = vpack.c.b16 %v1621, %v1615
        %v1790 = vpack.c.b16 %v1622, %v1616
        %v1791 = vpack.c.b16 %v1629, %v1623
        %v1792 = vpack.c.b16 %v1630, %v1624
        %v1793 = vpack.c.b16 %v1631, %v1625
        %v1794 = vpack.c.b16 %v1632, %v1626
        %v1795 = vpack.c.b16 %v1633, %v1627
        %v1796 = vpack.c.b16 %v1634, %v1628
        %v1797 = vpack.c.b16 %v1641, %v1635
        %v1798 = vpack.c.b16 %v1642, %v1636
        %v1799 = vpack.c.b16 %v1643, %v1637
        %v1800 = vpack.c.b16 %v1644, %v1638
        %v1801 = vpack.c.b16 %v1645, %v1639
        %v1802 = vpack.c.b16 %v1646, %v1640
        %v1803 = vpack.c.b16 %v1653, %v1647
        %v1804 = vpack.c.b16 %v1654, %v1648
        %v1805 = vpack.c.b16 %v1655, %v1649
        %v1806 = vpack.c.b16 %v1656, %v1650
        %v1807 = vpack.c.b16 %v1657, %v1651
        %v1808 = vpack.c.b16 %v1658, %v1652
        %v1809 = vpack.c.b16 %v1665, %v1659
        %v1810 = vpack.c.b16 %v1666, %v1660
        %v1811 = vpack.c.b16 %v1667, %v1661
        %v1812 = vpack.c.b16 %v1668, %v1662
        %v1813 = vpack.c.b16 %v1669, %v1663
        %v1814 = vpack.c.b16 %v1670, %v1664
        %v1815 = vpack.c.b16 %v1677, %v1671
        %v1816 = vpack.c.b16 %v1678, %v1672
        %v1817 = vpack.c.b16 %v1679, %v1673
        %v1818 = vpack.c.b16 %v1680, %v1674
        %v1819 = vpack.c.b16 %v1681, %v1675
        %v1820 = vpack.c.b16 %v1682, %v1676
        %v1821 = vpack.c.b16 %v1689, %v1683
        %v1822 = vpack.c.b16 %v1690, %v1684
        %v1823 = vpack.c.b16 %v1691, %v1685
        %v1824 = vpack.c.b16 %v1692, %v1686
        %v1825 = vpack.c.b16 %v1693, %v1687
        %v1826 = vpack.c.b16 %v1694, %v1688
        %v1827 = vpack.c.b16 %v1701, %v1695
        %v1828 = vpack.c.b16 %v1702, %v1696
        %v1829 = vpack.c.b16 %v1703, %v1697
        %v1830 = vpack.c.b16 %v1704, %v1698
        %v1831 = vpack.c.b16 %v1705, %v1699
        %v1832 = vpack.c.b16 %v1706, %v1700
        %v1833 = vpack.c.b16 %v1713, %v1707
        %v1834 = vpack.c.b16 %v1714, %v1708
        %v1835 = vpack.c.b16 %v1715, %v1709
        %v1836 = vpack.c.b16 %v1716, %v1710
        %v1837 = vpack.c.b16 %v1717, %v1711
        %v1838 = vpack.c.b16 %v1718, %v1712
        %v1839 = vpack.c.b16 %v1725, %v1719
        %v1840 = vpack.c.b16 %v1726, %v1720
        %v1841 = vpack.c.b16 %v1727, %v1721
        %v1842 = vpack.c.b16 %v1728, %v1722
        %v1843 = vpack.c.b16 %v1729, %v1723
        %v1844 = vpack.c.b16 %v1730, %v1724
        %v1845 = vpack.c.b16 %v1737, %v1731
        %v1846 = vpack.c.b16 %v1738, %v1732
        %v1847 = vpack.c.b16 %v1739, %v1733
        %v1848 = vpack.c.b16 %v1740, %v1734
        %v1849 = vpack.c.b16 %v1741, %v1735
        %v1850 = vpack.c.b16 %v1742, %v1736
        %v1851 = vpack.c.b16 %v1749, %v1743
        %v1852 = vpack.c.b16 %v1750, %v1744
        %v1853 = vpack.c.b16 %v1751, %v1745
        %v1854 = vpack.c.b16 %v1752, %v1746
        %v1855 = vpack.c.b16 %v1753, %v1747
        %v1856 = vpack.c.b16 %v1754, %v1748
        %v1857 = vpack.c.b16 %v1761, %v1755
        %v1858 = vpack.c.b16 %v1762, %v1756
        %v1859 = vpack.c.b16 %v1763, %v1757
        %v1860 = vpack.c.b16 %v1764, %v1758
        %v1861 = vpack.c.b16 %v1765, %v1759
        %v1862 = vpack.c.b16 %v1766, %v1760
        %1959 = vmatpush.bf16.msra.mxu0 %v1809
        %1960 = vmatpush.bf16.msra.mxu0 %v1803
        %1961 = vmatpush.bf16.msra.mxu0 %v1797
        %1962 = vmatpush.bf16.msra.mxu0 %v1791
        %1963 = vmatpush.bf16.msra.mxu0 %v1785
        %1964 = vmatpush.bf16.msra.mxu0 %v1779
        %1965 = vmatpush.bf16.msra.mxu0 %v1773
        %1966 = vmatpush.bf16.msra.mxu0 %v1767
        %1967 = vmatmul.bf16.gmra.mxu0 %v1337
        %v1968 = vpop.f32.mrf.mxu0
        %v1969 = vadd.f32 %v1467, %v1968
        %v1970 = vpop.f32.mrf.mxu0
        %v1971 = vadd.f32 %v1467, %v1970
        %1972 = vmatmul.bf16.gmra.mxu0 %v1339
        %v1973 = vpop.f32.mrf.mxu0
        %v1974 = vadd.f32 %v1467, %v1973
        %v1975 = vpop.f32.mrf.mxu0
        %v1976 = vadd.f32 %v1467, %v1975
        %1977 = vmatmul.bf16.gmra.mxu0 %v1341
        %v1978 = vpop.f32.mrf.mxu0
        %v1979 = vadd.f32 %v1467, %v1978
        %v1980 = vpop.f32.mrf.mxu0
        %v1981 = vadd.f32 %v1467, %v1980
        %1982 = vmatmul.bf16.gmra.mxu0 %v1343
        %v1983 = vpop.f32.mrf.mxu0
        %v1984 = vadd.f32 %v1467, %v1983
        %v1985 = vpop.f32.mrf.mxu0
        %v1986 = vadd.f32 %v1467, %v1985
        %1987 = vmatmul.bf16.gmra.mxu0 %v1345
        %v1988 = vpop.f32.mrf.mxu0
        %v1989 = vadd.f32 %v1467, %v1988
        %v1990 = vpop.f32.mrf.mxu0
        %v1991 = vadd.f32 %v1467, %v1990
        %1992 = vmatmul.bf16.gmra.mxu0 %v1347
        %v1993 = vpop.f32.mrf.mxu0
        %v1994 = vadd.f32 %v1467, %v1993
        %v1995 = vpop.f32.mrf.mxu0
        %v1996 = vadd.f32 %v1467, %v1995
        %1997 = vmatmul.bf16.gmra.mxu0 %v1349
        %v1998 = vpop.f32.mrf.mxu0
        %v1999 = vadd.f32 %v1467, %v1998
        %v2000 = vpop.f32.mrf.mxu0
        %v2001 = vadd.f32 %v1467, %v2000
        %2002 = vmatmul.bf16.gmra.mxu0 %v1351
        %v2003 = vpop.f32.mrf.mxu0
        %v2004 = vadd.f32 %v1467, %v2003
        %v2005 = vpop.f32.mrf.mxu0
        %v2006 = vadd.f32 %v1467, %v2005
        %2007 = vmatmul.bf16.gmra.mxu0 %v1353
        %v2008 = vpop.f32.mrf.mxu0
        %v2009 = vadd.f32 %v1467, %v2008
        %v2010 = vpop.f32.mrf.mxu0
        %v2011 = vadd.f32 %v1467, %v2010
        %2012 = vmatmul.bf16.gmra.mxu0 %v1355
        %v2013 = vpop.f32.mrf.mxu0
        %v2014 = vadd.f32 %v1467, %v2013
        %v2015 = vpop.f32.mrf.mxu0
        %v2016 = vadd.f32 %v1467, %v2015
        %2017 = vmatmul.bf16.gmra.mxu0 %v1357
        %v2018 = vpop.f32.mrf.mxu0
        %v2019 = vadd.f32 %v1467, %v2018
        %v2020 = vpop.f32.mrf.mxu0
        %v2021 = vadd.f32 %v1467, %v2020
        %2022 = vmatmul.bf16.gmra.mxu0 %v1359
        %v2023 = vpop.f32.mrf.mxu0
        %v2024 = vadd.f32 %v1467, %v2023
        %v2025 = vpop.f32.mrf.mxu0
        %v2026 = vadd.f32 %v1467, %v2025
        %2027 = vmatmul.bf16.gmra.mxu0 %v1361
        %v2028 = vpop.f32.mrf.mxu0
        %v2029 = vadd.f32 %v1467, %v2028
        %v2030 = vpop.f32.mrf.mxu0
        %v2031 = vadd.f32 %v1467, %v2030
        %2032 = vmatmul.bf16.gmra.mxu0 %v1363
        %v2033 = vpop.f32.mrf.mxu0
        %v2034 = vadd.f32 %v1467, %v2033
        %v2035 = vpop.f32.mrf.mxu0
        %v2036 = vadd.f32 %v1467, %v2035
        %2037 = vmatmul.bf16.gmra.mxu0 %v1365
        %v2038 = vpop.f32.mrf.mxu0
        %v2039 = vadd.f32 %v1467, %v2038
        %v2040 = vpop.f32.mrf.mxu0
        %v2041 = vadd.f32 %v1467, %v2040
        %2042 = vmatmul.bf16.gmra.mxu0 %v1367
        %v2043 = vpop.f32.mrf.mxu0
        %v2044 = vadd.f32 %v1467, %v2043
        %v2045 = vpop.f32.mrf.mxu0
        %v2046 = vadd.f32 %v1467, %v2045
        %2047 = vdwg.mxu0
        %2048 = vmatpush.bf16.msra.mxu0 %v1857
        %2049 = vmatpush.bf16.msra.mxu0 %v1851
        %2050 = vmatpush.bf16.msra.mxu0 %v1845
        %2051 = vmatpush.bf16.msra.mxu0 %v1839
        %2052 = vmatpush.bf16.msra.mxu0 %v1833
        %2053 = vmatpush.bf16.msra.mxu0 %v1827
        %2054 = vmatpush.bf16.msra.mxu0 %v1821
        %2055 = vmatpush.bf16.msra.mxu0 %v1815
        %2056 = vmatmul.bf16.gmra.mxu0 %v1338
        %v2057 = vpop.f32.mrf.mxu0
        %v2058 = vadd.f32 %v1969, %v2057
        %v2059 = vpop.f32.mrf.mxu0
        %v2060 = vadd.f32 %v1971, %v2059
        %2061 = vmatmul.bf16.gmra.mxu0 %v1340
        %v2062 = vpop.f32.mrf.mxu0
        %v2063 = vadd.f32 %v1974, %v2062
        %v2064 = vpop.f32.mrf.mxu0
        %v2065 = vadd.f32 %v1976, %v2064
        %2066 = vmatmul.bf16.gmra.mxu0 %v1342
        %v2067 = vpop.f32.mrf.mxu0
        %v2068 = vadd.f32 %v1979, %v2067
        %v2069 = vpop.f32.mrf.mxu0
        %v2070 = vadd.f32 %v1981, %v2069
        %2071 = vmatmul.bf16.gmra.mxu0 %v1344
        %v2072 = vpop.f32.mrf.mxu0
        %v2073 = vadd.f32 %v1984, %v2072
        %v2074 = vpop.f32.mrf.mxu0
        %v2075 = vadd.f32 %v1986, %v2074
        %2076 = vmatmul.bf16.gmra.mxu0 %v1346
        %v2077 = vpop.f32.mrf.mxu0
        %v2078 = vadd.f32 %v1989, %v2077
        %v2079 = vpop.f32.mrf.mxu0
        %v2080 = vadd.f32 %v1991, %v2079
        %2081 = vmatmul.bf16.gmra.mxu0 %v1348
        %v2082 = vpop.f32.mrf.mxu0
        %v2083 = vadd.f32 %v1994, %v2082
        %v2084 = vpop.f32.mrf.mxu0
        %v2085 = vadd.f32 %v1996, %v2084
        %2086 = vmatmul.bf16.gmra.mxu0 %v1350
        %v2087 = vpop.f32.mrf.mxu0
        %v2088 = vadd.f32 %v1999, %v2087
        %v2089 = vpop.f32.mrf.mxu0
        %v2090 = vadd.f32 %v2001, %v2089
        %2091 = vmatmul.bf16.gmra.mxu0 %v1352
        %v2092 = vpop.f32.mrf.mxu0
        %v2093 = vadd.f32 %v2004, %v2092
        %v2094 = vpop.f32.mrf.mxu0
        %v2095 = vadd.f32 %v2006, %v2094
        %2096 = vmatmul.bf16.gmra.mxu0 %v1354
        %v2097 = vpop.f32.mrf.mxu0
        %v2098 = vadd.f32 %v2009, %v2097
        %v2099 = vpop.f32.mrf.mxu0
        %v2100 = vadd.f32 %v2011, %v2099
        %2101 = vmatmul.bf16.gmra.mxu0 %v1356
        %v2102 = vpop.f32.mrf.mxu0
        %v2103 = vadd.f32 %v2014, %v2102
        %v2104 = vpop.f32.mrf.mxu0
        %v2105 = vadd.f32 %v2016, %v2104
        %2106 = vmatmul.bf16.gmra.mxu0 %v1358
        %v2107 = vpop.f32.mrf.mxu0
        %v2108 = vadd.f32 %v2019, %v2107
        %v2109 = vpop.f32.mrf.mxu0
        %v2110 = vadd.f32 %v2021, %v2109
        %2111 = vmatmul.bf16.gmra.mxu0 %v1360
        %v2112 = vpop.f32.mrf.mxu0
        %v2113 = vadd.f32 %v2024, %v2112
        %v2114 = vpop.f32.mrf.mxu0
        %v2115 = vadd.f32 %v2026, %v2114
        %2116 = vmatmul.bf16.gmra.mxu0 %v1362
        %v2117 = vpop.f32.mrf.mxu0
        %v2118 = vadd.f32 %v2029, %v2117
        %v2119 = vpop.f32.mrf.mxu0
        %v2120 = vadd.f32 %v2031, %v2119
        %2121 = vmatmul.bf16.gmra.mxu0 %v1364
        %v2122 = vpop.f32.mrf.mxu0
        %v2123 = vadd.f32 %v2034, %v2122
        %v2124 = vpop.f32.mrf.mxu0
        %v2125 = vadd.f32 %v2036, %v2124
        %2126 = vmatmul.bf16.gmra.mxu0 %v1366
        %v2127 = vpop.f32.mrf.mxu0
        %v2128 = vadd.f32 %v2039, %v2127
        %v2129 = vpop.f32.mrf.mxu0
        %v2130 = vadd.f32 %v2041, %v2129
        %2131 = vmatmul.bf16.gmra.mxu0 %v1368
        %v2132 = vpop.f32.mrf.mxu0
        %v2133 = vadd.f32 %v2044, %v2132
        %v2134 = vpop.f32.mrf.mxu0
        %v2135 = vadd.f32 %v2046, %v2134
        %2136 = vdwg.mxu0
        %2137 = vmatpush.bf16.msra.mxu0 %v1810
        %2138 = vmatpush.bf16.msra.mxu0 %v1804
        %2139 = vmatpush.bf16.msra.mxu0 %v1798
        %2140 = vmatpush.bf16.msra.mxu0 %v1792
        %2141 = vmatpush.bf16.msra.mxu0 %v1786
        %2142 = vmatpush.bf16.msra.mxu0 %v1780
        %2143 = vmatpush.bf16.msra.mxu0 %v1774
        %2144 = vmatpush.bf16.msra.mxu0 %v1768
        %2145 = vmatmul.bf16.gmra.mxu0 %v1337
        %v2146 = vpop.f32.mrf.mxu0
        %v2147 = vadd.f32 %v1468, %v2146
        %v2148 = vpop.f32.mrf.mxu0
        %v2149 = vadd.f32 %v1468, %v2148
        %2150 = vmatmul.bf16.gmra.mxu0 %v1339
        %v2151 = vpop.f32.mrf.mxu0
        %v2152 = vadd.f32 %v1468, %v2151
        %v2153 = vpop.f32.mrf.mxu0
        %v2154 = vadd.f32 %v1468, %v2153
        %2155 = vmatmul.bf16.gmra.mxu0 %v1341
        %v2156 = vpop.f32.mrf.mxu0
        %v2157 = vadd.f32 %v1468, %v2156
        %v2158 = vpop.f32.mrf.mxu0
        %v2159 = vadd.f32 %v1468, %v2158
        %2160 = vmatmul.bf16.gmra.mxu0 %v1343
        %v2161 = vpop.f32.mrf.mxu0
        %v2162 = vadd.f32 %v1468, %v2161
        %v2163 = vpop.f32.mrf.mxu0
        %v2164 = vadd.f32 %v1468, %v2163
        %2165 = vmatmul.bf16.gmra.mxu0 %v1345
        %v2166 = vpop.f32.mrf.mxu0
        %v2167 = vadd.f32 %v1468, %v2166
        %v2168 = vpop.f32.mrf.mxu0
        %v2169 = vadd.f32 %v1468, %v2168
        %2170 = vmatmul.bf16.gmra.mxu0 %v1347
        %v2171 = vpop.f32.mrf.mxu0
        %v2172 = vadd.f32 %v1468, %v2171
        %v2173 = vpop.f32.mrf.mxu0
        %v2174 = vadd.f32 %v1468, %v2173
        %2175 = vmatmul.bf16.gmra.mxu0 %v1349
        %v2176 = vpop.f32.mrf.mxu0
        %v2177 = vadd.f32 %v1468, %v2176
        %v2178 = vpop.f32.mrf.mxu0
        %v2179 = vadd.f32 %v1468, %v2178
        %2180 = vmatmul.bf16.gmra.mxu0 %v1351
        %v2181 = vpop.f32.mrf.mxu0
        %v2182 = vadd.f32 %v1468, %v2181
        %v2183 = vpop.f32.mrf.mxu0
        %v2184 = vadd.f32 %v1468, %v2183
        %2185 = vmatmul.bf16.gmra.mxu0 %v1353
        %v2186 = vpop.f32.mrf.mxu0
        %v2187 = vadd.f32 %v1468, %v2186
        %v2188 = vpop.f32.mrf.mxu0
        %v2189 = vadd.f32 %v1468, %v2188
        %2190 = vmatmul.bf16.gmra.mxu0 %v1355
        %v2191 = vpop.f32.mrf.mxu0
        %v2192 = vadd.f32 %v1468, %v2191
        %v2193 = vpop.f32.mrf.mxu0
        %v2194 = vadd.f32 %v1468, %v2193
        %2195 = vmatmul.bf16.gmra.mxu0 %v1357
        %v2196 = vpop.f32.mrf.mxu0
        %v2197 = vadd.f32 %v1468, %v2196
        %v2198 = vpop.f32.mrf.mxu0
        %v2199 = vadd.f32 %v1468, %v2198
        %2200 = vmatmul.bf16.gmra.mxu0 %v1359
        %v2201 = vpop.f32.mrf.mxu0
        %v2202 = vadd.f32 %v1468, %v2201
        %v2203 = vpop.f32.mrf.mxu0
        %v2204 = vadd.f32 %v1468, %v2203
        %2205 = vmatmul.bf16.gmra.mxu0 %v1361
        %v2206 = vpop.f32.mrf.mxu0
        %v2207 = vadd.f32 %v1468, %v2206
        %v2208 = vpop.f32.mrf.mxu0
        %v2209 = vadd.f32 %v1468, %v2208
        %2210 = vmatmul.bf16.gmra.mxu0 %v1363
        %v2211 = vpop.f32.mrf.mxu0
        %v2212 = vadd.f32 %v1468, %v2211
        %v2213 = vpop.f32.mrf.mxu0
        %v2214 = vadd.f32 %v1468, %v2213
        %2215 = vmatmul.bf16.gmra.mxu0 %v1365
        %v2216 = vpop.f32.mrf.mxu0
        %v2217 = vadd.f32 %v1468, %v2216
        %v2218 = vpop.f32.mrf.mxu0
        %v2219 = vadd.f32 %v1468, %v2218
        %2220 = vmatmul.bf16.gmra.mxu0 %v1367
        %v2221 = vpop.f32.mrf.mxu0
        %v2222 = vadd.f32 %v1468, %v2221
        %v2223 = vpop.f32.mrf.mxu0
        %v2224 = vadd.f32 %v1468, %v2223
        %2225 = vdwg.mxu0
        %2226 = vmatpush.bf16.msra.mxu0 %v1858
        %2227 = vmatpush.bf16.msra.mxu0 %v1852
        %2228 = vmatpush.bf16.msra.mxu0 %v1846
        %2229 = vmatpush.bf16.msra.mxu0 %v1840
        %2230 = vmatpush.bf16.msra.mxu0 %v1834
        %2231 = vmatpush.bf16.msra.mxu0 %v1828
        %2232 = vmatpush.bf16.msra.mxu0 %v1822
        %2233 = vmatpush.bf16.msra.mxu0 %v1816
        %2234 = vmatmul.bf16.gmra.mxu0 %v1338
        %v2235 = vpop.f32.mrf.mxu0
        %v2236 = vadd.f32 %v2147, %v2235
        %v2237 = vpop.f32.mrf.mxu0
        %v2238 = vadd.f32 %v2149, %v2237
        %2239 = vmatmul.bf16.gmra.mxu0 %v1340
        %v2240 = vpop.f32.mrf.mxu0
        %v2241 = vadd.f32 %v2152, %v2240
        %v2242 = vpop.f32.mrf.mxu0
        %v2243 = vadd.f32 %v2154, %v2242
        %2244 = vmatmul.bf16.gmra.mxu0 %v1342
        %v2245 = vpop.f32.mrf.mxu0
        %v2246 = vadd.f32 %v2157, %v2245
        %v2247 = vpop.f32.mrf.mxu0
        %v2248 = vadd.f32 %v2159, %v2247
        %2249 = vmatmul.bf16.gmra.mxu0 %v1344
        %v2250 = vpop.f32.mrf.mxu0
        %v2251 = vadd.f32 %v2162, %v2250
        %v2252 = vpop.f32.mrf.mxu0
        %v2253 = vadd.f32 %v2164, %v2252
        %2254 = vmatmul.bf16.gmra.mxu0 %v1346
        %v2255 = vpop.f32.mrf.mxu0
        %v2256 = vadd.f32 %v2167, %v2255
        %v2257 = vpop.f32.mrf.mxu0
        %v2258 = vadd.f32 %v2169, %v2257
        %2259 = vmatmul.bf16.gmra.mxu0 %v1348
        %v2260 = vpop.f32.mrf.mxu0
        %v2261 = vadd.f32 %v2172, %v2260
        %v2262 = vpop.f32.mrf.mxu0
        %v2263 = vadd.f32 %v2174, %v2262
        %2264 = vmatmul.bf16.gmra.mxu0 %v1350
        %v2265 = vpop.f32.mrf.mxu0
        %v2266 = vadd.f32 %v2177, %v2265
        %v2267 = vpop.f32.mrf.mxu0
        %v2268 = vadd.f32 %v2179, %v2267
        %2269 = vmatmul.bf16.gmra.mxu0 %v1352
        %v2270 = vpop.f32.mrf.mxu0
        %v2271 = vadd.f32 %v2182, %v2270
        %v2272 = vpop.f32.mrf.mxu0
        %v2273 = vadd.f32 %v2184, %v2272
        %2274 = vmatmul.bf16.gmra.mxu0 %v1354
        %v2275 = vpop.f32.mrf.mxu0
        %v2276 = vadd.f32 %v2187, %v2275
        %v2277 = vpop.f32.mrf.mxu0
        %v2278 = vadd.f32 %v2189, %v2277
        %2279 = vmatmul.bf16.gmra.mxu0 %v1356
        %v2280 = vpop.f32.mrf.mxu0
        %v2281 = vadd.f32 %v2192, %v2280
        %v2282 = vpop.f32.mrf.mxu0
        %v2283 = vadd.f32 %v2194, %v2282
        %2284 = vmatmul.bf16.gmra.mxu0 %v1358
        %v2285 = vpop.f32.mrf.mxu0
        %v2286 = vadd.f32 %v2197, %v2285
        %v2287 = vpop.f32.mrf.mxu0
        %v2288 = vadd.f32 %v2199, %v2287
        %2289 = vmatmul.bf16.gmra.mxu0 %v1360
        %v2290 = vpop.f32.mrf.mxu0
        %v2291 = vadd.f32 %v2202, %v2290
        %v2292 = vpop.f32.mrf.mxu0
        %v2293 = vadd.f32 %v2204, %v2292
        %2294 = vmatmul.bf16.gmra.mxu0 %v1362
        %v2295 = vpop.f32.mrf.mxu0
        %v2296 = vadd.f32 %v2207, %v2295
        %v2297 = vpop.f32.mrf.mxu0
        %v2298 = vadd.f32 %v2209, %v2297
        %2299 = vmatmul.bf16.gmra.mxu0 %v1364
        %v2300 = vpop.f32.mrf.mxu0
        %v2301 = vadd.f32 %v2212, %v2300
        %v2302 = vpop.f32.mrf.mxu0
        %v2303 = vadd.f32 %v2214, %v2302
        %2304 = vmatmul.bf16.gmra.mxu0 %v1366
        %v2305 = vpop.f32.mrf.mxu0
        %v2306 = vadd.f32 %v2217, %v2305
        %v2307 = vpop.f32.mrf.mxu0
        %v2308 = vadd.f32 %v2219, %v2307
        %2309 = vmatmul.bf16.gmra.mxu0 %v1368
        %v2310 = vpop.f32.mrf.mxu0
        %v2311 = vadd.f32 %v2222, %v2310
        %v2312 = vpop.f32.mrf.mxu0
        %v2313 = vadd.f32 %v2224, %v2312
        %2314 = vdwg.mxu0
        %2315 = vmatpush.bf16.msra.mxu0 %v1811
        %2316 = vmatpush.bf16.msra.mxu0 %v1805
        %2317 = vmatpush.bf16.msra.mxu0 %v1799
        %2318 = vmatpush.bf16.msra.mxu0 %v1793
        %2319 = vmatpush.bf16.msra.mxu0 %v1787
        %2320 = vmatpush.bf16.msra.mxu0 %v1781
        %2321 = vmatpush.bf16.msra.mxu0 %v1775
        %2322 = vmatpush.bf16.msra.mxu0 %v1769
        %2323 = vmatmul.bf16.gmra.mxu0 %v1337
        %v2324 = vpop.f32.mrf.mxu0
        %v2325 = vadd.f32 %v1469, %v2324
        %v2326 = vpop.f32.mrf.mxu0
        %v2327 = vadd.f32 %v1469, %v2326
        %2328 = vmatmul.bf16.gmra.mxu0 %v1339
        %v2329 = vpop.f32.mrf.mxu0
        %v2330 = vadd.f32 %v1469, %v2329
        %v2331 = vpop.f32.mrf.mxu0
        %v2332 = vadd.f32 %v1469, %v2331
        %2333 = vmatmul.bf16.gmra.mxu0 %v1341
        %v2334 = vpop.f32.mrf.mxu0
        %v2335 = vadd.f32 %v1469, %v2334
        %v2336 = vpop.f32.mrf.mxu0
        %v2337 = vadd.f32 %v1469, %v2336
        %2338 = vmatmul.bf16.gmra.mxu0 %v1343
        %v2339 = vpop.f32.mrf.mxu0
        %v2340 = vadd.f32 %v1469, %v2339
        %v2341 = vpop.f32.mrf.mxu0
        %v2342 = vadd.f32 %v1469, %v2341
        %2343 = vmatmul.bf16.gmra.mxu0 %v1345
        %v2344 = vpop.f32.mrf.mxu0
        %v2345 = vadd.f32 %v1469, %v2344
        %v2346 = vpop.f32.mrf.mxu0
        %v2347 = vadd.f32 %v1469, %v2346
        %2348 = vmatmul.bf16.gmra.mxu0 %v1347
        %v2349 = vpop.f32.mrf.mxu0
        %v2350 = vadd.f32 %v1469, %v2349
        %v2351 = vpop.f32.mrf.mxu0
        %v2352 = vadd.f32 %v1469, %v2351
        %2353 = vmatmul.bf16.gmra.mxu0 %v1349
        %v2354 = vpop.f32.mrf.mxu0
        %v2355 = vadd.f32 %v1469, %v2354
        %v2356 = vpop.f32.mrf.mxu0
        %v2357 = vadd.f32 %v1469, %v2356
        %2358 = vmatmul.bf16.gmra.mxu0 %v1351
        %v2359 = vpop.f32.mrf.mxu0
        %v2360 = vadd.f32 %v1469, %v2359
        %v2361 = vpop.f32.mrf.mxu0
        %v2362 = vadd.f32 %v1469, %v2361
        %2363 = vmatmul.bf16.gmra.mxu0 %v1353
        %v2364 = vpop.f32.mrf.mxu0
        %v2365 = vadd.f32 %v1469, %v2364
        %v2366 = vpop.f32.mrf.mxu0
        %v2367 = vadd.f32 %v1469, %v2366
        %2368 = vmatmul.bf16.gmra.mxu0 %v1355
        %v2369 = vpop.f32.mrf.mxu0
        %v2370 = vadd.f32 %v1469, %v2369
        %v2371 = vpop.f32.mrf.mxu0
        %v2372 = vadd.f32 %v1469, %v2371
        %2373 = vmatmul.bf16.gmra.mxu0 %v1357
        %v2374 = vpop.f32.mrf.mxu0
        %v2375 = vadd.f32 %v1469, %v2374
        %v2376 = vpop.f32.mrf.mxu0
        %v2377 = vadd.f32 %v1469, %v2376
        %2378 = vmatmul.bf16.gmra.mxu0 %v1359
        %v2379 = vpop.f32.mrf.mxu0
        %v2380 = vadd.f32 %v1469, %v2379
        %v2381 = vpop.f32.mrf.mxu0
        %v2382 = vadd.f32 %v1469, %v2381
        %2383 = vmatmul.bf16.gmra.mxu0 %v1361
        %v2384 = vpop.f32.mrf.mxu0
        %v2385 = vadd.f32 %v1469, %v2384
        %v2386 = vpop.f32.mrf.mxu0
        %v2387 = vadd.f32 %v1469, %v2386
        %2388 = vmatmul.bf16.gmra.mxu0 %v1363
        %v2389 = vpop.f32.mrf.mxu0
        %v2390 = vadd.f32 %v1469, %v2389
        %v2391 = vpop.f32.mrf.mxu0
        %v2392 = vadd.f32 %v1469, %v2391
        %2393 = vmatmul.bf16.gmra.mxu0 %v1365
        %v2394 = vpop.f32.mrf.mxu0
        %v2395 = vadd.f32 %v1469, %v2394
        %v2396 = vpop.f32.mrf.mxu0
        %v2397 = vadd.f32 %v1469, %v2396
        %2398 = vmatmul.bf16.gmra.mxu0 %v1367
        %v2399 = vpop.f32.mrf.mxu0
        %v2400 = vadd.f32 %v1469, %v2399
        %v2401 = vpop.f32.mrf.mxu0
        %v2402 = vadd.f32 %v1469, %v2401
        %2403 = vdwg.mxu0
        %2404 = vmatpush.bf16.msra.mxu0 %v1859
        %2405 = vmatpush.bf16.msra.mxu0 %v1853
        %2406 = vmatpush.bf16.msra.mxu0 %v1847
        %2407 = vmatpush.bf16.msra.mxu0 %v1841
        %2408 = vmatpush.bf16.msra.mxu0 %v1835
        %2409 = vmatpush.bf16.msra.mxu0 %v1829
        %2410 = vmatpush.bf16.msra.mxu0 %v1823
        %2411 = vmatpush.bf16.msra.mxu0 %v1817
        %2412 = vmatmul.bf16.gmra.mxu0 %v1338
        %v2413 = vpop.f32.mrf.mxu0
        %v2414 = vadd.f32 %v2325, %v2413
        %v2415 = vpop.f32.mrf.mxu0
        %v2416 = vadd.f32 %v2327, %v2415
        %2417 = vmatmul.bf16.gmra.mxu0 %v1340
        %v2418 = vpop.f32.mrf.mxu0
        %v2419 = vadd.f32 %v2330, %v2418
        %v2420 = vpop.f32.mrf.mxu0
        %v2421 = vadd.f32 %v2332, %v2420
        %2422 = vmatmul.bf16.gmra.mxu0 %v1342
        %v2423 = vpop.f32.mrf.mxu0
        %v2424 = vadd.f32 %v2335, %v2423
        %v2425 = vpop.f32.mrf.mxu0
        %v2426 = vadd.f32 %v2337, %v2425
        %2427 = vmatmul.bf16.gmra.mxu0 %v1344
        %v2428 = vpop.f32.mrf.mxu0
        %v2429 = vadd.f32 %v2340, %v2428
        %v2430 = vpop.f32.mrf.mxu0
        %v2431 = vadd.f32 %v2342, %v2430
        %2432 = vmatmul.bf16.gmra.mxu0 %v1346
        %v2433 = vpop.f32.mrf.mxu0
        %v2434 = vadd.f32 %v2345, %v2433
        %v2435 = vpop.f32.mrf.mxu0
        %v2436 = vadd.f32 %v2347, %v2435
        %2437 = vmatmul.bf16.gmra.mxu0 %v1348
        %v2438 = vpop.f32.mrf.mxu0
        %v2439 = vadd.f32 %v2350, %v2438
        %v2440 = vpop.f32.mrf.mxu0
        %v2441 = vadd.f32 %v2352, %v2440
        %2442 = vmatmul.bf16.gmra.mxu0 %v1350
        %v2443 = vpop.f32.mrf.mxu0
        %v2444 = vadd.f32 %v2355, %v2443
        %v2445 = vpop.f32.mrf.mxu0
        %v2446 = vadd.f32 %v2357, %v2445
        %2447 = vmatmul.bf16.gmra.mxu0 %v1352
        %v2448 = vpop.f32.mrf.mxu0
        %v2449 = vadd.f32 %v2360, %v2448
        %v2450 = vpop.f32.mrf.mxu0
        %v2451 = vadd.f32 %v2362, %v2450
        %2452 = vmatmul.bf16.gmra.mxu0 %v1354
        %v2453 = vpop.f32.mrf.mxu0
        %v2454 = vadd.f32 %v2365, %v2453
        %v2455 = vpop.f32.mrf.mxu0
        %v2456 = vadd.f32 %v2367, %v2455
        %2457 = vmatmul.bf16.gmra.mxu0 %v1356
        %v2458 = vpop.f32.mrf.mxu0
        %v2459 = vadd.f32 %v2370, %v2458
        %v2460 = vpop.f32.mrf.mxu0
        %v2461 = vadd.f32 %v2372, %v2460
        %2462 = vmatmul.bf16.gmra.mxu0 %v1358
        %v2463 = vpop.f32.mrf.mxu0
        %v2464 = vadd.f32 %v2375, %v2463
        %v2465 = vpop.f32.mrf.mxu0
        %v2466 = vadd.f32 %v2377, %v2465
        %2467 = vmatmul.bf16.gmra.mxu0 %v1360
        %v2468 = vpop.f32.mrf.mxu0
        %v2469 = vadd.f32 %v2380, %v2468
        %v2470 = vpop.f32.mrf.mxu0
        %v2471 = vadd.f32 %v2382, %v2470
        %2472 = vmatmul.bf16.gmra.mxu0 %v1362
        %v2473 = vpop.f32.mrf.mxu0
        %v2474 = vadd.f32 %v2385, %v2473
        %v2475 = vpop.f32.mrf.mxu0
        %v2476 = vadd.f32 %v2387, %v2475
        %2477 = vmatmul.bf16.gmra.mxu0 %v1364
        %v2478 = vpop.f32.mrf.mxu0
        %v2479 = vadd.f32 %v2390, %v2478
        %v2480 = vpop.f32.mrf.mxu0
        %v2481 = vadd.f32 %v2392, %v2480
        %2482 = vmatmul.bf16.gmra.mxu0 %v1366
        %v2483 = vpop.f32.mrf.mxu0
        %v2484 = vadd.f32 %v2395, %v2483
        %v2485 = vpop.f32.mrf.mxu0
        %v2486 = vadd.f32 %v2397, %v2485
        %2487 = vmatmul.bf16.gmra.mxu0 %v1368
        %v2488 = vpop.f32.mrf.mxu0
        %v2489 = vadd.f32 %v2400, %v2488
        %v2490 = vpop.f32.mrf.mxu0
        %v2491 = vadd.f32 %v2402, %v2490
        %2492 = vdwg.mxu0
        %2493 = vmatpush.bf16.msra.mxu0 %v1812
        %2494 = vmatpush.bf16.msra.mxu0 %v1806
        %2495 = vmatpush.bf16.msra.mxu0 %v1800
        %2496 = vmatpush.bf16.msra.mxu0 %v1794
        %2497 = vmatpush.bf16.msra.mxu0 %v1788
        %2498 = vmatpush.bf16.msra.mxu0 %v1782
        %2499 = vmatpush.bf16.msra.mxu0 %v1776
        %2500 = vmatpush.bf16.msra.mxu0 %v1770
        %2501 = vmatmul.bf16.gmra.mxu0 %v1337
        %v2502 = vpop.f32.mrf.mxu0
        %v2503 = vadd.f32 %v1470, %v2502
        %v2504 = vpop.f32.mrf.mxu0
        %v2505 = vadd.f32 %v1470, %v2504
        %2506 = vmatmul.bf16.gmra.mxu0 %v1339
        %v2507 = vpop.f32.mrf.mxu0
        %v2508 = vadd.f32 %v1470, %v2507
        %v2509 = vpop.f32.mrf.mxu0
        %v2510 = vadd.f32 %v1470, %v2509
        %2511 = vmatmul.bf16.gmra.mxu0 %v1341
        %v2512 = vpop.f32.mrf.mxu0
        %v2513 = vadd.f32 %v1470, %v2512
        %v2514 = vpop.f32.mrf.mxu0
        %v2515 = vadd.f32 %v1470, %v2514
        %2516 = vmatmul.bf16.gmra.mxu0 %v1343
        %v2517 = vpop.f32.mrf.mxu0
        %v2518 = vadd.f32 %v1470, %v2517
        %v2519 = vpop.f32.mrf.mxu0
        %v2520 = vadd.f32 %v1470, %v2519
        %2521 = vmatmul.bf16.gmra.mxu0 %v1345
        %v2522 = vpop.f32.mrf.mxu0
        %v2523 = vadd.f32 %v1470, %v2522
        %v2524 = vpop.f32.mrf.mxu0
        %v2525 = vadd.f32 %v1470, %v2524
        %2526 = vmatmul.bf16.gmra.mxu0 %v1347
        %v2527 = vpop.f32.mrf.mxu0
        %v2528 = vadd.f32 %v1470, %v2527
        %v2529 = vpop.f32.mrf.mxu0
        %v2530 = vadd.f32 %v1470, %v2529
        %2531 = vmatmul.bf16.gmra.mxu0 %v1349
        %v2532 = vpop.f32.mrf.mxu0
        %v2533 = vadd.f32 %v1470, %v2532
        %v2534 = vpop.f32.mrf.mxu0
        %v2535 = vadd.f32 %v1470, %v2534
        %2536 = vmatmul.bf16.gmra.mxu0 %v1351
        %v2537 = vpop.f32.mrf.mxu0
        %v2538 = vadd.f32 %v1470, %v2537
        %v2539 = vpop.f32.mrf.mxu0
        %v2540 = vadd.f32 %v1470, %v2539
        %2541 = vmatmul.bf16.gmra.mxu0 %v1353
        %v2542 = vpop.f32.mrf.mxu0
        %v2543 = vadd.f32 %v1470, %v2542
        %v2544 = vpop.f32.mrf.mxu0
        %v2545 = vadd.f32 %v1470, %v2544
        %2546 = vmatmul.bf16.gmra.mxu0 %v1355
        %v2547 = vpop.f32.mrf.mxu0
        %v2548 = vadd.f32 %v1470, %v2547
        %v2549 = vpop.f32.mrf.mxu0
        %v2550 = vadd.f32 %v1470, %v2549
        %2551 = vmatmul.bf16.gmra.mxu0 %v1357
        %v2552 = vpop.f32.mrf.mxu0
        %v2553 = vadd.f32 %v1470, %v2552
        %v2554 = vpop.f32.mrf.mxu0
        %v2555 = vadd.f32 %v1470, %v2554
        %2556 = vmatmul.bf16.gmra.mxu0 %v1359
        %v2557 = vpop.f32.mrf.mxu0
        %v2558 = vadd.f32 %v1470, %v2557
        %v2559 = vpop.f32.mrf.mxu0
        %v2560 = vadd.f32 %v1470, %v2559
        %2561 = vmatmul.bf16.gmra.mxu0 %v1361
        %v2562 = vpop.f32.mrf.mxu0
        %v2563 = vadd.f32 %v1470, %v2562
        %v2564 = vpop.f32.mrf.mxu0
        %v2565 = vadd.f32 %v1470, %v2564
        %2566 = vmatmul.bf16.gmra.mxu0 %v1363
        %v2567 = vpop.f32.mrf.mxu0
        %v2568 = vadd.f32 %v1470, %v2567
        %v2569 = vpop.f32.mrf.mxu0
        %v2570 = vadd.f32 %v1470, %v2569
        %2571 = vmatmul.bf16.gmra.mxu0 %v1365
        %v2572 = vpop.f32.mrf.mxu0
        %v2573 = vadd.f32 %v1470, %v2572
        %v2574 = vpop.f32.mrf.mxu0
        %v2575 = vadd.f32 %v1470, %v2574
        %2576 = vmatmul.bf16.gmra.mxu0 %v1367
        %v2577 = vpop.f32.mrf.mxu0
        %v2578 = vadd.f32 %v1470, %v2577
        %v2579 = vpop.f32.mrf.mxu0
        %v2580 = vadd.f32 %v1470, %v2579
        %2581 = vdwg.mxu0
        %2582 = vmatpush.bf16.msra.mxu0 %v1860
        %2583 = vmatpush.bf16.msra.mxu0 %v1854
        %2584 = vmatpush.bf16.msra.mxu0 %v1848
        %2585 = vmatpush.bf16.msra.mxu0 %v1842
        %2586 = vmatpush.bf16.msra.mxu0 %v1836
        %2587 = vmatpush.bf16.msra.mxu0 %v1830
        %2588 = vmatpush.bf16.msra.mxu0 %v1824
        %2589 = vmatpush.bf16.msra.mxu0 %v1818
        %2590 = vmatmul.bf16.gmra.mxu0 %v1338
        %v2591 = vpop.f32.mrf.mxu0
        %v2592 = vadd.f32 %v2503, %v2591
        %v2593 = vpop.f32.mrf.mxu0
        %v2594 = vadd.f32 %v2505, %v2593
        %2595 = vmatmul.bf16.gmra.mxu0 %v1340
        %v2596 = vpop.f32.mrf.mxu0
        %v2597 = vadd.f32 %v2508, %v2596
        %v2598 = vpop.f32.mrf.mxu0
        %v2599 = vadd.f32 %v2510, %v2598
        %2600 = vmatmul.bf16.gmra.mxu0 %v1342
        %v2601 = vpop.f32.mrf.mxu0
        %v2602 = vadd.f32 %v2513, %v2601
        %v2603 = vpop.f32.mrf.mxu0
        %v2604 = vadd.f32 %v2515, %v2603
        %2605 = vmatmul.bf16.gmra.mxu0 %v1344
        %v2606 = vpop.f32.mrf.mxu0
        %v2607 = vadd.f32 %v2518, %v2606
        %v2608 = vpop.f32.mrf.mxu0
        %v2609 = vadd.f32 %v2520, %v2608
        %2610 = vmatmul.bf16.gmra.mxu0 %v1346
        %v2611 = vpop.f32.mrf.mxu0
        %v2612 = vadd.f32 %v2523, %v2611
        %v2613 = vpop.f32.mrf.mxu0
        %v2614 = vadd.f32 %v2525, %v2613
        %2615 = vmatmul.bf16.gmra.mxu0 %v1348
        %v2616 = vpop.f32.mrf.mxu0
        %v2617 = vadd.f32 %v2528, %v2616
        %v2618 = vpop.f32.mrf.mxu0
        %v2619 = vadd.f32 %v2530, %v2618
        %2620 = vmatmul.bf16.gmra.mxu0 %v1350
        %v2621 = vpop.f32.mrf.mxu0
        %v2622 = vadd.f32 %v2533, %v2621
        %v2623 = vpop.f32.mrf.mxu0
        %v2624 = vadd.f32 %v2535, %v2623
        %2625 = vmatmul.bf16.gmra.mxu0 %v1352
        %v2626 = vpop.f32.mrf.mxu0
        %v2627 = vadd.f32 %v2538, %v2626
        %v2628 = vpop.f32.mrf.mxu0
        %v2629 = vadd.f32 %v2540, %v2628
        %2630 = vmatmul.bf16.gmra.mxu0 %v1354
        %v2631 = vpop.f32.mrf.mxu0
        %v2632 = vadd.f32 %v2543, %v2631
        %v2633 = vpop.f32.mrf.mxu0
        %v2634 = vadd.f32 %v2545, %v2633
        %2635 = vmatmul.bf16.gmra.mxu0 %v1356
        %v2636 = vpop.f32.mrf.mxu0
        %v2637 = vadd.f32 %v2548, %v2636
        %v2638 = vpop.f32.mrf.mxu0
        %v2639 = vadd.f32 %v2550, %v2638
        %2640 = vmatmul.bf16.gmra.mxu0 %v1358
        %v2641 = vpop.f32.mrf.mxu0
        %v2642 = vadd.f32 %v2553, %v2641
        %v2643 = vpop.f32.mrf.mxu0
        %v2644 = vadd.f32 %v2555, %v2643
        %2645 = vmatmul.bf16.gmra.mxu0 %v1360
        %v2646 = vpop.f32.mrf.mxu0
        %v2647 = vadd.f32 %v2558, %v2646
        %v2648 = vpop.f32.mrf.mxu0
        %v2649 = vadd.f32 %v2560, %v2648
        %2650 = vmatmul.bf16.gmra.mxu0 %v1362
        %v2651 = vpop.f32.mrf.mxu0
        %v2652 = vadd.f32 %v2563, %v2651
        %v2653 = vpop.f32.mrf.mxu0
        %v2654 = vadd.f32 %v2565, %v2653
        %2655 = vmatmul.bf16.gmra.mxu0 %v1364
        %v2656 = vpop.f32.mrf.mxu0
        %v2657 = vadd.f32 %v2568, %v2656
        %v2658 = vpop.f32.mrf.mxu0
        %v2659 = vadd.f32 %v2570, %v2658
        %2660 = vmatmul.bf16.gmra.mxu0 %v1366
        %v2661 = vpop.f32.mrf.mxu0
        %v2662 = vadd.f32 %v2573, %v2661
        %v2663 = vpop.f32.mrf.mxu0
        %v2664 = vadd.f32 %v2575, %v2663
        %2665 = vmatmul.bf16.gmra.mxu0 %v1368
        %v2666 = vpop.f32.mrf.mxu0
        %v2667 = vadd.f32 %v2578, %v2666
        %v2668 = vpop.f32.mrf.mxu0
        %v2669 = vadd.f32 %v2580, %v2668
        %2670 = vdwg.mxu0
        %2671 = vmatpush.bf16.msra.mxu0 %v1813
        %2672 = vmatpush.bf16.msra.mxu0 %v1807
        %2673 = vmatpush.bf16.msra.mxu0 %v1801
        %2674 = vmatpush.bf16.msra.mxu0 %v1795
        %2675 = vmatpush.bf16.msra.mxu0 %v1789
        %2676 = vmatpush.bf16.msra.mxu0 %v1783
        %2677 = vmatpush.bf16.msra.mxu0 %v1777
        %2678 = vmatpush.bf16.msra.mxu0 %v1771
        %2679 = vmatmul.bf16.gmra.mxu0 %v1337
        %v2680 = vpop.f32.mrf.mxu0
        %v2681 = vadd.f32 %v1471, %v2680
        %v2682 = vpop.f32.mrf.mxu0
        %v2683 = vadd.f32 %v1471, %v2682
        %2684 = vmatmul.bf16.gmra.mxu0 %v1339
        %v2685 = vpop.f32.mrf.mxu0
        %v2686 = vadd.f32 %v1471, %v2685
        %v2687 = vpop.f32.mrf.mxu0
        %v2688 = vadd.f32 %v1471, %v2687
        %2689 = vmatmul.bf16.gmra.mxu0 %v1341
        %v2690 = vpop.f32.mrf.mxu0
        %v2691 = vadd.f32 %v1471, %v2690
        %v2692 = vpop.f32.mrf.mxu0
        %v2693 = vadd.f32 %v1471, %v2692
        %2694 = vmatmul.bf16.gmra.mxu0 %v1343
        %v2695 = vpop.f32.mrf.mxu0
        %v2696 = vadd.f32 %v1471, %v2695
        %v2697 = vpop.f32.mrf.mxu0
        %v2698 = vadd.f32 %v1471, %v2697
        %2699 = vmatmul.bf16.gmra.mxu0 %v1345
        %v2700 = vpop.f32.mrf.mxu0
        %v2701 = vadd.f32 %v1471, %v2700
        %v2702 = vpop.f32.mrf.mxu0
        %v2703 = vadd.f32 %v1471, %v2702
        %2704 = vmatmul.bf16.gmra.mxu0 %v1347
        %v2705 = vpop.f32.mrf.mxu0
        %v2706 = vadd.f32 %v1471, %v2705
        %v2707 = vpop.f32.mrf.mxu0
        %v2708 = vadd.f32 %v1471, %v2707
        %2709 = vmatmul.bf16.gmra.mxu0 %v1349
        %v2710 = vpop.f32.mrf.mxu0
        %v2711 = vadd.f32 %v1471, %v2710
        %v2712 = vpop.f32.mrf.mxu0
        %v2713 = vadd.f32 %v1471, %v2712
        %2714 = vmatmul.bf16.gmra.mxu0 %v1351
        %v2715 = vpop.f32.mrf.mxu0
        %v2716 = vadd.f32 %v1471, %v2715
        %v2717 = vpop.f32.mrf.mxu0
        %v2718 = vadd.f32 %v1471, %v2717
        %2719 = vmatmul.bf16.gmra.mxu0 %v1353
        %v2720 = vpop.f32.mrf.mxu0
        %v2721 = vadd.f32 %v1471, %v2720
        %v2722 = vpop.f32.mrf.mxu0
        %v2723 = vadd.f32 %v1471, %v2722
        %2724 = vmatmul.bf16.gmra.mxu0 %v1355
        %v2725 = vpop.f32.mrf.mxu0
        %v2726 = vadd.f32 %v1471, %v2725
        %v2727 = vpop.f32.mrf.mxu0
        %v2728 = vadd.f32 %v1471, %v2727
        %2729 = vmatmul.bf16.gmra.mxu0 %v1357
        %v2730 = vpop.f32.mrf.mxu0
        %v2731 = vadd.f32 %v1471, %v2730
        %v2732 = vpop.f32.mrf.mxu0
        %v2733 = vadd.f32 %v1471, %v2732
        %2734 = vmatmul.bf16.gmra.mxu0 %v1359
        %v2735 = vpop.f32.mrf.mxu0
        %v2736 = vadd.f32 %v1471, %v2735
        %v2737 = vpop.f32.mrf.mxu0
        %v2738 = vadd.f32 %v1471, %v2737
        %2739 = vmatmul.bf16.gmra.mxu0 %v1361
        %v2740 = vpop.f32.mrf.mxu0
        %v2741 = vadd.f32 %v1471, %v2740
        %v2742 = vpop.f32.mrf.mxu0
        %v2743 = vadd.f32 %v1471, %v2742
        %2744 = vmatmul.bf16.gmra.mxu0 %v1363
        %v2745 = vpop.f32.mrf.mxu0
        %v2746 = vadd.f32 %v1471, %v2745
        %v2747 = vpop.f32.mrf.mxu0
        %v2748 = vadd.f32 %v1471, %v2747
        %2749 = vmatmul.bf16.gmra.mxu0 %v1365
        %v2750 = vpop.f32.mrf.mxu0
        %v2751 = vadd.f32 %v1471, %v2750
        %v2752 = vpop.f32.mrf.mxu0
        %v2753 = vadd.f32 %v1471, %v2752
        %2754 = vmatmul.bf16.gmra.mxu0 %v1367
        %v2755 = vpop.f32.mrf.mxu0
        %v2756 = vadd.f32 %v1471, %v2755
        %v2757 = vpop.f32.mrf.mxu0
        %v2758 = vadd.f32 %v1471, %v2757
        %2759 = vdwg.mxu0
        %2760 = vmatpush.bf16.msra.mxu0 %v1861
        %2761 = vmatpush.bf16.msra.mxu0 %v1855
        %2762 = vmatpush.bf16.msra.mxu0 %v1849
        %2763 = vmatpush.bf16.msra.mxu0 %v1843
        %2764 = vmatpush.bf16.msra.mxu0 %v1837
        %2765 = vmatpush.bf16.msra.mxu0 %v1831
        %2766 = vmatpush.bf16.msra.mxu0 %v1825
        %2767 = vmatpush.bf16.msra.mxu0 %v1819
        %2768 = vmatmul.bf16.gmra.mxu0 %v1338
        %v2769 = vpop.f32.mrf.mxu0
        %v2770 = vadd.f32 %v2681, %v2769
        %v2771 = vpop.f32.mrf.mxu0
        %v2772 = vadd.f32 %v2683, %v2771
        %2773 = vmatmul.bf16.gmra.mxu0 %v1340
        %v2774 = vpop.f32.mrf.mxu0
        %v2775 = vadd.f32 %v2686, %v2774
        %v2776 = vpop.f32.mrf.mxu0
        %v2777 = vadd.f32 %v2688, %v2776
        %2778 = vmatmul.bf16.gmra.mxu0 %v1342
        %v2779 = vpop.f32.mrf.mxu0
        %v2780 = vadd.f32 %v2691, %v2779
        %v2781 = vpop.f32.mrf.mxu0
        %v2782 = vadd.f32 %v2693, %v2781
        %2783 = vmatmul.bf16.gmra.mxu0 %v1344
        %v2784 = vpop.f32.mrf.mxu0
        %v2785 = vadd.f32 %v2696, %v2784
        %v2786 = vpop.f32.mrf.mxu0
        %v2787 = vadd.f32 %v2698, %v2786
        %2788 = vmatmul.bf16.gmra.mxu0 %v1346
        %v2789 = vpop.f32.mrf.mxu0
        %v2790 = vadd.f32 %v2701, %v2789
        %v2791 = vpop.f32.mrf.mxu0
        %v2792 = vadd.f32 %v2703, %v2791
        %2793 = vmatmul.bf16.gmra.mxu0 %v1348
        %v2794 = vpop.f32.mrf.mxu0
        %v2795 = vadd.f32 %v2706, %v2794
        %v2796 = vpop.f32.mrf.mxu0
        %v2797 = vadd.f32 %v2708, %v2796
        %2798 = vmatmul.bf16.gmra.mxu0 %v1350
        %v2799 = vpop.f32.mrf.mxu0
        %v2800 = vadd.f32 %v2711, %v2799
        %v2801 = vpop.f32.mrf.mxu0
        %v2802 = vadd.f32 %v2713, %v2801
        %2803 = vmatmul.bf16.gmra.mxu0 %v1352
        %v2804 = vpop.f32.mrf.mxu0
        %v2805 = vadd.f32 %v2716, %v2804
        %v2806 = vpop.f32.mrf.mxu0
        %v2807 = vadd.f32 %v2718, %v2806
        %2808 = vmatmul.bf16.gmra.mxu0 %v1354
        %v2809 = vpop.f32.mrf.mxu0
        %v2810 = vadd.f32 %v2721, %v2809
        %v2811 = vpop.f32.mrf.mxu0
        %v2812 = vadd.f32 %v2723, %v2811
        %2813 = vmatmul.bf16.gmra.mxu0 %v1356
        %v2814 = vpop.f32.mrf.mxu0
        %v2815 = vadd.f32 %v2726, %v2814
        %v2816 = vpop.f32.mrf.mxu0
        %v2817 = vadd.f32 %v2728, %v2816
        %2818 = vmatmul.bf16.gmra.mxu0 %v1358
        %v2819 = vpop.f32.mrf.mxu0
        %v2820 = vadd.f32 %v2731, %v2819
        %v2821 = vpop.f32.mrf.mxu0
        %v2822 = vadd.f32 %v2733, %v2821
        %2823 = vmatmul.bf16.gmra.mxu0 %v1360
        %v2824 = vpop.f32.mrf.mxu0
        %v2825 = vadd.f32 %v2736, %v2824
        %v2826 = vpop.f32.mrf.mxu0
        %v2827 = vadd.f32 %v2738, %v2826
        %2828 = vmatmul.bf16.gmra.mxu0 %v1362
        %v2829 = vpop.f32.mrf.mxu0
        %v2830 = vadd.f32 %v2741, %v2829
        %v2831 = vpop.f32.mrf.mxu0
        %v2832 = vadd.f32 %v2743, %v2831
        %2833 = vmatmul.bf16.gmra.mxu0 %v1364
        %v2834 = vpop.f32.mrf.mxu0
        %v2835 = vadd.f32 %v2746, %v2834
        %v2836 = vpop.f32.mrf.mxu0
        %v2837 = vadd.f32 %v2748, %v2836
        %2838 = vmatmul.bf16.gmra.mxu0 %v1366
        %v2839 = vpop.f32.mrf.mxu0
        %v2840 = vadd.f32 %v2751, %v2839
        %v2841 = vpop.f32.mrf.mxu0
        %v2842 = vadd.f32 %v2753, %v2841
        %2843 = vmatmul.bf16.gmra.mxu0 %v1368
        %v2844 = vpop.f32.mrf.mxu0
        %v2845 = vadd.f32 %v2756, %v2844
        %v2846 = vpop.f32.mrf.mxu0
        %v2847 = vadd.f32 %v2758, %v2846
        %2848 = vdwg.mxu0
        %2849 = vmatpush.bf16.msra.mxu0 %v1814
        %2850 = vmatpush.bf16.msra.mxu0 %v1808
        %2851 = vmatpush.bf16.msra.mxu0 %v1802
        %2852 = vmatpush.bf16.msra.mxu0 %v1796
        %2853 = vmatpush.bf16.msra.mxu0 %v1790
        %2854 = vmatpush.bf16.msra.mxu0 %v1784
        %2855 = vmatpush.bf16.msra.mxu0 %v1778
        %2856 = vmatpush.bf16.msra.mxu0 %v1772
        %2857 = vmatmul.bf16.gmra.mxu0 %v1337
        %v2858 = vpop.f32.mrf.mxu0
        %v2859 = vadd.f32 %v1472, %v2858
        %v2860 = vpop.f32.mrf.mxu0
        %v2861 = vadd.f32 %v1472, %v2860
        %2862 = vmatmul.bf16.gmra.mxu0 %v1339
        %v2863 = vpop.f32.mrf.mxu0
        %v2864 = vadd.f32 %v1472, %v2863
        %v2865 = vpop.f32.mrf.mxu0
        %v2866 = vadd.f32 %v1472, %v2865
        %2867 = vmatmul.bf16.gmra.mxu0 %v1341
        %v2868 = vpop.f32.mrf.mxu0
        %v2869 = vadd.f32 %v1472, %v2868
        %v2870 = vpop.f32.mrf.mxu0
        %v2871 = vadd.f32 %v1472, %v2870
        %2872 = vmatmul.bf16.gmra.mxu0 %v1343
        %v2873 = vpop.f32.mrf.mxu0
        %v2874 = vadd.f32 %v1472, %v2873
        %v2875 = vpop.f32.mrf.mxu0
        %v2876 = vadd.f32 %v1472, %v2875
        %2877 = vmatmul.bf16.gmra.mxu0 %v1345
        %v2878 = vpop.f32.mrf.mxu0
        %v2879 = vadd.f32 %v1472, %v2878
        %v2880 = vpop.f32.mrf.mxu0
        %v2881 = vadd.f32 %v1472, %v2880
        %2882 = vmatmul.bf16.gmra.mxu0 %v1347
        %v2883 = vpop.f32.mrf.mxu0
        %v2884 = vadd.f32 %v1472, %v2883
        %v2885 = vpop.f32.mrf.mxu0
        %v2886 = vadd.f32 %v1472, %v2885
        %2887 = vmatmul.bf16.gmra.mxu0 %v1349
        %v2888 = vpop.f32.mrf.mxu0
        %v2889 = vadd.f32 %v1472, %v2888
        %v2890 = vpop.f32.mrf.mxu0
        %v2891 = vadd.f32 %v1472, %v2890
        %2892 = vmatmul.bf16.gmra.mxu0 %v1351
        %v2893 = vpop.f32.mrf.mxu0
        %v2894 = vadd.f32 %v1472, %v2893
        %v2895 = vpop.f32.mrf.mxu0
        %v2896 = vadd.f32 %v1472, %v2895
        %2897 = vmatmul.bf16.gmra.mxu0 %v1353
        %v2898 = vpop.f32.mrf.mxu0
        %v2899 = vadd.f32 %v1472, %v2898
        %v2900 = vpop.f32.mrf.mxu0
        %v2901 = vadd.f32 %v1472, %v2900
        %2902 = vmatmul.bf16.gmra.mxu0 %v1355
        %v2903 = vpop.f32.mrf.mxu0
        %v2904 = vadd.f32 %v1472, %v2903
        %v2905 = vpop.f32.mrf.mxu0
        %v2906 = vadd.f32 %v1472, %v2905
        %2907 = vmatmul.bf16.gmra.mxu0 %v1357
        %v2908 = vpop.f32.mrf.mxu0
        %v2909 = vadd.f32 %v1472, %v2908
        %v2910 = vpop.f32.mrf.mxu0
        %v2911 = vadd.f32 %v1472, %v2910
        %2912 = vmatmul.bf16.gmra.mxu0 %v1359
        %v2913 = vpop.f32.mrf.mxu0
        %v2914 = vadd.f32 %v1472, %v2913
        %v2915 = vpop.f32.mrf.mxu0
        %v2916 = vadd.f32 %v1472, %v2915
        %2917 = vmatmul.bf16.gmra.mxu0 %v1361
        %v2918 = vpop.f32.mrf.mxu0
        %v2919 = vadd.f32 %v1472, %v2918
        %v2920 = vpop.f32.mrf.mxu0
        %v2921 = vadd.f32 %v1472, %v2920
        %2922 = vmatmul.bf16.gmra.mxu0 %v1363
        %v2923 = vpop.f32.mrf.mxu0
        %v2924 = vadd.f32 %v1472, %v2923
        %v2925 = vpop.f32.mrf.mxu0
        %v2926 = vadd.f32 %v1472, %v2925
        %2927 = vmatmul.bf16.gmra.mxu0 %v1365
        %v2928 = vpop.f32.mrf.mxu0
        %v2929 = vadd.f32 %v1472, %v2928
        %v2930 = vpop.f32.mrf.mxu0
        %v2931 = vadd.f32 %v1472, %v2930
        %2932 = vmatmul.bf16.gmra.mxu0 %v1367
        %v2933 = vpop.f32.mrf.mxu0
        %v2934 = vadd.f32 %v1472, %v2933
        %v2935 = vpop.f32.mrf.mxu0
        %v2936 = vadd.f32 %v1472, %v2935
        %2937 = vdwg.mxu0
        %2938 = vmatpush.bf16.msra.mxu0 %v1862
        %2939 = vmatpush.bf16.msra.mxu0 %v1856
        %2940 = vmatpush.bf16.msra.mxu0 %v1850
        %2941 = vmatpush.bf16.msra.mxu0 %v1844
        %2942 = vmatpush.bf16.msra.mxu0 %v1838
        %2943 = vmatpush.bf16.msra.mxu0 %v1832
        %2944 = vmatpush.bf16.msra.mxu0 %v1826
        %2945 = vmatpush.bf16.msra.mxu0 %v1820
        %2946 = vmatmul.bf16.gmra.mxu0 %v1338
        %v2947 = vpop.f32.mrf.mxu0
        %v2948 = vadd.f32 %v2859, %v2947
        %v2949 = vpop.f32.mrf.mxu0
        %v2950 = vadd.f32 %v2861, %v2949
        %2951 = vmatmul.bf16.gmra.mxu0 %v1340
        %v2952 = vpop.f32.mrf.mxu0
        %v2953 = vadd.f32 %v2864, %v2952
        %v2954 = vpop.f32.mrf.mxu0
        %v2955 = vadd.f32 %v2866, %v2954
        %2956 = vmatmul.bf16.gmra.mxu0 %v1342
        %v2957 = vpop.f32.mrf.mxu0
        %v2958 = vadd.f32 %v2869, %v2957
        %v2959 = vpop.f32.mrf.mxu0
        %v2960 = vadd.f32 %v2871, %v2959
        %2961 = vmatmul.bf16.gmra.mxu0 %v1344
        %v2962 = vpop.f32.mrf.mxu0
        %v2963 = vadd.f32 %v2874, %v2962
        %v2964 = vpop.f32.mrf.mxu0
        %v2965 = vadd.f32 %v2876, %v2964
        %2966 = vmatmul.bf16.gmra.mxu0 %v1346
        %v2967 = vpop.f32.mrf.mxu0
        %v2968 = vadd.f32 %v2879, %v2967
        %v2969 = vpop.f32.mrf.mxu0
        %v2970 = vadd.f32 %v2881, %v2969
        %2971 = vmatmul.bf16.gmra.mxu0 %v1348
        %v2972 = vpop.f32.mrf.mxu0
        %v2973 = vadd.f32 %v2884, %v2972
        %v2974 = vpop.f32.mrf.mxu0
        %v2975 = vadd.f32 %v2886, %v2974
        %2976 = vmatmul.bf16.gmra.mxu0 %v1350
        %v2977 = vpop.f32.mrf.mxu0
        %v2978 = vadd.f32 %v2889, %v2977
        %v2979 = vpop.f32.mrf.mxu0
        %v2980 = vadd.f32 %v2891, %v2979
        %2981 = vmatmul.bf16.gmra.mxu0 %v1352
        %v2982 = vpop.f32.mrf.mxu0
        %v2983 = vadd.f32 %v2894, %v2982
        %v2984 = vpop.f32.mrf.mxu0
        %v2985 = vadd.f32 %v2896, %v2984
        %2986 = vmatmul.bf16.gmra.mxu0 %v1354
        %v2987 = vpop.f32.mrf.mxu0
        %v2988 = vadd.f32 %v2899, %v2987
        %v2989 = vpop.f32.mrf.mxu0
        %v2990 = vadd.f32 %v2901, %v2989
        %2991 = vmatmul.bf16.gmra.mxu0 %v1356
        %v2992 = vpop.f32.mrf.mxu0
        %v2993 = vadd.f32 %v2904, %v2992
        %v2994 = vpop.f32.mrf.mxu0
        %v2995 = vadd.f32 %v2906, %v2994
        %2996 = vmatmul.bf16.gmra.mxu0 %v1358
        %v2997 = vpop.f32.mrf.mxu0
        %v2998 = vadd.f32 %v2909, %v2997
        %v2999 = vpop.f32.mrf.mxu0
        %v3000 = vadd.f32 %v2911, %v2999
        %3001 = vmatmul.bf16.gmra.mxu0 %v1360
        %v3002 = vpop.f32.mrf.mxu0
        %v3003 = vadd.f32 %v2914, %v3002
        %v3004 = vpop.f32.mrf.mxu0
        %v3005 = vadd.f32 %v2916, %v3004
        %3006 = vmatmul.bf16.gmra.mxu0 %v1362
        %v3007 = vpop.f32.mrf.mxu0
        %v3008 = vadd.f32 %v2919, %v3007
        %v3009 = vpop.f32.mrf.mxu0
        %v3010 = vadd.f32 %v2921, %v3009
        %3011 = vmatmul.bf16.gmra.mxu0 %v1364
        %v3012 = vpop.f32.mrf.mxu0
        %v3013 = vadd.f32 %v2924, %v3012
        %v3014 = vpop.f32.mrf.mxu0
        %v3015 = vadd.f32 %v2926, %v3014
        %3016 = vmatmul.bf16.gmra.mxu0 %v1366
        %v3017 = vpop.f32.mrf.mxu0
        %v3018 = vadd.f32 %v2929, %v3017
        %v3019 = vpop.f32.mrf.mxu0
        %v3020 = vadd.f32 %v2931, %v3019
        %3021 = vmatmul.bf16.gmra.mxu0 %v1368
        %v3022 = vpop.f32.mrf.mxu0
        %v3023 = vadd.f32 %v2934, %v3022
        %v3024 = vpop.f32.mrf.mxu0
        %v3025 = vadd.f32 %v2936, %v3024
        %3026 = vdwg.mxu0
        %v3027 = vpack.c.bf16 %v2236, %v2058
        %v3028 = vpack.c.bf16 %v2592, %v2414
        %v3029 = vpack.c.bf16 %v2948, %v2770
        %v3030 = vpack.c.bf16 %v2238, %v2060
        %v3031 = vpack.c.bf16 %v2594, %v2416
        %v3032 = vpack.c.bf16 %v2950, %v2772
        %v3033 = vpack.c.bf16 %v2241, %v2063
        %v3034 = vpack.c.bf16 %v2597, %v2419
        %v3035 = vpack.c.bf16 %v2953, %v2775
        %v3036 = vpack.c.bf16 %v2243, %v2065
        %v3037 = vpack.c.bf16 %v2599, %v2421
        %v3038 = vpack.c.bf16 %v2955, %v2777
        %v3039 = vpack.c.bf16 %v2246, %v2068
        %v3040 = vpack.c.bf16 %v2602, %v2424
        %v3041 = vpack.c.bf16 %v2958, %v2780
        %v3042 = vpack.c.bf16 %v2248, %v2070
        %v3043 = vpack.c.bf16 %v2604, %v2426
        %v3044 = vpack.c.bf16 %v2960, %v2782
        %v3045 = vpack.c.bf16 %v2251, %v2073
        %v3046 = vpack.c.bf16 %v2607, %v2429
        %v3047 = vpack.c.bf16 %v2963, %v2785
        %v3048 = vpack.c.bf16 %v2253, %v2075
        %v3049 = vpack.c.bf16 %v2609, %v2431
        %v3050 = vpack.c.bf16 %v2965, %v2787
        %v3051 = vpack.c.bf16 %v2256, %v2078
        %v3052 = vpack.c.bf16 %v2612, %v2434
        %v3053 = vpack.c.bf16 %v2968, %v2790
        %v3054 = vpack.c.bf16 %v2258, %v2080
        %v3055 = vpack.c.bf16 %v2614, %v2436
        %v3056 = vpack.c.bf16 %v2970, %v2792
        %v3057 = vpack.c.bf16 %v2261, %v2083
        %v3058 = vpack.c.bf16 %v2617, %v2439
        %v3059 = vpack.c.bf16 %v2973, %v2795
        %v3060 = vpack.c.bf16 %v2263, %v2085
        %v3061 = vpack.c.bf16 %v2619, %v2441
        %v3062 = vpack.c.bf16 %v2975, %v2797
        %v3063 = vpack.c.bf16 %v2266, %v2088
        %v3064 = vpack.c.bf16 %v2622, %v2444
        %v3065 = vpack.c.bf16 %v2978, %v2800
        %v3066 = vpack.c.bf16 %v2268, %v2090
        %v3067 = vpack.c.bf16 %v2624, %v2446
        %v3068 = vpack.c.bf16 %v2980, %v2802
        %v3069 = vpack.c.bf16 %v2271, %v2093
        %v3070 = vpack.c.bf16 %v2627, %v2449
        %v3071 = vpack.c.bf16 %v2983, %v2805
        %v3072 = vpack.c.bf16 %v2273, %v2095
        %v3073 = vpack.c.bf16 %v2629, %v2451
        %v3074 = vpack.c.bf16 %v2985, %v2807
        %v3075 = vpack.c.bf16 %v2276, %v2098
        %v3076 = vpack.c.bf16 %v2632, %v2454
        %v3077 = vpack.c.bf16 %v2988, %v2810
        %v3078 = vpack.c.bf16 %v2278, %v2100
        %v3079 = vpack.c.bf16 %v2634, %v2456
        %v3080 = vpack.c.bf16 %v2990, %v2812
        %v3081 = vpack.c.bf16 %v2281, %v2103
        %v3082 = vpack.c.bf16 %v2637, %v2459
        %v3083 = vpack.c.bf16 %v2993, %v2815
        %v3084 = vpack.c.bf16 %v2283, %v2105
        %v3085 = vpack.c.bf16 %v2639, %v2461
        %v3086 = vpack.c.bf16 %v2995, %v2817
        %v3087 = vpack.c.bf16 %v2286, %v2108
        %v3088 = vpack.c.bf16 %v2642, %v2464
        %v3089 = vpack.c.bf16 %v2998, %v2820
        %v3090 = vpack.c.bf16 %v2288, %v2110
        %v3091 = vpack.c.bf16 %v2644, %v2466
        %v3092 = vpack.c.bf16 %v3000, %v2822
        %v3093 = vpack.c.bf16 %v2291, %v2113
        %v3094 = vpack.c.bf16 %v2647, %v2469
        %v3095 = vpack.c.bf16 %v3003, %v2825
        %v3096 = vpack.c.bf16 %v2293, %v2115
        %v3097 = vpack.c.bf16 %v2649, %v2471
        %v3098 = vpack.c.bf16 %v3005, %v2827
        %v3099 = vpack.c.bf16 %v2296, %v2118
        %v3100 = vpack.c.bf16 %v2652, %v2474
        %v3101 = vpack.c.bf16 %v3008, %v2830
        %v3102 = vpack.c.bf16 %v2298, %v2120
        %v3103 = vpack.c.bf16 %v2654, %v2476
        %v3104 = vpack.c.bf16 %v3010, %v2832
        %v3105 = vpack.c.bf16 %v2301, %v2123
        %v3106 = vpack.c.bf16 %v2657, %v2479
        %v3107 = vpack.c.bf16 %v3013, %v2835
        %v3108 = vpack.c.bf16 %v2303, %v2125
        %v3109 = vpack.c.bf16 %v2659, %v2481
        %v3110 = vpack.c.bf16 %v3015, %v2837
        %v3111 = vpack.c.bf16 %v2306, %v2128
        %v3112 = vpack.c.bf16 %v2662, %v2484
        %v3113 = vpack.c.bf16 %v3018, %v2840
        %v3114 = vpack.c.bf16 %v2308, %v2130
        %v3115 = vpack.c.bf16 %v2664, %v2486
        %v3116 = vpack.c.bf16 %v3020, %v2842
        %v3117 = vpack.c.bf16 %v2311, %v2133
        %v3118 = vpack.c.bf16 %v2667, %v2489
        %v3119 = vpack.c.bf16 %v3023, %v2845
        %v3120 = vpack.c.bf16 %v2313, %v2135
        %v3121 = vpack.c.bf16 %v2669, %v2491
        %v3122 = vpack.c.bf16 %v3025, %v2847
        %3123 = vst [vmem:[%s323] sm:$0xff] %v3027
        %3124 = vst [vmem:[%s323 + $0x8] sm:$0xff] %v3028
        %3125 = vst [vmem:[%s323 + $0x10] sm:$0xff] %v3029
        %3126 = vst [vmem:[%s323 + $0x18] sm:$0xff] %v3030
        %3127 = vst [vmem:[%s323 + $0x20] sm:$0xff] %v3031
        %3128 = vst [vmem:[%s323 + $0x28] sm:$0xff] %v3032
        %3129 = vst [vmem:[%s323 + $0x30] sm:$0xff] %v3033
        %3130 = vst [vmem:[%s323 + $0x38] sm:$0xff] %v3034
        %3131 = vst [vmem:[%s323 + $0x40] sm:$0xff] %v3035
        %3132 = vst [vmem:[%s323 + $0x48] sm:$0xff] %v3036
        %3133 = vst [vmem:[%s323 + $0x50] sm:$0xff] %v3037
        %3134 = vst [vmem:[%s323 + $0x58] sm:$0xff] %v3038
        %3135 = vst [vmem:[%s323 + $0x60] sm:$0xff] %v3039
        %3136 = vst [vmem:[%s323 + $0x68] sm:$0xff] %v3040
        %3137 = vst [vmem:[%s323 + $0x70] sm:$0xff] %v3041
        %3138 = vst [vmem:[%s323 + $0x78] sm:$0xff] %v3042
        %3139 = vst [vmem:[%s323 + $0x80] sm:$0xff] %v3043
        %3140 = vst [vmem:[%s323 + $0x88] sm:$0xff] %v3044
        %3141 = vst [vmem:[%s323 + $0x90] sm:$0xff] %v3045
        %3142 = vst [vmem:[%s323 + $0x98] sm:$0xff] %v3046
        %3143 = vst [vmem:[%s323 + $0xa0] sm:$0xff] %v3047
        %3144 = vst [vmem:[%s323 + $0xa8] sm:$0xff] %v3048
        %3145 = vst [vmem:[%s323 + $0xb0] sm:$0xff] %v3049
        %3146 = vst [vmem:[%s323 + $0xb8] sm:$0xff] %v3050
        %3147 = vst [vmem:[%s323 + $0xc0] sm:$0xff] %v3051
        %3148 = vst [vmem:[%s323 + $0xc8] sm:$0xff] %v3052
        %3149 = vst [vmem:[%s323 + $0xd0] sm:$0xff] %v3053
        %3150 = vst [vmem:[%s323 + $0xd8] sm:$0xff] %v3054
        %3151 = vst [vmem:[%s323 + $0xe0] sm:$0xff] %v3055
        %3152 = vst [vmem:[%s323 + $0xe8] sm:$0xff] %v3056
        %3153 = vst [vmem:[%s323 + $0xf0] sm:$0xff] %v3057
        %3154 = vst [vmem:[%s323 + $0xf8] sm:$0xff] %v3058
        %3155 = vst [vmem:[%s323 + $0x100] sm:$0xff] %v3059
        %3156 = vst [vmem:[%s323 + $0x108] sm:$0xff] %v3060
        %3157 = vst [vmem:[%s323 + $0x110] sm:$0xff] %v3061
        %3158 = vst [vmem:[%s323 + $0x118] sm:$0xff] %v3062
        %3159 = vst [vmem:[%s323 + $0x120] sm:$0xff] %v3063
        %3160 = vst [vmem:[%s323 + $0x128] sm:$0xff] %v3064
        %3161 = vst [vmem:[%s323 + $0x130] sm:$0xff] %v3065
        %3162 = vst [vmem:[%s323 + $0x138] sm:$0xff] %v3066
        %3163 = vst [vmem:[%s323 + $0x140] sm:$0xff] %v3067
        %3164 = vst [vmem:[%s323 + $0x148] sm:$0xff] %v3068
        %3165 = vst [vmem:[%s323 + $0x150] sm:$0xff] %v3069
        %3166 = vst [vmem:[%s323 + $0x158] sm:$0xff] %v3070
        %3167 = vst [vmem:[%s323 + $0x160] sm:$0xff] %v3071
        %3168 = vst [vmem:[%s323 + $0x168] sm:$0xff] %v3072
        %3169 = vst [vmem:[%s323 + $0x170] sm:$0xff] %v3073
        %3170 = vst [vmem:[%s323 + $0x178] sm:$0xff] %v3074
        %3171 = vst [vmem:[%s323 + $0x180] sm:$0xff] %v3075
        %3172 = vst [vmem:[%s323 + $0x188] sm:$0xff] %v3076
        %3173 = vst [vmem:[%s323 + $0x190] sm:$0xff] %v3077
        %3174 = vst [vmem:[%s323 + $0x198] sm:$0xff] %v3078
        %3175 = vst [vmem:[%s323 + $0x1a0] sm:$0xff] %v3079
        %3176 = vst [vmem:[%s323 + $0x1a8] sm:$0xff] %v3080
        %3177 = vst [vmem:[%s323 + $0x1b0] sm:$0xff] %v3081
        %3178 = vst [vmem:[%s323 + $0x1b8] sm:$0xff] %v3082
        %3179 = vst [vmem:[%s323 + $0x1c0] sm:$0xff] %v3083
        %3180 = vst [vmem:[%s323 + $0x1c8] sm:$0xff] %v3084
        %3181 = vst [vmem:[%s323 + $0x1d0] sm:$0xff] %v3085
        %3182 = vst [vmem:[%s323 + $0x1d8] sm:$0xff] %v3086
        %3183 = vst [vmem:[%s323 + $0x1e0] sm:$0xff] %v3087
        %3184 = vst [vmem:[%s323 + $0x1e8] sm:$0xff] %v3088
        %3185 = vst [vmem:[%s323 + $0x1f0] sm:$0xff] %v3089
        %3186 = vst [vmem:[%s323 + $0x1f8] sm:$0xff] %v3090
        %3187 = vst [vmem:[%s323 + $0x200] sm:$0xff] %v3091
        %3188 = vst [vmem:[%s323 + $0x208] sm:$0xff] %v3092
        %3189 = vst [vmem:[%s323 + $0x210] sm:$0xff] %v3093
        %3190 = vst [vmem:[%s323 + $0x218] sm:$0xff] %v3094
        %3191 = vst [vmem:[%s323 + $0x220] sm:$0xff] %v3095
        %3192 = vst [vmem:[%s323 + $0x228] sm:$0xff] %v3096
        %3193 = vst [vmem:[%s323 + $0x230] sm:$0xff] %v3097
        %3194 = vst [vmem:[%s323 + $0x238] sm:$0xff] %v3098
        %3195 = vst [vmem:[%s323 + $0x240] sm:$0xff] %v3099
        %3196 = vst [vmem:[%s323 + $0x248] sm:$0xff] %v3100
        %3197 = vst [vmem:[%s323 + $0x250] sm:$0xff] %v3101
        %3198 = vst [vmem:[%s323 + $0x258] sm:$0xff] %v3102
        %3199 = vst [vmem:[%s323 + $0x260] sm:$0xff] %v3103
        %3200 = vst [vmem:[%s323 + $0x268] sm:$0xff] %v3104
        %3201 = vst [vmem:[%s323 + $0x270] sm:$0xff] %v3105
        %3202 = vst [vmem:[%s323 + $0x278] sm:$0xff] %v3106
        %3203 = vst [vmem:[%s323 + $0x280] sm:$0xff] %v3107
        %3204 = vst [vmem:[%s323 + $0x288] sm:$0xff] %v3108
        %3205 = vst [vmem:[%s323 + $0x290] sm:$0xff] %v3109
        %3206 = vst [vmem:[%s323 + $0x298] sm:$0xff] %v3110
        %3207 = vst [vmem:[%s323 + $0x2a0] sm:$0xff] %v3111
        %3208 = vst [vmem:[%s323 + $0x2a8] sm:$0xff] %v3112
        %3209 = vst [vmem:[%s323 + $0x2b0] sm:$0xff] %v3113
        %3210 = vst [vmem:[%s323 + $0x2b8] sm:$0xff] %v3114
        %3211 = vst [vmem:[%s323 + $0x2c0] sm:$0xff] %v3115
        %3212 = vst [vmem:[%s323 + $0x2c8] sm:$0xff] %v3116
        %3213 = vst [vmem:[%s323 + $0x2d0] sm:$0xff] %v3117
        %3214 = vst [vmem:[%s323 + $0x2d8] sm:$0xff] %v3118
        %3215 = vst [vmem:[%s323 + $0x2e0] sm:$0xff] %v3119
        %3216 = vst [vmem:[%s323 + $0x2e8] sm:$0xff] %v3120
        %3217 = vst [vmem:[%s323 + $0x2f0] sm:$0xff] %v3121
        %3218 = vst [vmem:[%s323 + $0x2f8] sm:$0xff] %v3122
        %s3219 = sand.u32 %s158, 1
        %s3220 = scalar_lea.sflag [#allocation4], %s3219
        %s3221 = sand.u32 %s158, 1
        %s3222 = smul.addr %s3221, 768
        %s3223 = scalar_lea.vmem [#allocation11], %s3222
        // Predicated region
        $region61: #{tpu_custom_call.1} parent=39 // pred_check
          %p3224 = pneg %p168
        $region62: #{tpu_custom_call.1} parent=39 // pred_check_branch
          %3226 = sbr.rel (%p3224) target = $region64
        $region63: #{tpu_custom_call.1} parent=39 // pred_region
          %s3227 = smul.u32 32, %s28
          %3229 = vsyncadd %s3220, 0
          %s3230 = smul.addr %s3227, 6
          %s3231 = smul.addr %s29, 384
          %s3232 = sadd.s32 %s3230, %s3231
          %s3233 = smul.addr %s3232, 4
          %s3234 = scalar_lea.hbm %s5, %s3233
          %s3235 = sshll.u32 %s3223, 4
          %s3236 = int_to_ptr.vmem [resolvable:$true] %s3235
          %s3237 = sshll.u32 %s3234, 4
          %s3238 = int_to_ptr.hbm [resolvable:$true] %s3237
          %3243 = dma.vmem_to_hbm [thread:$0]  %s3236, 12288, %s3238, %s3220, 384, 384, 24
        $region64: #{tpu_custom_call.1} parent=39 // pred_fallthru
          _
      $region40: #{tpu_custom_call.1} parent=5 // pred_fallthru
        _
      %p3244 = scmp.le.s32.totalorder 2, %s19
      // Predicated region
      $region65: #{tpu_custom_call.1} parent=5 // pred_check
        %p3245 = pneg %p3244
      $region66: #{tpu_custom_call.1} parent=5 // pred_check_branch
        %3247 = sbr.rel (%p3245) target = $region68
      $region67: #{tpu_custom_call.1} parent=5 // pred_region
        %s3248 = ssub.s32 %s19, 2
        // Predicated region
        $region69: #{tpu_custom_call.1} parent=67 // pred_check
          %p3249 = pneg %p174
        $region70: #{tpu_custom_call.1} parent=67 // pred_check_branch
          %3251 = sbr.rel (%p3249) target = $region72
        $region71: #{tpu_custom_call.1} parent=67 // pred_region
          %s3252 = sand.u32 %s159, 1
          %s3253 = scalar_lea.sflag [#allocation4], %s3252
          %s3254 = sand.u32 %s159, 1
          %s3255 = smul.addr %s3254, 768
          %s3256 = scalar_lea.vmem [#allocation11], %s3255
          %3258 = dma.done %s3253, 12288
        $region72: #{tpu_custom_call.1} parent=67 // pred_fallthru
          _
      $region68: #{tpu_custom_call.1} parent=5 // pred_fallthru
        _
    $region6: #{tpu_custom_call.1} parent=1 // loop_footer
      %s23 = sadd.s32 1, %s19
    $region7: #{tpu_custom_call.1} parent=1 // loop_footer_branch
      %18 = sbr.rel target = $region3
    $region8: #{tpu_custom_call.1} parent=1 // loop_exit
      _
    %3259 = vsyncpa [#allocation3], 1
    %s3260 = scalar_lea.sflag [#allocation3], 1
    %3261 = vsyncpa %s3260, 1
    %3262 = vsyncpa [#allocation6], 1
    %3263 = vsyncpa [#allocation9], 1
    %3264 = vsyncpa [#allocation4], 1
    %s3265 = scalar_lea.sflag [#allocation4], 1
    %3266 = vsyncpa %s3265, 1

</llo_original>
